<compile_context>
chip_gen: v5e
topology: v5e:2x2
jax: 0.10.0
libtpu: 0.0.40
codegen_flags: <defaults>
</compile_context>

<pallas_src>
import numpy as np
import jax
import jax.numpy as jnp
from jax.experimental import pallas as pl
from jax.experimental.pallas import tpu as pltpu


_R_SUB = 8          # sublane chunk: one vreg row-tile
_LANE_CHUNK = 1024  # lane chunk: 3 accs + patch + mask ~= 40 vregs << 64


def _round_up(x, m):
    return (x + m - 1) // m * m


def _tap_offsets_and_masks(D, H, W):
    """27 flattened-axis tap offsets and (27, D*H*W) f32 validity masks."""
    HW = H * W
    dd, hh, ww = np.meshgrid(np.arange(D), np.arange(H), np.arange(W),
                             indexing="ij")
    offsets, masks = [], []
    for kd in range(3):
        for kh in range(3):
            for kw in range(3):
                offsets.append((kd - 1) * HW + (kh - 1) * W + (kw - 1))
                valid = ((dd + kd - 1 >= 0) & (dd + kd - 1 < D) &
                         (hh + kh - 1 >= 0) & (hh + kh - 1 < H) &
                         (ww + kw - 1 >= 0) & (ww + kw - 1 < W))
                masks.append(valid.reshape(-1))
    return offsets, np.stack(masks, axis=0).astype(np.float32)


def _make_kernel(D, H, W, pad, offsets, mask_all_ones):
    DHW = D * H * W

    def kernel(x_ref, w_ref, mask_ref, o_ref, xp_ref):
        # x_ref   : (R, DHW)            input rows (one per (n, c) pair)
        # w_ref   : (R, 81)             per-row weights, column = m * 27 + tap
        # mask_ref: (27, DHW)           per-tap validity masks (grid-invariant)
        # o_ref   : (R, 3 * DHW)        multiplier m in lanes [m*DHW, (m+1)*DHW)
        # xp_ref  : (R, DHW + 2 * pad)  VMEM scratch: zero halo + centred input
        f32 = jnp.float32
        R = x_ref.shape[0]

        # Zero halo + centred input (halo re-zeroed every step: megacore-safe,
        # and its 2*pad lanes of stores are hidden under the VALU work).
        xp_ref[:, :pad] = jnp.zeros((R, pad), f32)
        xp_ref[:, pad + DHW:] = jnp.zeros((R, pad), f32)
        # TODO(synk): for very large volumes, DMA x straight from HBM
        # (memory_space=pl.ANY) into this interior, add a D-slab grid axis with
        # a 1-plane halo so double-buffered blocks fit v7x's 64 MiB VMEM, and
        # single-buffer the grid-invariant mask (pl.Buffered(1)).
        xp_ref[:, pad:pad + DHW] = x_ref[...].astype(f32)

        # Register-tiled shift-and-accumulate: (<=8 rows) x (<=1024 lanes)
        # sub-tiles keep the 3 accumulators + patch + mask in the vreg file.
        for r0 in range(0, R, _R_SUB):
            rsz = min(_R_SUB, R - r0)
            # (rsz, 81) weight tile ~ one vreg, loaded once per row chunk; the
            # per-tap column extraction below folds into the broadcast multiply.
            wts = w_ref[r0:r0 + rsz, :].astype(f32)
            for l0 in range(0, DHW, _LANE_CHUNK):
                lsz = min(_LANE_CHUNK, DHW - l0)
                acc0 = jnp.zeros((rsz, lsz), f32)
                acc1 = jnp.zeros((rsz, lsz), f32)
                acc2 = jnp.zeros((rsz, lsz), f32)
                for t in range(27):
                    src = pad + offsets[t] + l0
                    patch = xp_ref[r0:r0 + rsz, src:src + lsz]
                    if not mask_all_ones[t]:
                        patch = patch * mask_ref[t:t + 1, l0:l0 + lsz]
                    acc0 = acc0 + wts[:, 0 * 27 + t:0 * 27 + t + 1] * patch
                    acc1 = acc1 + wts[:, 1 * 27 + t:1 * 27 + t + 1] * patch
                    acc2 = acc2 + wts[:, 2 * 27 + t:2 * 27 + t + 1] * patch
                o_ref[r0:r0 + rsz, 0 * DHW + l0:0 * DHW + l0 + lsz] = \
                    acc0.astype(o_ref.dtype)
                o_ref[r0:r0 + rsz, 1 * DHW + l0:1 * DHW + l0 + lsz] = \
                    acc1.astype(o_ref.dtype)
                o_ref[r0:r0 + rsz, 2 * DHW + l0:2 * DHW + l0 + lsz] = \
                    acc2.astype(o_ref.dtype)

    return kernel


def voxel_perception_net(x, weight):
    """Grouped Conv3d(C -> 3C, k=3, stride=1, pad=1, groups=C, bias=False).

    x      : (N, C, D, H, W)
    weight : (3C, 1, 3, 3, 3)  (PyTorch grouped-conv layout)
    returns: (N, 3C, D, H, W)
    """
    N, C, D, H, W = x.shape
    assert weight.shape == (3 * C, 1, 3, 3, 3)
    DHW = D * H * W
    HW = H * W
    R_total = N * C

    # Fixed 8-multiple row blocks; cdiv grid pads the last partial block.
    # Small R_total is split in two so the "parallel" axis has >= 2 steps
    # (v7x megacore); with <= 8 rows a single full-extent block is used.
    R_pad8 = _round_up(R_total, 8)
    if R_pad8 >= 128:
        R_blk = 64
    elif R_pad8 >= 16:
        R_blk = _round_up(R_pad8 // 2, 8)
    else:
        R_blk = min(R_total, 8)
    num_blocks = (R_total + R_blk - 1) // R_blk

    # Halo for the flattened spatial axis (max |tap offset| = HW + W + 1),
    # rounded up so the interior copy into the scratch stays lane-aligned.
    pad = _round_up(HW + W + 1, 128)

    offsets, masks_np = _tap_offsets_and_masks(D, H, W)
    mask_all_ones = [bool(m.all()) for m in masks_np]
    masks = jnp.asarray(masks_np)

    # Lane-dense views (layout plumbing only).  Row r = n*C + c owns output
    # channels 3c..3c+2; weight column index = m*27 + tap.
    x_rows = x.reshape(R_total, DHW)
    w_rows = jnp.tile(weight.reshape(1, C, 3 * 27), (N, 1, 1)) \
                .reshape(R_total, 3 * 27)

    kernel = _make_kernel(D, H, W, pad, offsets, mask_all_ones)

    # Explicit scoped-VMEM budget (defaults are 16/32 MiB and would gate tile
    # size long before physical VMEM at larger volumes): double-buffered
    # x/w/mask/out blocks plus the halo scratch, with 2x headroom.
    itemsize = jnp.dtype(x.dtype).itemsize
    est = (2 * R_blk * DHW * itemsize          # x blocks
           + 2 * R_blk * 128 * 4               # weight blocks (81 -> 128 lanes)
           + 2 * 32 * DHW * 4                  # mask blocks (27 -> 32 sublanes)
           + 2 * R_blk * 3 * DHW * itemsize    # out blocks
           + R_blk * (DHW + 2 * pad) * 4)      # halo scratch
    vmem_limit = int(min(100 * 2 ** 20, max(2 * est, 16 * 2 ** 20)))

    out_rows = pl.pallas_call(
        kernel,
        out_shape=jax.ShapeDtypeStruct((R_total, 3 * DHW), x.dtype),
        grid_spec=pltpu.PrefetchScalarGridSpec(
            num_scalar_prefetch=0,
            grid=(num_blocks,),
            in_specs=[
                pl.BlockSpec((R_blk, DHW), lambda i: (i, 0)),
                pl.BlockSpec((R_blk, 3 * 27), lambda i: (i, 0)),
                pl.BlockSpec((27, DHW), lambda i: (0, 0)),   # grid-invariant
            ],
            out_specs=pl.BlockSpec((R_blk, 3 * DHW), lambda i: (i, 0)),
            scratch_shapes=[pltpu.VMEM((R_blk, DHW + 2 * pad), jnp.float32)],
        ),
        compiler_params=pltpu.CompilerParams(
            dimension_semantics=("parallel",),
            vmem_limit_bytes=vmem_limit),
    )(x_rows, w_rows, masks)

    # (N*C, 3*DHW) row-major == (N, C, 3, D, H, W); merging (C, 3) gives the
    # PyTorch output-channel order o = 3*c + m.
    return out_rows.reshape(N, 3 * C, D, H, W)


def _reference(x, weight):
    C = x.shape[1]
    return jax.lax.conv_general_dilated(
        x, weight,
        window_strides=(1, 1, 1),
        padding=((1, 1), (1, 1), (1, 1)),
        feature_group_count=C,
        dimension_numbers=("NCDHW", "OIDHW", "NCDHW"),
    )


if __name__ == "__main__":
    key = jax.random.PRNGKey(0)
    kx, kw = jax.random.split(key)

    N, C, D, H, W = 2, 4, 8, 8, 8
    normal_std = 0.02

    x = jax.random.normal(kx, (N, C, D, H, W), dtype=jnp.float32)
    # Deterministic init matching torch.nn.init.normal_(std=0.02); bias=False.
    weight = normal_std * jax.random.normal(kw, (3 * C, 1, 3, 3, 3),
                                            dtype=jnp.float32)

    out = voxel_perception_net(x, weight)
    out = jax.block_until_ready(out)

    ref = _reference(x, weight)
    assert out.shape == (N, 3 * C, D, H, W)
    assert jnp.allclose(out, ref, atol=1e-5, rtol=1e-5)

    print("KERNEL_OK")
</pallas_src>

<mosaic_0001>
module attributes {stable_mosaic.version = 11 : i64} {
  func.func @kernel(%arg0: i32, %arg1: memref<8x512xf32, #tpu.memory_space<vmem>>, %arg2: memref<8x81xf32, #tpu.memory_space<vmem>>, %arg3: memref<27x512xf32, #tpu.memory_space<vmem>>, %arg4: memref<8x1536xf32, #tpu.memory_space<vmem>>, %arg5: memref<8x768xf32, #tpu.memory_space<vmem>>) attributes {dimension_semantics = [#tpu.dimension_semantics<parallel>], iteration_bounds = array<i64: 1>, scalar_prefetch = 0 : i64, scratch_operands = 1 : i64, tpu.core_type = #tpu.core_type<tc>, window_params = [{transform_indices = @transform_0, window_bounds = array<i64: 8, 512>}, {transform_indices = @transform_1, window_bounds = array<i64: 8, 81>}, {pipeline_mode = #tpu.pipeline_mode<synchronous>, transform_indices = @transform_2, window_bounds = array<i64: 27, 512>}, {transform_indices = @transform_3, window_bounds = array<i64: 8, 1536>}]} {
    %cst = arith.constant 0.000000e+00 : f32
    %0 = vector.broadcast %cst : f32 to vector<8x128xf32>
    %c0 = arith.constant 0 : index
    %c0_0 = arith.constant 0 : index
    %1 = vector.load %arg5[%c0, %c0_0] : memref<8x768xf32, #tpu.memory_space<vmem>>, vector<8x128xf32>
    tpu.vector_store %arg5[%c0, %c0_0], %0 {strides = array<i32>} : memref<8x768xf32, #tpu.memory_space<vmem>>, vector<8x128xf32>,
    %cst_1 = arith.constant 0.000000e+00 : f32
    %2 = vector.broadcast %cst_1 : f32 to vector<8x128xf32>
    %c0_2 = arith.constant 0 : index
    %c640 = arith.constant 640 : index
    %3 = vector.load %arg5[%c0_2, %c640] : memref<8x768xf32, #tpu.memory_space<vmem>>, vector<8x128xf32>
    tpu.vector_store %arg5[%c0_2, %c640], %2 {strides = array<i32>} : memref<8x768xf32, #tpu.memory_space<vmem>>, vector<8x128xf32>,
    %c0_3 = arith.constant 0 : index
    %c0_4 = arith.constant 0 : index
    %4 = vector.load %arg1[%c0_3, %c0_4] : memref<8x512xf32, #tpu.memory_space<vmem>>, vector<8x512xf32>
    %c0_5 = arith.constant 0 : index
    %c128 = arith.constant 128 : index
    %5 = vector.load %arg5[%c0_5, %c128] : memref<8x768xf32, #tpu.memory_space<vmem>>, vector<8x512xf32>
    tpu.vector_store %arg5[%c0_5, %c128], %4 {strides = array<i32>} : memref<8x768xf32, #tpu.memory_space<vmem>>, vector<8x512xf32>,
    %c0_6 = arith.constant 0 : index
    %c0_7 = arith.constant 0 : index
    %6 = vector.load %arg2[%c0_6, %c0_7] : memref<8x81xf32, #tpu.memory_space<vmem>>, vector<8x81xf32>
    %cst_8 = arith.constant 0.000000e+00 : f32
    %7 = vector.broadcast %cst_8 : f32 to vector<8x512xf32>
    %cst_9 = arith.constant 0.000000e+00 : f32
    %8 = vector.broadcast %cst_9 : f32 to vector<8x512xf32>
    %cst_10 = arith.constant 0.000000e+00 : f32
    %9 = vector.broadcast %cst_10 : f32 to vector<8x512xf32>
    %c0_11 = arith.constant 0 : index
    %c55 = arith.constant 55 : index
    %10 = vector.load %arg5[%c0_11, %c55] : memref<8x768xf32, #tpu.memory_space<vmem>>, vector<8x512xf32>
    %c0_12 = arith.constant 0 : index
    %c0_13 = arith.constant 0 : index
    %11 = vector.load %arg3[%c0_12, %c0_13] : memref<27x512xf32, #tpu.memory_space<vmem>>, vector<1x512xf32>
    %12 = vector.broadcast %11 : vector<1x512xf32> to vector<8x512xf32>
    %13 = arith.mulf %10, %12 : vector<8x512xf32>
    %14 = vector.extract_strided_slice %6 {offsets = [0, 0], sizes = [8, 1], strides = [1, 1]} : vector<8x81xf32> to vector<8x1xf32>
    %15 = vector.broadcast %14 : vector<8x1xf32> to vector<8x512xf32>
    %16 = arith.mulf %15, %13 : vector<8x512xf32>
    %17 = arith.addf %7, %16 : vector<8x512xf32>
    %18 = vector.extract_strided_slice %6 {offsets = [0, 27], sizes = [8, 1], strides = [1, 1]} : vector<8x81xf32> to vector<8x1xf32>
    %19 = vector.broadcast %18 : vector<8x1xf32> to vector<8x512xf32>
    %20 = arith.mulf %19, %13 : vector<8x512xf32>
    %21 = arith.addf %8, %20 : vector<8x512xf32>
    %22 = vector.extract_strided_slice %6 {offsets = [0, 54], sizes = [8, 1], strides = [1, 1]} : vector<8x81xf32> to vector<8x1xf32>
    %23 = vector.broadcast %22 : vector<8x1xf32> to vector<8x512xf32>
    %24 = arith.mulf %23, %13 : vector<8x512xf32>
    %25 = arith.addf %9, %24 : vector<8x512xf32>
    %c0_14 = arith.constant 0 : index
    %c56 = arith.constant 56 : index
    %26 = vector.load %arg5[%c0_14, %c56] : memref<8x768xf32, #tpu.memory_space<vmem>>, vector<8x512xf32>
    %c1 = arith.constant 1 : index
    %c0_15 = arith.constant 0 : index
    %27 = vector.load %arg3[%c1, %c0_15] : memref<27x512xf32, #tpu.memory_space<vmem>>, vector<1x512xf32>
    %28 = vector.broadcast %27 : vector<1x512xf32> to vector<8x512xf32>
    %29 = arith.mulf %26, %28 : vector<8x512xf32>
    %30 = vector.extract_strided_slice %6 {offsets = [0, 1], sizes = [8, 1], strides = [1, 1]} : vector<8x81xf32> to vector<8x1xf32>
    %31 = vector.broadcast %30 : vector<8x1xf32> to vector<8x512xf32>
    %32 = arith.mulf %31, %29 : vector<8x512xf32>
    %33 = arith.addf %17, %32 : vector<8x512xf32>
    %34 = vector.extract_strided_slice %6 {offsets = [0, 28], sizes = [8, 1], strides = [1, 1]} : vector<8x81xf32> to vector<8x1xf32>
    %35 = vector.broadcast %34 : vector<8x1xf32> to vector<8x512xf32>
    %36 = arith.mulf %35, %29 : vector<8x512xf32>
    %37 = arith.addf %21, %36 : vector<8x512xf32>
    %38 = vector.extract_strided_slice %6 {offsets = [0, 55], sizes = [8, 1], strides = [1, 1]} : vector<8x81xf32> to vector<8x1xf32>
    %39 = vector.broadcast %38 : vector<8x1xf32> to vector<8x512xf32>
    %40 = arith.mulf %39, %29 : vector<8x512xf32>
    %41 = arith.addf %25, %40 : vector<8x512xf32>
    %c0_16 = arith.constant 0 : index
    %c57 = arith.constant 57 : index
    %42 = vector.load %arg5[%c0_16, %c57] : memref<8x768xf32, #tpu.memory_space<vmem>>, vector<8x512xf32>
    %c2 = arith.constant 2 : index
    %c0_17 = arith.constant 0 : index
    %43 = vector.load %arg3[%c2, %c0_17] : memref<27x512xf32, #tpu.memory_space<vmem>>, vector<1x512xf32>
    %44 = vector.broadcast %43 : vector<1x512xf32> to vector<8x512xf32>
    %45 = arith.mulf %42, %44 : vector<8x512xf32>
    %46 = vector.extract_strided_slice %6 {offsets = [0, 2], sizes = [8, 1], strides = [1, 1]} : vector<8x81xf32> to vector<8x1xf32>
    %47 = vector.broadcast %46 : vector<8x1xf32> to vector<8x512xf32>
    %48 = arith.mulf %47, %45 : vector<8x512xf32>
    %49 = arith.addf %33, %48 : vector<8x512xf32>
    %50 = vector.extract_strided_slice %6 {offsets = [0, 29], sizes = [8, 1], strides = [1, 1]} : vector<8x81xf32> to vector<8x1xf32>
    %51 = vector.broadcast %50 : vector<8x1xf32> to vector<8x512xf32>
    %52 = arith.mulf %51, %45 : vector<8x512xf32>
    %53 = arith.addf %37, %52 : vector<8x512xf32>
    %54 = vector.extract_strided_slice %6 {offsets = [0, 56], sizes = [8, 1], strides = [1, 1]} : vector<8x81xf32> to vector<8x1xf32>
    %55 = vector.broadcast %54 : vector<8x1xf32> to vector<8x512xf32>
    %56 = arith.mulf %55, %45 : vector<8x512xf32>
    %57 = arith.addf %41, %56 : vector<8x512xf32>
    %c0_18 = arith.constant 0 : index
    %c63 = arith.constant 63 : index
    %58 = vector.load %arg5[%c0_18, %c63] : memref<8x768xf32, #tpu.memory_space<vmem>>, vector<8x512xf32>
    %c3 = arith.constant 3 : index
    %c0_19 = arith.constant 0 : index
    %59 = vector.load %arg3[%c3, %c0_19] : memref<27x512xf32, #tpu.memory_space<vmem>>, vector<1x512xf32>
    %60 = vector.broadcast %59 : vector<1x512xf32> to vector<8x512xf32>
    %61 = arith.mulf %58, %60 : vector<8x512xf32>
    %62 = vector.extract_strided_slice %6 {offsets = [0, 3], sizes = [8, 1], strides = [1, 1]} : vector<8x81xf32> to vector<8x1xf32>
    %63 = vector.broadcast %62 : vector<8x1xf32> to vector<8x512xf32>
    %64 = arith.mulf %63, %61 : vector<8x512xf32>
    %65 = arith.addf %49, %64 : vector<8x512xf32>
    %66 = vector.extract_strided_slice %6 {offsets = [0, 30], sizes = [8, 1], strides = [1, 1]} : vector<8x81xf32> to vector<8x1xf32>
    %67 = vector.broadcast %66 : vector<8x1xf32> to vector<8x512xf32>
    %68 = arith.mulf %67, %61 : vector<8x512xf32>
    %69 = arith.addf %53, %68 : vector<8x512xf32>
    %70 = vector.extract_strided_slice %6 {offsets = [0, 57], sizes = [8, 1], strides = [1, 1]} : vector<8x81xf32> to vector<8x1xf32>
    %71 = vector.broadcast %70 : vector<8x1xf32> to vector<8x512xf32>
    %72 = arith.mulf %71, %61 : vector<8x512xf32>
    %73 = arith.addf %57, %72 : vector<8x512xf32>
    %c0_20 = arith.constant 0 : index
    %c64 = arith.constant 64 : index
    %74 = vector.load %arg5[%c0_20, %c64] : memref<8x768xf32, #tpu.memory_space<vmem>>, vector<8x512xf32>
    %c4 = arith.constant 4 : index
    %c0_21 = arith.constant 0 : index
    %75 = vector.load %arg3[%c4, %c0_21] : memref<27x512xf32, #tpu.memory_space<vmem>>, vector<1x512xf32>
    %76 = vector.broadcast %75 : vector<1x512xf32> to vector<8x512xf32>
    %77 = arith.mulf %74, %76 : vector<8x512xf32>
    %78 = vector.extract_strided_slice %6 {offsets = [0, 4], sizes = [8, 1], strides = [1, 1]} : vector<8x81xf32> to vector<8x1xf32>
    %79 = vector.broadcast %78 : vector<8x1xf32> to vector<8x512xf32>
    %80 = arith.mulf %79, %77 : vector<8x512xf32>
    %81 = arith.addf %65, %80 : vector<8x512xf32>
    %82 = vector.extract_strided_slice %6 {offsets = [0, 31], sizes = [8, 1], strides = [1, 1]} : vector<8x81xf32> to vector<8x1xf32>
    %83 = vector.broadcast %82 : vector<8x1xf32> to vector<8x512xf32>
    %84 = arith.mulf %83, %77 : vector<8x512xf32>
    %85 = arith.addf %69, %84 : vector<8x512xf32>
    %86 = vector.extract_strided_slice %6 {offsets = [0, 58], sizes = [8, 1], strides = [1, 1]} : vector<8x81xf32> to vector<8x1xf32>
    %87 = vector.broadcast %86 : vector<8x1xf32> to vector<8x512xf32>
    %88 = arith.mulf %87, %77 : vector<8x512xf32>
    %89 = arith.addf %73, %88 : vector<8x512xf32>
    %c0_22 = arith.constant 0 : index
    %c65 = arith.constant 65 : index
    %90 = vector.load %arg5[%c0_22, %c65] : memref<8x768xf32, #tpu.memory_space<vmem>>, vector<8x512xf32>
    %c5 = arith.constant 5 : index
    %c0_23 = arith.constant 0 : index
    %91 = vector.load %arg3[%c5, %c0_23] : memref<27x512xf32, #tpu.memory_space<vmem>>, vector<1x512xf32>
    %92 = vector.broadcast %91 : vector<1x512xf32> to vector<8x512xf32>
    %93 = arith.mulf %90, %92 : vector<8x512xf32>
    %94 = vector.extract_strided_slice %6 {offsets = [0, 5], sizes = [8, 1], strides = [1, 1]} : vector<8x81xf32> to vector<8x1xf32>
    %95 = vector.broadcast %94 : vector<8x1xf32> to vector<8x512xf32>
    %96 = arith.mulf %95, %93 : vector<8x512xf32>
    %97 = arith.addf %81, %96 : vector<8x512xf32>
    %98 = vector.extract_strided_slice %6 {offsets = [0, 32], sizes = [8, 1], strides = [1, 1]} : vector<8x81xf32> to vector<8x1xf32>
    %99 = vector.broadcast %98 : vector<8x1xf32> to vector<8x512xf32>
    %100 = arith.mulf %99, %93 : vector<8x512xf32>
    %101 = arith.addf %85, %100 : vector<8x512xf32>
    %102 = vector.extract_strided_slice %6 {offsets = [0, 59], sizes = [8, 1], strides = [1, 1]} : vector<8x81xf32> to vector<8x1xf32>
    %103 = vector.broadcast %102 : vector<8x1xf32> to vector<8x512xf32>
    %104 = arith.mulf %103, %93 : vector<8x512xf32>
    %105 = arith.addf %89, %104 : vector<8x512xf32>
    %c0_24 = arith.constant 0 : index
    %c71 = arith.constant 71 : index
    %106 = vector.load %arg5[%c0_24, %c71] : memref<8x768xf32, #tpu.memory_space<vmem>>, vector<8x512xf32>
    %c6 = arith.constant 6 : index
    %c0_25 = arith.constant 0 : index
    %107 = vector.load %arg3[%c6, %c0_25] : memref<27x512xf32, #tpu.memory_space<vmem>>, vector<1x512xf32>
    %108 = vector.broadcast %107 : vector<1x512xf32> to vector<8x512xf32>
    %109 = arith.mulf %106, %108 : vector<8x512xf32>
    %110 = vector.extract_strided_slice %6 {offsets = [0, 6], sizes = [8, 1], strides = [1, 1]} : vector<8x81xf32> to vector<8x1xf32>
    %111 = vector.broadcast %110 : vector<8x1xf32> to vector<8x512xf32>
    %112 = arith.mulf %111, %109 : vector<8x512xf32>
    %113 = arith.addf %97, %112 : vector<8x512xf32>
    %114 = vector.extract_strided_slice %6 {offsets = [0, 33], sizes = [8, 1], strides = [1, 1]} : vector<8x81xf32> to vector<8x1xf32>
    %115 = vector.broadcast %114 : vector<8x1xf32> to vector<8x512xf32>
    %116 = arith.mulf %115, %109 : vector<8x512xf32>
    %117 = arith.addf %101, %116 : vector<8x512xf32>
    %118 = vector.extract_strided_slice %6 {offsets = [0, 60], sizes = [8, 1], strides = [1, 1]} : vector<8x81xf32> to vector<8x1xf32>
    %119 = vector.broadcast %118 : vector<8x1xf32> to vector<8x512xf32>
    %120 = arith.mulf %119, %109 : vector<8x512xf32>
    %121 = arith.addf %105, %120 : vector<8x512xf32>
    %c0_26 = arith.constant 0 : index
    %c72 = arith.constant 72 : index
    %122 = vector.load %arg5[%c0_26, %c72] : memref<8x768xf32, #tpu.memory_space<vmem>>, vector<8x512xf32>
    %c7 = arith.constant 7 : index
    %c0_27 = arith.constant 0 : index
    %123 = vector.load %arg3[%c7, %c0_27] : memref<27x512xf32, #tpu.memory_space<vmem>>, vector<1x512xf32>
    %124 = vector.broadcast %123 : vector<1x512xf32> to vector<8x512xf32>
    %125 = arith.mulf %122, %124 : vector<8x512xf32>
    %126 = vector.extract_strided_slice %6 {offsets = [0, 7], sizes = [8, 1], strides = [1, 1]} : vector<8x81xf32> to vector<8x1xf32>
    %127 = vector.broadcast %126 : vector<8x1xf32> to vector<8x512xf32>
    %128 = arith.mulf %127, %125 : vector<8x512xf32>
    %129 = arith.addf %113, %128 : vector<8x512xf32>
    %130 = vector.extract_strided_slice %6 {offsets = [0, 34], sizes = [8, 1], strides = [1, 1]} : vector<8x81xf32> to vector<8x1xf32>
    %131 = vector.broadcast %130 : vector<8x1xf32> to vector<8x512xf32>
    %132 = arith.mulf %131, %125 : vector<8x512xf32>
    %133 = arith.addf %117, %132 : vector<8x512xf32>
    %134 = vector.extract_strided_slice %6 {offsets = [0, 61], sizes = [8, 1], strides = [1, 1]} : vector<8x81xf32> to vector<8x1xf32>
    %135 = vector.broadcast %134 : vector<8x1xf32> to vector<8x512xf32>
    %136 = arith.mulf %135, %125 : vector<8x512xf32>
    %137 = arith.addf %121, %136 : vector<8x512xf32>
    %c0_28 = arith.constant 0 : index
    %c73 = arith.constant 73 : index
    %138 = vector.load %arg5[%c0_28, %c73] : memref<8x768xf32, #tpu.memory_space<vmem>>, vector<8x512xf32>
    %c8 = arith.constant 8 : index
    %c0_29 = arith.constant 0 : index
    %139 = vector.load %arg3[%c8, %c0_29] : memref<27x512xf32, #tpu.memory_space<vmem>>, vector<1x512xf32>
    %140 = vector.broadcast %139 : vector<1x512xf32> to vector<8x512xf32>
    %141 = arith.mulf %138, %140 : vector<8x512xf32>
    %142 = vector.extract_strided_slice %6 {offsets = [0, 8], sizes = [8, 1], strides = [1, 1]} : vector<8x81xf32> to vector<8x1xf32>
    %143 = vector.broadcast %142 : vector<8x1xf32> to vector<8x512xf32>
    %144 = arith.mulf %143, %141 : vector<8x512xf32>
    %145 = arith.addf %129, %144 : vector<8x512xf32>
    %146 = vector.extract_strided_slice %6 {offsets = [0, 35], sizes = [8, 1], strides = [1, 1]} : vector<8x81xf32> to vector<8x1xf32>
    %147 = vector.broadcast %146 : vector<8x1xf32> to vector<8x512xf32>
    %148 = arith.mulf %147, %141 : vector<8x512xf32>
    %149 = arith.addf %133, %148 : vector<8x512xf32>
    %150 = vector.extract_strided_slice %6 {offsets = [0, 62], sizes = [8, 1], strides = [1, 1]} : vector<8x81xf32> to vector<8x1xf32>
    %151 = vector.broadcast %150 : vector<8x1xf32> to vector<8x512xf32>
    %152 = arith.mulf %151, %141 : vector<8x512xf32>
    %153 = arith.addf %137, %152 : vector<8x512xf32>
    %c0_30 = arith.constant 0 : index
    %c119 = arith.constant 119 : index
    %154 = vector.load %arg5[%c0_30, %c119] : memref<8x768xf32, #tpu.memory_space<vmem>>, vector<8x512xf32>
    %c9 = arith.constant 9 : index
    %c0_31 = arith.constant 0 : index
    %155 = vector.load %arg3[%c9, %c0_31] : memref<27x512xf32, #tpu.memory_space<vmem>>, vector<1x512xf32>
    %156 = vector.broadcast %155 : vector<1x512xf32> to vector<8x512xf32>
    %157 = arith.mulf %154, %156 : vector<8x512xf32>
    %158 = vector.extract_strided_slice %6 {offsets = [0, 9], sizes = [8, 1], strides = [1, 1]} : vector<8x81xf32> to vector<8x1xf32>
    %159 = vector.broadcast %158 : vector<8x1xf32> to vector<8x512xf32>
    %160 = arith.mulf %159, %157 : vector<8x512xf32>
    %161 = arith.addf %145, %160 : vector<8x512xf32>
    %162 = vector.extract_strided_slice %6 {offsets = [0, 36], sizes = [8, 1], strides = [1, 1]} : vector<8x81xf32> to vector<8x1xf32>
    %163 = vector.broadcast %162 : vector<8x1xf32> to vector<8x512xf32>
    %164 = arith.mulf %163, %157 : vector<8x512xf32>
    %165 = arith.addf %149, %164 : vector<8x512xf32>
    %166 = vector.extract_strided_slice %6 {offsets = [0, 63], sizes = [8, 1], strides = [1, 1]} : vector<8x81xf32> to vector<8x1xf32>
    %167 = vector.broadcast %166 : vector<8x1xf32> to vector<8x512xf32>
    %168 = arith.mulf %167, %157 : vector<8x512xf32>
    %169 = arith.addf %153, %168 : vector<8x512xf32>
    %c0_32 = arith.constant 0 : index
    %c120 = arith.constant 120 : index
    %170 = vector.load %arg5[%c0_32, %c120] : memref<8x768xf32, #tpu.memory_space<vmem>>, vector<8x512xf32>
    %c10 = arith.constant 10 : index
    %c0_33 = arith.constant 0 : index
    %171 = vector.load %arg3[%c10, %c0_33] : memref<27x512xf32, #tpu.memory_space<vmem>>, vector<1x512xf32>
    %172 = vector.broadcast %171 : vector<1x512xf32> to vector<8x512xf32>
    %173 = arith.mulf %170, %172 : vector<8x512xf32>
    %174 = vector.extract_strided_slice %6 {offsets = [0, 10], sizes = [8, 1], strides = [1, 1]} : vector<8x81xf32> to vector<8x1xf32>
    %175 = vector.broadcast %174 : vector<8x1xf32> to vector<8x512xf32>
    %176 = arith.mulf %175, %173 : vector<8x512xf32>
    %177 = arith.addf %161, %176 : vector<8x512xf32>
    %178 = vector.extract_strided_slice %6 {offsets = [0, 37], sizes = [8, 1], strides = [1, 1]} : vector<8x81xf32> to vector<8x1xf32>
    %179 = vector.broadcast %178 : vector<8x1xf32> to vector<8x512xf32>
    %180 = arith.mulf %179, %173 : vector<8x512xf32>
    %181 = arith.addf %165, %180 : vector<8x512xf32>
    %182 = vector.extract_strided_slice %6 {offsets = [0, 64], sizes = [8, 1], strides = [1, 1]} : vector<8x81xf32> to vector<8x1xf32>
    %183 = vector.broadcast %182 : vector<8x1xf32> to vector<8x512xf32>
    %184 = arith.mulf %183, %173 : vector<8x512xf32>
    %185 = arith.addf %169, %184 : vector<8x512xf32>
    %c0_34 = arith.constant 0 : index
    %c121 = arith.constant 121 : index
    %186 = vector.load %arg5[%c0_34, %c121] : memref<8x768xf32, #tpu.memory_space<vmem>>, vector<8x512xf32>
    %c11 = arith.constant 11 : index
    %c0_35 = arith.constant 0 : index
    %187 = vector.load %arg3[%c11, %c0_35] : memref<27x512xf32, #tpu.memory_space<vmem>>, vector<1x512xf32>
    %188 = vector.broadcast %187 : vector<1x512xf32> to vector<8x512xf32>
    %189 = arith.mulf %186, %188 : vector<8x512xf32>
    %190 = vector.extract_strided_slice %6 {offsets = [0, 11], sizes = [8, 1], strides = [1, 1]} : vector<8x81xf32> to vector<8x1xf32>
    %191 = vector.broadcast %190 : vector<8x1xf32> to vector<8x512xf32>
    %192 = arith.mulf %191, %189 : vector<8x512xf32>
    %193 = arith.addf %177, %192 : vector<8x512xf32>
    %194 = vector.extract_strided_slice %6 {offsets = [0, 38], sizes = [8, 1], strides = [1, 1]} : vector<8x81xf32> to vector<8x1xf32>
    %195 = vector.broadcast %194 : vector<8x1xf32> to vector<8x512xf32>
    %196 = arith.mulf %195, %189 : vector<8x512xf32>
    %197 = arith.addf %181, %196 : vector<8x512xf32>
    %198 = vector.extract_strided_slice %6 {offsets = [0, 65], sizes = [8, 1], strides = [1, 1]} : vector<8x81xf32> to vector<8x1xf32>
    %199 = vector.broadcast %198 : vector<8x1xf32> to vector<8x512xf32>
    %200 = arith.mulf %199, %189 : vector<8x512xf32>
    %201 = arith.addf %185, %200 : vector<8x512xf32>
    %c0_36 = arith.constant 0 : index
    %c127 = arith.constant 127 : index
    %202 = vector.load %arg5[%c0_36, %c127] : memref<8x768xf32, #tpu.memory_space<vmem>>, vector<8x512xf32>
    %c12 = arith.constant 12 : index
    %c0_37 = arith.constant 0 : index
    %203 = vector.load %arg3[%c12, %c0_37] : memref<27x512xf32, #tpu.memory_space<vmem>>, vector<1x512xf32>
    %204 = vector.broadcast %203 : vector<1x512xf32> to vector<8x512xf32>
    %205 = arith.mulf %202, %204 : vector<8x512xf32>
    %206 = vector.extract_strided_slice %6 {offsets = [0, 12], sizes = [8, 1], strides = [1, 1]} : vector<8x81xf32> to vector<8x1xf32>
    %207 = vector.broadcast %206 : vector<8x1xf32> to vector<8x512xf32>
    %208 = arith.mulf %207, %205 : vector<8x512xf32>
    %209 = arith.addf %193, %208 : vector<8x512xf32>
    %210 = vector.extract_strided_slice %6 {offsets = [0, 39], sizes = [8, 1], strides = [1, 1]} : vector<8x81xf32> to vector<8x1xf32>
    %211 = vector.broadcast %210 : vector<8x1xf32> to vector<8x512xf32>
    %212 = arith.mulf %211, %205 : vector<8x512xf32>
    %213 = arith.addf %197, %212 : vector<8x512xf32>
    %214 = vector.extract_strided_slice %6 {offsets = [0, 66], sizes = [8, 1], strides = [1, 1]} : vector<8x81xf32> to vector<8x1xf32>
    %215 = vector.broadcast %214 : vector<8x1xf32> to vector<8x512xf32>
    %216 = arith.mulf %215, %205 : vector<8x512xf32>
    %217 = arith.addf %201, %216 : vector<8x512xf32>
    %c0_38 = arith.constant 0 : index
    %c128_39 = arith.constant 128 : index
    %218 = vector.load %arg5[%c0_38, %c128_39] : memref<8x768xf32, #tpu.memory_space<vmem>>, vector<8x512xf32>
    %219 = vector.extract_strided_slice %6 {offsets = [0, 13], sizes = [8, 1], strides = [1, 1]} : vector<8x81xf32> to vector<8x1xf32>
    %220 = vector.broadcast %219 : vector<8x1xf32> to vector<8x512xf32>
    %221 = arith.mulf %220, %218 : vector<8x512xf32>
    %222 = arith.addf %209, %221 : vector<8x512xf32>
    %223 = vector.extract_strided_slice %6 {offsets = [0, 40], sizes = [8, 1], strides = [1, 1]} : vector<8x81xf32> to vector<8x1xf32>
    %224 = vector.broadcast %223 : vector<8x1xf32> to vector<8x512xf32>
    %225 = arith.mulf %224, %218 : vector<8x512xf32>
    %226 = arith.addf %213, %225 : vector<8x512xf32>
    %227 = vector.extract_strided_slice %6 {offsets = [0, 67], sizes = [8, 1], strides = [1, 1]} : vector<8x81xf32> to vector<8x1xf32>
    %228 = vector.broadcast %227 : vector<8x1xf32> to vector<8x512xf32>
    %229 = arith.mulf %228, %218 : vector<8x512xf32>
    %230 = arith.addf %217, %229 : vector<8x512xf32>
    %c0_40 = arith.constant 0 : index
    %c129 = arith.constant 129 : index
    %231 = vector.load %arg5[%c0_40, %c129] : memref<8x768xf32, #tpu.memory_space<vmem>>, vector<8x512xf32>
    %c14 = arith.constant 14 : index
    %c0_41 = arith.constant 0 : index
    %232 = vector.load %arg3[%c14, %c0_41] : memref<27x512xf32, #tpu.memory_space<vmem>>, vector<1x512xf32>
    %233 = vector.broadcast %232 : vector<1x512xf32> to vector<8x512xf32>
    %234 = arith.mulf %231, %233 : vector<8x512xf32>
    %235 = vector.extract_strided_slice %6 {offsets = [0, 14], sizes = [8, 1], strides = [1, 1]} : vector<8x81xf32> to vector<8x1xf32>
    %236 = vector.broadcast %235 : vector<8x1xf32> to vector<8x512xf32>
    %237 = arith.mulf %236, %234 : vector<8x512xf32>
    %238 = arith.addf %222, %237 : vector<8x512xf32>
    %239 = vector.extract_strided_slice %6 {offsets = [0, 41], sizes = [8, 1], strides = [1, 1]} : vector<8x81xf32> to vector<8x1xf32>
    %240 = vector.broadcast %239 : vector<8x1xf32> to vector<8x512xf32>
    %241 = arith.mulf %240, %234 : vector<8x512xf32>
    %242 = arith.addf %226, %241 : vector<8x512xf32>
    %243 = vector.extract_strided_slice %6 {offsets = [0, 68], sizes = [8, 1], strides = [1, 1]} : vector<8x81xf32> to vector<8x1xf32>
    %244 = vector.broadcast %243 : vector<8x1xf32> to vector<8x512xf32>
    %245 = arith.mulf %244, %234 : vector<8x512xf32>
    %246 = arith.addf %230, %245 : vector<8x512xf32>
    %c0_42 = arith.constant 0 : index
    %c135 = arith.constant 135 : index
    %247 = vector.load %arg5[%c0_42, %c135] : memref<8x768xf32, #tpu.memory_space<vmem>>, vector<8x512xf32>
    %c15 = arith.constant 15 : index
    %c0_43 = arith.constant 0 : index
    %248 = vector.load %arg3[%c15, %c0_43] : memref<27x512xf32, #tpu.memory_space<vmem>>, vector<1x512xf32>
    %249 = vector.broadcast %248 : vector<1x512xf32> to vector<8x512xf32>
    %250 = arith.mulf %247, %249 : vector<8x512xf32>
    %251 = vector.extract_strided_slice %6 {offsets = [0, 15], sizes = [8, 1], strides = [1, 1]} : vector<8x81xf32> to vector<8x1xf32>
    %252 = vector.broadcast %251 : vector<8x1xf32> to vector<8x512xf32>
    %253 = arith.mulf %252, %250 : vector<8x512xf32>
    %254 = arith.addf %238, %253 : vector<8x512xf32>
    %255 = vector.extract_strided_slice %6 {offsets = [0, 42], sizes = [8, 1], strides = [1, 1]} : vector<8x81xf32> to vector<8x1xf32>
    %256 = vector.broadcast %255 : vector<8x1xf32> to vector<8x512xf32>
    %257 = arith.mulf %256, %250 : vector<8x512xf32>
    %258 = arith.addf %242, %257 : vector<8x512xf32>
    %259 = vector.extract_strided_slice %6 {offsets = [0, 69], sizes = [8, 1], strides = [1, 1]} : vector<8x81xf32> to vector<8x1xf32>
    %260 = vector.broadcast %259 : vector<8x1xf32> to vector<8x512xf32>
    %261 = arith.mulf %260, %250 : vector<8x512xf32>
    %262 = arith.addf %246, %261 : vector<8x512xf32>
    %c0_44 = arith.constant 0 : index
    %c136 = arith.constant 136 : index
    %263 = vector.load %arg5[%c0_44, %c136] : memref<8x768xf32, #tpu.memory_space<vmem>>, vector<8x512xf32>
    %c16 = arith.constant 16 : index
    %c0_45 = arith.constant 0 : index
    %264 = vector.load %arg3[%c16, %c0_45] : memref<27x512xf32, #tpu.memory_space<vmem>>, vector<1x512xf32>
    %265 = vector.broadcast %264 : vector<1x512xf32> to vector<8x512xf32>
    %266 = arith.mulf %263, %265 : vector<8x512xf32>
    %267 = vector.extract_strided_slice %6 {offsets = [0, 16], sizes = [8, 1], strides = [1, 1]} : vector<8x81xf32> to vector<8x1xf32>
    %268 = vector.broadcast %267 : vector<8x1xf32> to vector<8x512xf32>
    %269 = arith.mulf %268, %266 : vector<8x512xf32>
    %270 = arith.addf %254, %269 : vector<8x512xf32>
    %271 = vector.extract_strided_slice %6 {offsets = [0, 43], sizes = [8, 1], strides = [1, 1]} : vector<8x81xf32> to vector<8x1xf32>
    %272 = vector.broadcast %271 : vector<8x1xf32> to vector<8x512xf32>
    %273 = arith.mulf %272, %266 : vector<8x512xf32>
    %274 = arith.addf %258, %273 : vector<8x512xf32>
    %275 = vector.extract_strided_slice %6 {offsets = [0, 70], sizes = [8, 1], strides = [1, 1]} : vector<8x81xf32> to vector<8x1xf32>
    %276 = vector.broadcast %275 : vector<8x1xf32> to vector<8x512xf32>
    %277 = arith.mulf %276, %266 : vector<8x512xf32>
    %278 = arith.addf %262, %277 : vector<8x512xf32>
    %c0_46 = arith.constant 0 : index
    %c137 = arith.constant 137 : index
    %279 = vector.load %arg5[%c0_46, %c137] : memref<8x768xf32, #tpu.memory_space<vmem>>, vector<8x512xf32>
    %c17 = arith.constant 17 : index
    %c0_47 = arith.constant 0 : index
    %280 = vector.load %arg3[%c17, %c0_47] : memref<27x512xf32, #tpu.memory_space<vmem>>, vector<1x512xf32>
    %281 = vector.broadcast %280 : vector<1x512xf32> to vector<8x512xf32>
    %282 = arith.mulf %279, %281 : vector<8x512xf32>
    %283 = vector.extract_strided_slice %6 {offsets = [0, 17], sizes = [8, 1], strides = [1, 1]} : vector<8x81xf32> to vector<8x1xf32>
    %284 = vector.broadcast %283 : vector<8x1xf32> to vector<8x512xf32>
    %285 = arith.mulf %284, %282 : vector<8x512xf32>
    %286 = arith.addf %270, %285 : vector<8x512xf32>
    %287 = vector.extract_strided_slice %6 {offsets = [0, 44], sizes = [8, 1], strides = [1, 1]} : vector<8x81xf32> to vector<8x1xf32>
    %288 = vector.broadcast %287 : vector<8x1xf32> to vector<8x512xf32>
    %289 = arith.mulf %288, %282 : vector<8x512xf32>
    %290 = arith.addf %274, %289 : vector<8x512xf32>
    %291 = vector.extract_strided_slice %6 {offsets = [0, 71], sizes = [8, 1], strides = [1, 1]} : vector<8x81xf32> to vector<8x1xf32>
    %292 = vector.broadcast %291 : vector<8x1xf32> to vector<8x512xf32>
    %293 = arith.mulf %292, %282 : vector<8x512xf32>
    %294 = arith.addf %278, %293 : vector<8x512xf32>
    %c0_48 = arith.constant 0 : index
    %c183 = arith.constant 183 : index
    %295 = vector.load %arg5[%c0_48, %c183] : memref<8x768xf32, #tpu.memory_space<vmem>>, vector<8x512xf32>
    %c18 = arith.constant 18 : index
    %c0_49 = arith.constant 0 : index
    %296 = vector.load %arg3[%c18, %c0_49] : memref<27x512xf32, #tpu.memory_space<vmem>>, vector<1x512xf32>
    %297 = vector.broadcast %296 : vector<1x512xf32> to vector<8x512xf32>
    %298 = arith.mulf %295, %297 : vector<8x512xf32>
    %299 = vector.extract_strided_slice %6 {offsets = [0, 18], sizes = [8, 1], strides = [1, 1]} : vector<8x81xf32> to vector<8x1xf32>
    %300 = vector.broadcast %299 : vector<8x1xf32> to vector<8x512xf32>
    %301 = arith.mulf %300, %298 : vector<8x512xf32>
    %302 = arith.addf %286, %301 : vector<8x512xf32>
    %303 = vector.extract_strided_slice %6 {offsets = [0, 45], sizes = [8, 1], strides = [1, 1]} : vector<8x81xf32> to vector<8x1xf32>
    %304 = vector.broadcast %303 : vector<8x1xf32> to vector<8x512xf32>
    %305 = arith.mulf %304, %298 : vector<8x512xf32>
    %306 = arith.addf %290, %305 : vector<8x512xf32>
    %307 = vector.extract_strided_slice %6 {offsets = [0, 72], sizes = [8, 1], strides = [1, 1]} : vector<8x81xf32> to vector<8x1xf32>
    %308 = vector.broadcast %307 : vector<8x1xf32> to vector<8x512xf32>
    %309 = arith.mulf %308, %298 : vector<8x512xf32>
    %310 = arith.addf %294, %309 : vector<8x512xf32>
    %c0_50 = arith.constant 0 : index
    %c184 = arith.constant 184 : index
    %311 = vector.load %arg5[%c0_50, %c184] : memref<8x768xf32, #tpu.memory_space<vmem>>, vector<8x512xf32>
    %c19 = arith.constant 19 : index
    %c0_51 = arith.constant 0 : index
    %312 = vector.load %arg3[%c19, %c0_51] : memref<27x512xf32, #tpu.memory_space<vmem>>, vector<1x512xf32>
    %313 = vector.broadcast %312 : vector<1x512xf32> to vector<8x512xf32>
    %314 = arith.mulf %311, %313 : vector<8x512xf32>
    %315 = vector.extract_strided_slice %6 {offsets = [0, 19], sizes = [8, 1], strides = [1, 1]} : vector<8x81xf32> to vector<8x1xf32>
    %316 = vector.broadcast %315 : vector<8x1xf32> to vector<8x512xf32>
    %317 = arith.mulf %316, %314 : vector<8x512xf32>
    %318 = arith.addf %302, %317 : vector<8x512xf32>
    %319 = vector.extract_strided_slice %6 {offsets = [0, 46], sizes = [8, 1], strides = [1, 1]} : vector<8x81xf32> to vector<8x1xf32>
    %320 = vector.broadcast %319 : vector<8x1xf32> to vector<8x512xf32>
    %321 = arith.mulf %320, %314 : vector<8x512xf32>
    %322 = arith.addf %306, %321 : vector<8x512xf32>
    %323 = vector.extract_strided_slice %6 {offsets = [0, 73], sizes = [8, 1], strides = [1, 1]} : vector<8x81xf32> to vector<8x1xf32>
    %324 = vector.broadcast %323 : vector<8x1xf32> to vector<8x512xf32>
    %325 = arith.mulf %324, %314 : vector<8x512xf32>
    %326 = arith.addf %310, %325 : vector<8x512xf32>
    %c0_52 = arith.constant 0 : index
    %c185 = arith.constant 185 : index
    %327 = vector.load %arg5[%c0_52, %c185] : memref<8x768xf32, #tpu.memory_space<vmem>>, vector<8x512xf32>
    %c20 = arith.constant 20 : index
    %c0_53 = arith.constant 0 : index
    %328 = vector.load %arg3[%c20, %c0_53] : memref<27x512xf32, #tpu.memory_space<vmem>>, vector<1x512xf32>
    %329 = vector.broadcast %328 : vector<1x512xf32> to vector<8x512xf32>
    %330 = arith.mulf %327, %329 : vector<8x512xf32>
    %331 = vector.extract_strided_slice %6 {offsets = [0, 20], sizes = [8, 1], strides = [1, 1]} : vector<8x81xf32> to vector<8x1xf32>
    %332 = vector.broadcast %331 : vector<8x1xf32> to vector<8x512xf32>
    %333 = arith.mulf %332, %330 : vector<8x512xf32>
    %334 = arith.addf %318, %333 : vector<8x512xf32>
    %335 = vector.extract_strided_slice %6 {offsets = [0, 47], sizes = [8, 1], strides = [1, 1]} : vector<8x81xf32> to vector<8x1xf32>
    %336 = vector.broadcast %335 : vector<8x1xf32> to vector<8x512xf32>
    %337 = arith.mulf %336, %330 : vector<8x512xf32>
    %338 = arith.addf %322, %337 : vector<8x512xf32>
    %339 = vector.extract_strided_slice %6 {offsets = [0, 74], sizes = [8, 1], strides = [1, 1]} : vector<8x81xf32> to vector<8x1xf32>
    %340 = vector.broadcast %339 : vector<8x1xf32> to vector<8x512xf32>
    %341 = arith.mulf %340, %330 : vector<8x512xf32>
    %342 = arith.addf %326, %341 : vector<8x512xf32>
    %c0_54 = arith.constant 0 : index
    %c191 = arith.constant 191 : index
    %343 = vector.load %arg5[%c0_54, %c191] : memref<8x768xf32, #tpu.memory_space<vmem>>, vector<8x512xf32>
    %c21 = arith.constant 21 : index
    %c0_55 = arith.constant 0 : index
    %344 = vector.load %arg3[%c21, %c0_55] : memref<27x512xf32, #tpu.memory_space<vmem>>, vector<1x512xf32>
    %345 = vector.broadcast %344 : vector<1x512xf32> to vector<8x512xf32>
    %346 = arith.mulf %343, %345 : vector<8x512xf32>
    %347 = vector.extract_strided_slice %6 {offsets = [0, 21], sizes = [8, 1], strides = [1, 1]} : vector<8x81xf32> to vector<8x1xf32>
    %348 = vector.broadcast %347 : vector<8x1xf32> to vector<8x512xf32>
    %349 = arith.mulf %348, %346 : vector<8x512xf32>
    %350 = arith.addf %334, %349 : vector<8x512xf32>
    %351 = vector.extract_strided_slice %6 {offsets = [0, 48], sizes = [8, 1], strides = [1, 1]} : vector<8x81xf32> to vector<8x1xf32>
    %352 = vector.broadcast %351 : vector<8x1xf32> to vector<8x512xf32>
    %353 = arith.mulf %352, %346 : vector<8x512xf32>
    %354 = arith.addf %338, %353 : vector<8x512xf32>
    %355 = vector.extract_strided_slice %6 {offsets = [0, 75], sizes = [8, 1], strides = [1, 1]} : vector<8x81xf32> to vector<8x1xf32>
    %356 = vector.broadcast %355 : vector<8x1xf32> to vector<8x512xf32>
    %357 = arith.mulf %356, %346 : vector<8x512xf32>
    %358 = arith.addf %342, %357 : vector<8x512xf32>
    %c0_56 = arith.constant 0 : index
    %c192 = arith.constant 192 : index
    %359 = vector.load %arg5[%c0_56, %c192] : memref<8x768xf32, #tpu.memory_space<vmem>>, vector<8x512xf32>
    %c22 = arith.constant 22 : index
    %c0_57 = arith.constant 0 : index
    %360 = vector.load %arg3[%c22, %c0_57] : memref<27x512xf32, #tpu.memory_space<vmem>>, vector<1x512xf32>
    %361 = vector.broadcast %360 : vector<1x512xf32> to vector<8x512xf32>
    %362 = arith.mulf %359, %361 : vector<8x512xf32>
    %363 = vector.extract_strided_slice %6 {offsets = [0, 22], sizes = [8, 1], strides = [1, 1]} : vector<8x81xf32> to vector<8x1xf32>
    %364 = vector.broadcast %363 : vector<8x1xf32> to vector<8x512xf32>
    %365 = arith.mulf %364, %362 : vector<8x512xf32>
    %366 = arith.addf %350, %365 : vector<8x512xf32>
    %367 = vector.extract_strided_slice %6 {offsets = [0, 49], sizes = [8, 1], strides = [1, 1]} : vector<8x81xf32> to vector<8x1xf32>
    %368 = vector.broadcast %367 : vector<8x1xf32> to vector<8x512xf32>
    %369 = arith.mulf %368, %362 : vector<8x512xf32>
    %370 = arith.addf %354, %369 : vector<8x512xf32>
    %371 = vector.extract_strided_slice %6 {offsets = [0, 76], sizes = [8, 1], strides = [1, 1]} : vector<8x81xf32> to vector<8x1xf32>
    %372 = vector.broadcast %371 : vector<8x1xf32> to vector<8x512xf32>
    %373 = arith.mulf %372, %362 : vector<8x512xf32>
    %374 = arith.addf %358, %373 : vector<8x512xf32>
    %c0_58 = arith.constant 0 : index
    %c193 = arith.constant 193 : index
    %375 = vector.load %arg5[%c0_58, %c193] : memref<8x768xf32, #tpu.memory_space<vmem>>, vector<8x512xf32>
    %c23 = arith.constant 23 : index
    %c0_59 = arith.constant 0 : index
    %376 = vector.load %arg3[%c23, %c0_59] : memref<27x512xf32, #tpu.memory_space<vmem>>, vector<1x512xf32>
    %377 = vector.broadcast %376 : vector<1x512xf32> to vector<8x512xf32>
    %378 = arith.mulf %375, %377 : vector<8x512xf32>
    %379 = vector.extract_strided_slice %6 {offsets = [0, 23], sizes = [8, 1], strides = [1, 1]} : vector<8x81xf32> to vector<8x1xf32>
    %380 = vector.broadcast %379 : vector<8x1xf32> to vector<8x512xf32>
    %381 = arith.mulf %380, %378 : vector<8x512xf32>
    %382 = arith.addf %366, %381 : vector<8x512xf32>
    %383 = vector.extract_strided_slice %6 {offsets = [0, 50], sizes = [8, 1], strides = [1, 1]} : vector<8x81xf32> to vector<8x1xf32>
    %384 = vector.broadcast %383 : vector<8x1xf32> to vector<8x512xf32>
    %385 = arith.mulf %384, %378 : vector<8x512xf32>
    %386 = arith.addf %370, %385 : vector<8x512xf32>
    %387 = vector.extract_strided_slice %6 {offsets = [0, 77], sizes = [8, 1], strides = [1, 1]} : vector<8x81xf32> to vector<8x1xf32>
    %388 = vector.broadcast %387 : vector<8x1xf32> to vector<8x512xf32>
    %389 = arith.mulf %388, %378 : vector<8x512xf32>
    %390 = arith.addf %374, %389 : vector<8x512xf32>
    %c0_60 = arith.constant 0 : index
    %c199 = arith.constant 199 : index
    %391 = vector.load %arg5[%c0_60, %c199] : memref<8x768xf32, #tpu.memory_space<vmem>>, vector<8x512xf32>
    %c24 = arith.constant 24 : index
    %c0_61 = arith.constant 0 : index
    %392 = vector.load %arg3[%c24, %c0_61] : memref<27x512xf32, #tpu.memory_space<vmem>>, vector<1x512xf32>
    %393 = vector.broadcast %392 : vector<1x512xf32> to vector<8x512xf32>
    %394 = arith.mulf %391, %393 : vector<8x512xf32>
    %395 = vector.extract_strided_slice %6 {offsets = [0, 24], sizes = [8, 1], strides = [1, 1]} : vector<8x81xf32> to vector<8x1xf32>
    %396 = vector.broadcast %395 : vector<8x1xf32> to vector<8x512xf32>
    %397 = arith.mulf %396, %394 : vector<8x512xf32>
    %398 = arith.addf %382, %397 : vector<8x512xf32>
    %399 = vector.extract_strided_slice %6 {offsets = [0, 51], sizes = [8, 1], strides = [1, 1]} : vector<8x81xf32> to vector<8x1xf32>
    %400 = vector.broadcast %399 : vector<8x1xf32> to vector<8x512xf32>
    %401 = arith.mulf %400, %394 : vector<8x512xf32>
    %402 = arith.addf %386, %401 : vector<8x512xf32>
    %403 = vector.extract_strided_slice %6 {offsets = [0, 78], sizes = [8, 1], strides = [1, 1]} : vector<8x81xf32> to vector<8x1xf32>
    %404 = vector.broadcast %403 : vector<8x1xf32> to vector<8x512xf32>
    %405 = arith.mulf %404, %394 : vector<8x512xf32>
    %406 = arith.addf %390, %405 : vector<8x512xf32>
    %c0_62 = arith.constant 0 : index
    %c200 = arith.constant 200 : index
    %407 = vector.load %arg5[%c0_62, %c200] : memref<8x768xf32, #tpu.memory_space<vmem>>, vector<8x512xf32>
    %c25 = arith.constant 25 : index
    %c0_63 = arith.constant 0 : index
    %408 = vector.load %arg3[%c25, %c0_63] : memref<27x512xf32, #tpu.memory_space<vmem>>, vector<1x512xf32>
    %409 = vector.broadcast %408 : vector<1x512xf32> to vector<8x512xf32>
    %410 = arith.mulf %407, %409 : vector<8x512xf32>
    %411 = vector.extract_strided_slice %6 {offsets = [0, 25], sizes = [8, 1], strides = [1, 1]} : vector<8x81xf32> to vector<8x1xf32>
    %412 = vector.broadcast %411 : vector<8x1xf32> to vector<8x512xf32>
    %413 = arith.mulf %412, %410 : vector<8x512xf32>
    %414 = arith.addf %398, %413 : vector<8x512xf32>
    %415 = vector.extract_strided_slice %6 {offsets = [0, 52], sizes = [8, 1], strides = [1, 1]} : vector<8x81xf32> to vector<8x1xf32>
    %416 = vector.broadcast %415 : vector<8x1xf32> to vector<8x512xf32>
    %417 = arith.mulf %416, %410 : vector<8x512xf32>
    %418 = arith.addf %402, %417 : vector<8x512xf32>
    %419 = vector.extract_strided_slice %6 {offsets = [0, 79], sizes = [8, 1], strides = [1, 1]} : vector<8x81xf32> to vector<8x1xf32>
    %420 = vector.broadcast %419 : vector<8x1xf32> to vector<8x512xf32>
    %421 = arith.mulf %420, %410 : vector<8x512xf32>
    %422 = arith.addf %406, %421 : vector<8x512xf32>
    %c0_64 = arith.constant 0 : index
    %c201 = arith.constant 201 : index
    %423 = vector.load %arg5[%c0_64, %c201] : memref<8x768xf32, #tpu.memory_space<vmem>>, vector<8x512xf32>
    %c26 = arith.constant 26 : index
    %c0_65 = arith.constant 0 : index
    %424 = vector.load %arg3[%c26, %c0_65] : memref<27x512xf32, #tpu.memory_space<vmem>>, vector<1x512xf32>
    %425 = vector.broadcast %424 : vector<1x512xf32> to vector<8x512xf32>
    %426 = arith.mulf %423, %425 : vector<8x512xf32>
    %427 = vector.extract_strided_slice %6 {offsets = [0, 26], sizes = [8, 1], strides = [1, 1]} : vector<8x81xf32> to vector<8x1xf32>
    %428 = vector.broadcast %427 : vector<8x1xf32> to vector<8x512xf32>
    %429 = arith.mulf %428, %426 : vector<8x512xf32>
    %430 = arith.addf %414, %429 : vector<8x512xf32>
    %431 = vector.extract_strided_slice %6 {offsets = [0, 53], sizes = [8, 1], strides = [1, 1]} : vector<8x81xf32> to vector<8x1xf32>
    %432 = vector.broadcast %431 : vector<8x1xf32> to vector<8x512xf32>
    %433 = arith.mulf %432, %426 : vector<8x512xf32>
    %434 = arith.addf %418, %433 : vector<8x512xf32>
    %435 = vector.extract_strided_slice %6 {offsets = [0, 80], sizes = [8, 1], strides = [1, 1]} : vector<8x81xf32> to vector<8x1xf32>
    %436 = vector.broadcast %435 : vector<8x1xf32> to vector<8x512xf32>
    %437 = arith.mulf %436, %426 : vector<8x512xf32>
    %438 = arith.addf %422, %437 : vector<8x512xf32>
    %c0_66 = arith.constant 0 : index
    %c0_67 = arith.constant 0 : index
    %439 = vector.load %arg4[%c0_66, %c0_67] : memref<8x1536xf32, #tpu.memory_space<vmem>>, vector<8x512xf32>
    tpu.vector_store %arg4[%c0_66, %c0_67], %430 {strides = array<i32>} : memref<8x1536xf32, #tpu.memory_space<vmem>>, vector<8x512xf32>,
    %c0_68 = arith.constant 0 : index
    %c512 = arith.constant 512 : index
    %440 = vector.load %arg4[%c0_68, %c512] : memref<8x1536xf32, #tpu.memory_space<vmem>>, vector<8x512xf32>
    tpu.vector_store %arg4[%c0_68, %c512], %434 {strides = array<i32>} : memref<8x1536xf32, #tpu.memory_space<vmem>>, vector<8x512xf32>,
    %c0_69 = arith.constant 0 : index
    %c1024 = arith.constant 1024 : index
    %441 = vector.load %arg4[%c0_69, %c1024] : memref<8x1536xf32, #tpu.memory_space<vmem>>, vector<8x512xf32>
    tpu.vector_store %arg4[%c0_69, %c1024], %438 {strides = array<i32>} : memref<8x1536xf32, #tpu.memory_space<vmem>>, vector<8x512xf32>,
    return
  }
  func.func @transform_0(%arg0: i32) -> (i32, i32) {
    %c0_i32 = arith.constant 0 : i32
    %c0_i32_0 = arith.constant 0 : i32
    return %arg0, %c0_i32 : i32, i32
  }
  func.func @transform_1(%arg0: i32) -> (i32, i32) {
    %c0_i32 = arith.constant 0 : i32
    %c0_i32_0 = arith.constant 0 : i32
    return %arg0, %c0_i32 : i32, i32
  }
  func.func @transform_2(%arg0: i32) -> (i32, i32) {
    %c0_i32 = arith.constant 0 : i32
    %c0_i32_0 = arith.constant 0 : i32
    %c0_i32_1 = arith.constant 0 : i32
    return %c0_i32, %c0_i32_0 : i32, i32
  }
  func.func @transform_3(%arg0: i32) -> (i32, i32) {
    %c0_i32 = arith.constant 0 : i32
    %c0_i32_0 = arith.constant 0 : i32
    return %arg0, %c0_i32 : i32, i32
  }
}

</mosaic_0001>

<llo_original>
// kernel: tpu_custom_call.1
$region0: #{tpu_custom_call.1}
  #allocation0 [shape = 'u32[]', space=smem, size = 0x4, offset = 0x4, fixed_abs, tag = 'smem constant byte address 0x4 - core index']
  #allocation1 [shape = 'u32[72,128]{1,0:T(1,128)}', space=vmem, size = 0x9000, scoped, tag = 'internal scratch']
  #allocation2 [shape = 'f32[8,768]{1,0:T(8,128)}', space=vmem, size = 0x6000, scoped, tag = 'scratch operand']
  %s0 = inlined_call_operand.hbm [shape: f32[8,512], index: 0, kind: input, shape index: {}]
  %s1 = inlined_call_operand.hbm [shape: f32[8,81], index: 1, kind: input, shape index: {}]
  %s2 = inlined_call_operand.hbm [shape: f32[27,512], index: 2, kind: input, shape index: {}]
  %s3 = inlined_call_operand.hbm [shape: f32[8,1536], index: 3, kind: output, shape index: {}]
  %s4 = sld [smem:[#allocation0]]
  $region34: #{tpu_custom_call.1} parent=0
    _
  %s6 = ssub.s32 1, %s4
  %s7 = scalar_select 0, %s6, %s4
  $region1: #{tpu_custom_call.1} parent=0
    #allocation3 [shape = 'u8[16384]{0}', space=vmem, size = 0x4000, scoped, tag = 'input window, operand 0, single buffered']
    #allocation4 [shape = 's32[1]{0}', space=sflag, size = 0x4, scoped, tag = 'scoped memory for tpu_custom_call.1']
    #allocation5 [shape = 's32[1]{0}', space=sflag, size = 0x4, scoped, tag = 'scoped memory for tpu_custom_call.1']
    #allocation6 [shape = 'u8[4096]{0}', space=vmem, size = 0x1000, scoped, tag = 'input window, operand 1, single buffered']
    #allocation7 [shape = 's32[1]{0}', space=sflag, size = 0x4, scoped, tag = 'scoped memory for tpu_custom_call.1']
    #allocation8 [shape = 'u8[65536]{0}', space=vmem, size = 0x10000, scoped, tag = 'input window, operand 2, single buffered']
    #allocation9 [shape = 'u8[49152]{0}', space=vmem, size = 0xc000, scoped, tag = 'output window, operand 0, single buffered']
    %8 = vsyncpa [#allocation4], 0
    %9 = vsyncpa [#allocation7], 0
    %10 = vsyncpa [#allocation5], 0
    // Predicated region
    $region2: #{tpu_custom_call.1} parent=1 // pred_check
      _
    $region3: #{tpu_custom_call.1} parent=1 // pred_check_branch
      %12 = sbr.rel (0) target = $region5
    $region4: #{tpu_custom_call.1} parent=1 // pred_region
      %14 = vsyncadd [#allocation4], 0
      %s16 = sshll.u32 %s0, 4
      %s17 = int_to_ptr.hbm [resolvable:$true] %s16
      %s18 = sshll.u32 [#allocation3], 4
      %s19 = int_to_ptr.vmem [resolvable:$true] %s18
      %21 = dma.hbm_to_vmem [thread:$0]  %s17, 512, %s19, [#allocation4]
    $region5: #{tpu_custom_call.1} parent=1 // pred_fallthru
      _
    // Predicated region
    $region6: #{tpu_custom_call.1} parent=1 // pred_check
      _
    $region7: #{tpu_custom_call.1} parent=1 // pred_check_branch
      %23 = sbr.rel (0) target = $region9
    $region8: #{tpu_custom_call.1} parent=1 // pred_region
      %25 = vsyncadd [#allocation7], 0
      %s27 = sshll.u32 %s1, 4
      %s28 = int_to_ptr.hbm [resolvable:$true] %s27
      %s29 = sshll.u32 [#allocation6], 4
      %s30 = int_to_ptr.vmem [resolvable:$true] %s29
      %32 = dma.hbm_to_vmem [thread:$0]  %s28, 128, %s30, [#allocation7]
    $region9: #{tpu_custom_call.1} parent=1 // pred_fallthru
      _
    // Predicated region
    $region10: #{tpu_custom_call.1} parent=1 // pred_check
      _
    $region11: #{tpu_custom_call.1} parent=1 // pred_check_branch
      %34 = sbr.rel (0) target = $region13
    $region12: #{tpu_custom_call.1} parent=1 // pred_region
      %36 = vsyncadd [#allocation7], 0
      %s37 = sshll.u32 %s2, 4
      %s38 = int_to_ptr.hbm [resolvable:$true] %s37
      %s39 = sshll.u32 [#allocation8], 4
      %s40 = int_to_ptr.vmem [resolvable:$true] %s39
      %45 = dma.hbm_to_vmem [thread:$0]  %s38, 2048, %s40, [#allocation7], 512, 512, 32
    $region13: #{tpu_custom_call.1} parent=1 // pred_fallthru
      _
    // Predicated region
    $region14: #{tpu_custom_call.1} parent=1 // pred_check
      _
    $region15: #{tpu_custom_call.1} parent=1 // pred_check_branch
      %47 = sbr.rel (0) target = $region17
    $region16: #{tpu_custom_call.1} parent=1 // pred_region
      %49 = dma.done [#allocation4], 512
    $region17: #{tpu_custom_call.1} parent=1 // pred_fallthru
      _
    // Predicated region
    $region18: #{tpu_custom_call.1} parent=1 // pred_check
      _
    $region19: #{tpu_custom_call.1} parent=1 // pred_check_branch
      %51 = sbr.rel (0) target = $region21
    $region20: #{tpu_custom_call.1} parent=1 // pred_region
      %53 = dma.done [#allocation7], 128
    $region21: #{tpu_custom_call.1} parent=1 // pred_fallthru
      _
    // Predicated region
    $region22: #{tpu_custom_call.1} parent=1 // pred_check
      _
    $region23: #{tpu_custom_call.1} parent=1 // pred_check_branch
      %55 = sbr.rel (0) target = $region25
    $region24: #{tpu_custom_call.1} parent=1 // pred_region
      %57 = dma.done [#allocation7], 2048
    $region25: #{tpu_custom_call.1} parent=1 // pred_fallthru
      _
    %58 = vst [vmem:[#allocation2] sm:$0xff] 0.0
    %59 = vst [vmem:[#allocation2 + $0x28] sm:$0xff] 0.0
    %v60 = vld [vmem:[#allocation3] sm:$0xff]
    %v61 = vld [vmem:[#allocation3 + $0x8] sm:$0xff]
    %v62 = vld [vmem:[#allocation3 + $0x10] sm:$0xff]
    %v63 = vld [vmem:[#allocation3 + $0x18] sm:$0xff]
    %64 = vst [vmem:[#allocation2 + $0x8] sm:$0xff] %v60
    %65 = vst [vmem:[#allocation2 + $0x10] sm:$0xff] %v61
    %66 = vst [vmem:[#allocation2 + $0x18] sm:$0xff] %v62
    %67 = vst [vmem:[#allocation2 + $0x20] sm:$0xff] %v63
    %v68 = vld [vmem:[#allocation6] sm:$0xff]
    %v69 = vld [vmem:[#allocation2] sm:$0xff]
    %v70 = vld [vmem:[#allocation2 + $0x8] sm:$0xff]
    %v71 = vld [vmem:[#allocation2 + $0x10] sm:$0xff]
    %v72 = vld [vmem:[#allocation2 + $0x18] sm:$0xff]
    %v73 = vld [vmem:[#allocation2 + $0x20] sm:$0xff]
    %v74 = vld [vmem:[#allocation8] ss:$8 sm:$0xf]
    %v76 = vperm.slane %v74, 0
    %v77 = vperm.slane %v74, 1
    %v78 = vperm.slane %v74, 2
    %v79 = vperm.slane %v74, 3
    %80 = vrot.lane.b32.xlu0 %v76, 55
    %v81 = vpop.permute.xlu0 %80
    %82 = vrot.lane.b32.xlu0 %v77, 55
    %v83 = vpop.permute.xlu0 %82
    %84 = vrot.lane.b32.xlu0 %v78, 55
    %v85 = vpop.permute.xlu0 %84
    %86 = vrot.lane.b32.xlu0 %v79, 55
    %v87 = vpop.permute.xlu0 %86
    %vm88 = vcmask 449536
    %v89 = vsel %vm88, %v81, %v83
    %v90 = vsel %vm88, %v83, %v85
    %v91 = vsel %vm88, %v85, %v87
    %v97 = vmul.f32 %v69, %v81
    %v98 = vmul.f32 %v70, %v89
    %v99 = vmul.f32 %v71, %v90
    %v100 = vmul.f32 %v72, %v91
    %v101 = vmul.f32 %v73, %v87
    %103 = vset.pattern.permute.xlu0 0
    %104 = vperm.xlu0 %103, %v68
    %v105 = vpop.permute.xlu0 %104
    %v107 = vmul.f32 %v105, %v97
    %v108 = vmul.f32 %v105, %v98
    %v109 = vmul.f32 %v105, %v99
    %v110 = vmul.f32 %v105, %v100
    %v111 = vmul.f32 %v105, %v101
    %v112 = vadd.f32 %v107, 0.0
    %v113 = vadd.f32 %v108, 0.0
    %v114 = vadd.f32 %v109, 0.0
    %v115 = vadd.f32 %v110, 0.0
    %v116 = vadd.f32 %v111, 0.0
    %117 = vset.pattern.permute.xlu0 27
    %118 = vperm.xlu0 %117, %v68
    %v119 = vpop.permute.xlu0 %118
    %v121 = vmul.f32 %v119, %v97
    %v122 = vmul.f32 %v119, %v98
    %v123 = vmul.f32 %v119, %v99
    %v124 = vmul.f32 %v119, %v100
    %v125 = vmul.f32 %v119, %v101
    %v126 = vadd.f32 %v121, 0.0
    %v127 = vadd.f32 %v122, 0.0
    %v128 = vadd.f32 %v123, 0.0
    %v129 = vadd.f32 %v124, 0.0
    %v130 = vadd.f32 %v125, 0.0
    %131 = vset.pattern.permute.xlu0 54
    %132 = vperm.xlu0 %131, %v68
    %v133 = vpop.permute.xlu0 %132
    %v135 = vmul.f32 %v133, %v97
    %v136 = vmul.f32 %v133, %v98
    %v137 = vmul.f32 %v133, %v99
    %v138 = vmul.f32 %v133, %v100
    %v139 = vmul.f32 %v133, %v101
    %v140 = vadd.f32 %v135, 0.0
    %v141 = vadd.f32 %v136, 0.0
    %v142 = vadd.f32 %v137, 0.0
    %v143 = vadd.f32 %v138, 0.0
    %v144 = vadd.f32 %v139, 0.0
    %s145 = scalar_lea.vmem [#allocation8], 1
    %v146 = vld [vmem:[%s145] ss:$8 sm:$0xf]
    %v148 = vperm.slane %v146, 0
    %v149 = vperm.slane %v146, 1
    %v150 = vperm.slane %v146, 2
    %v151 = vperm.slane %v146, 3
    %152 = vrot.lane.b32.xlu0 %v148, 56
    %v153 = vpop.permute.xlu0 %152
    %154 = vrot.lane.b32.xlu0 %v149, 56
    %v155 = vpop.permute.xlu0 %154
    %156 = vrot.lane.b32.xlu0 %v150, 56
    %v157 = vpop.permute.xlu0 %156
    %158 = vrot.lane.b32.xlu0 %v151, 56
    %v159 = vpop.permute.xlu0 %158
    %vm160 = vcmask 457728
    %v161 = vsel %vm160, %v153, %v155
    %v162 = vsel %vm160, %v155, %v157
    %v163 = vsel %vm160, %v157, %v159
    %v169 = vmul.f32 %v69, %v153
    %v170 = vmul.f32 %v70, %v161
    %v171 = vmul.f32 %v71, %v162
    %v172 = vmul.f32 %v72, %v163
    %v173 = vmul.f32 %v73, %v159
    %174 = vset.pattern.permute.xlu0 1
    %175 = vperm.xlu0 %174, %v68
    %v176 = vpop.permute.xlu0 %175
    %v178 = vmul.f32 %v176, %v169
    %v179 = vmul.f32 %v176, %v170
    %v180 = vmul.f32 %v176, %v171
    %v181 = vmul.f32 %v176, %v172
    %v182 = vmul.f32 %v176, %v173
    %188 = vrot.lane.b32.xlu0 %v178, 127
    %v189 = vpop.permute.xlu0 %188
    %190 = vrot.lane.b32.xlu0 %v179, 127
    %v191 = vpop.permute.xlu0 %190
    %192 = vrot.lane.b32.xlu0 %v180, 127
    %v193 = vpop.permute.xlu0 %192
    %194 = vrot.lane.b32.xlu0 %v181, 127
    %v195 = vpop.permute.xlu0 %194
    %196 = vrot.lane.b32.xlu0 %v182, 127
    %v197 = vpop.permute.xlu0 %196
    %vm198 = vcmask 1039360
    %v199 = vsel %vm198, %v189, %v191
    %v200 = vsel %vm198, %v191, %v193
    %v201 = vsel %vm198, %v193, %v195
    %v202 = vsel %vm198, %v195, %v197
    %v208 = vadd.f32 %v112, %v199
    %v209 = vadd.f32 %v113, %v200
    %v210 = vadd.f32 %v114, %v201
    %v211 = vadd.f32 %v115, %v202
    %v212 = vadd.f32 %v116, %v197
    %213 = vset.pattern.permute.xlu0 28
    %214 = vperm.xlu0 %213, %v68
    %v215 = vpop.permute.xlu0 %214
    %v217 = vmul.f32 %v215, %v169
    %v218 = vmul.f32 %v215, %v170
    %v219 = vmul.f32 %v215, %v171
    %v220 = vmul.f32 %v215, %v172
    %v221 = vmul.f32 %v215, %v173
    %227 = vrot.lane.b32.xlu0 %v217, 127
    %v228 = vpop.permute.xlu0 %227
    %229 = vrot.lane.b32.xlu0 %v218, 127
    %v230 = vpop.permute.xlu0 %229
    %231 = vrot.lane.b32.xlu0 %v219, 127
    %v232 = vpop.permute.xlu0 %231
    %233 = vrot.lane.b32.xlu0 %v220, 127
    %v234 = vpop.permute.xlu0 %233
    %235 = vrot.lane.b32.xlu0 %v221, 127
    %v236 = vpop.permute.xlu0 %235
    %v237 = vsel %vm198, %v228, %v230
    %v238 = vsel %vm198, %v230, %v232
    %v239 = vsel %vm198, %v232, %v234
    %v240 = vsel %vm198, %v234, %v236
    %v246 = vadd.f32 %v126, %v237
    %v247 = vadd.f32 %v127, %v238
    %v248 = vadd.f32 %v128, %v239
    %v249 = vadd.f32 %v129, %v240
    %v250 = vadd.f32 %v130, %v236
    %251 = vset.pattern.permute.xlu0 55
    %252 = vperm.xlu0 %251, %v68
    %v253 = vpop.permute.xlu0 %252
    %v255 = vmul.f32 %v253, %v169
    %v256 = vmul.f32 %v253, %v170
    %v257 = vmul.f32 %v253, %v171
    %v258 = vmul.f32 %v253, %v172
    %v259 = vmul.f32 %v253, %v173
    %265 = vrot.lane.b32.xlu0 %v255, 127
    %v266 = vpop.permute.xlu0 %265
    %267 = vrot.lane.b32.xlu0 %v256, 127
    %v268 = vpop.permute.xlu0 %267
    %269 = vrot.lane.b32.xlu0 %v257, 127
    %v270 = vpop.permute.xlu0 %269
    %271 = vrot.lane.b32.xlu0 %v258, 127
    %v272 = vpop.permute.xlu0 %271
    %273 = vrot.lane.b32.xlu0 %v259, 127
    %v274 = vpop.permute.xlu0 %273
    %v275 = vsel %vm198, %v266, %v268
    %v276 = vsel %vm198, %v268, %v270
    %v277 = vsel %vm198, %v270, %v272
    %v278 = vsel %vm198, %v272, %v274
    %v284 = vadd.f32 %v140, %v275
    %v285 = vadd.f32 %v141, %v276
    %v286 = vadd.f32 %v142, %v277
    %v287 = vadd.f32 %v143, %v278
    %v288 = vadd.f32 %v144, %v274
    %s289 = scalar_lea.vmem [#allocation8], 2
    %v290 = vld [vmem:[%s289] ss:$8 sm:$0xf]
    %v292 = vperm.slane %v290, 0
    %v293 = vperm.slane %v290, 1
    %v294 = vperm.slane %v290, 2
    %v295 = vperm.slane %v290, 3
    %296 = vrot.lane.b32.xlu0 %v292, 57
    %v297 = vpop.permute.xlu0 %296
    %298 = vrot.lane.b32.xlu0 %v293, 57
    %v299 = vpop.permute.xlu0 %298
    %300 = vrot.lane.b32.xlu0 %v294, 57
    %v301 = vpop.permute.xlu0 %300
    %302 = vrot.lane.b32.xlu0 %v295, 57
    %v303 = vpop.permute.xlu0 %302
    %vm304 = vcmask 465920
    %v305 = vsel %vm304, %v297, %v299
    %v306 = vsel %vm304, %v299, %v301
    %v307 = vsel %vm304, %v301, %v303
    %v313 = vmul.f32 %v69, %v297
    %v314 = vmul.f32 %v70, %v305
    %v315 = vmul.f32 %v71, %v306
    %v316 = vmul.f32 %v72, %v307
    %v317 = vmul.f32 %v73, %v303
    %318 = vset.pattern.permute.xlu0 2
    %319 = vperm.xlu0 %318, %v68
    %v320 = vpop.permute.xlu0 %319
    %v322 = vmul.f32 %v320, %v313
    %v323 = vmul.f32 %v320, %v314
    %v324 = vmul.f32 %v320, %v315
    %v325 = vmul.f32 %v320, %v316
    %v326 = vmul.f32 %v320, %v317
    %332 = vrot.lane.b32.xlu0 %v322, 126
    %v333 = vpop.permute.xlu0 %332
    %334 = vrot.lane.b32.xlu0 %v323, 126
    %v335 = vpop.permute.xlu0 %334
    %336 = vrot.lane.b32.xlu0 %v324, 126
    %v337 = vpop.permute.xlu0 %336
    %338 = vrot.lane.b32.xlu0 %v325, 126
    %v339 = vpop.permute.xlu0 %338
    %340 = vrot.lane.b32.xlu0 %v326, 126
    %v341 = vpop.permute.xlu0 %340
    %vm342 = vcmask 1031168
    %v343 = vsel %vm342, %v333, %v335
    %v344 = vsel %vm342, %v335, %v337
    %v345 = vsel %vm342, %v337, %v339
    %v346 = vsel %vm342, %v339, %v341
    %v352 = vadd.f32 %v208, %v343
    %v353 = vadd.f32 %v209, %v344
    %v354 = vadd.f32 %v210, %v345
    %v355 = vadd.f32 %v211, %v346
    %v356 = vadd.f32 %v212, %v341
    %357 = vset.pattern.permute.xlu0 29
    %358 = vperm.xlu0 %357, %v68
    %v359 = vpop.permute.xlu0 %358
    %v361 = vmul.f32 %v359, %v313
    %v362 = vmul.f32 %v359, %v314
    %v363 = vmul.f32 %v359, %v315
    %v364 = vmul.f32 %v359, %v316
    %v365 = vmul.f32 %v359, %v317
    %371 = vrot.lane.b32.xlu0 %v361, 126
    %v372 = vpop.permute.xlu0 %371
    %373 = vrot.lane.b32.xlu0 %v362, 126
    %v374 = vpop.permute.xlu0 %373
    %375 = vrot.lane.b32.xlu0 %v363, 126
    %v376 = vpop.permute.xlu0 %375
    %377 = vrot.lane.b32.xlu0 %v364, 126
    %v378 = vpop.permute.xlu0 %377
    %379 = vrot.lane.b32.xlu0 %v365, 126
    %v380 = vpop.permute.xlu0 %379
    %v381 = vsel %vm342, %v372, %v374
    %v382 = vsel %vm342, %v374, %v376
    %v383 = vsel %vm342, %v376, %v378
    %v384 = vsel %vm342, %v378, %v380
    %v390 = vadd.f32 %v246, %v381
    %v391 = vadd.f32 %v247, %v382
    %v392 = vadd.f32 %v248, %v383
    %v393 = vadd.f32 %v249, %v384
    %v394 = vadd.f32 %v250, %v380
    %395 = vset.pattern.permute.xlu0 56
    %396 = vperm.xlu0 %395, %v68
    %v397 = vpop.permute.xlu0 %396
    %v399 = vmul.f32 %v397, %v313
    %v400 = vmul.f32 %v397, %v314
    %v401 = vmul.f32 %v397, %v315
    %v402 = vmul.f32 %v397, %v316
    %v403 = vmul.f32 %v397, %v317
    %409 = vrot.lane.b32.xlu0 %v399, 126
    %v410 = vpop.permute.xlu0 %409
    %411 = vrot.lane.b32.xlu0 %v400, 126
    %v412 = vpop.permute.xlu0 %411
    %413 = vrot.lane.b32.xlu0 %v401, 126
    %v414 = vpop.permute.xlu0 %413
    %415 = vrot.lane.b32.xlu0 %v402, 126
    %v416 = vpop.permute.xlu0 %415
    %417 = vrot.lane.b32.xlu0 %v403, 126
    %v418 = vpop.permute.xlu0 %417
    %v419 = vsel %vm342, %v410, %v412
    %v420 = vsel %vm342, %v412, %v414
    %v421 = vsel %vm342, %v414, %v416
    %v422 = vsel %vm342, %v416, %v418
    %v428 = vadd.f32 %v284, %v419
    %v429 = vadd.f32 %v285, %v420
    %v430 = vadd.f32 %v286, %v421
    %v431 = vadd.f32 %v287, %v422
    %v432 = vadd.f32 %v288, %v418
    %s433 = scalar_lea.vmem [#allocation8], 3
    %v434 = vld [vmem:[%s433] ss:$8 sm:$0xf]
    %v436 = vperm.slane %v434, 0
    %v437 = vperm.slane %v434, 1
    %v438 = vperm.slane %v434, 2
    %v439 = vperm.slane %v434, 3
    %440 = vrot.lane.b32.xlu0 %v436, 63
    %v441 = vpop.permute.xlu0 %440
    %442 = vrot.lane.b32.xlu0 %v437, 63
    %v443 = vpop.permute.xlu0 %442
    %444 = vrot.lane.b32.xlu0 %v438, 63
    %v445 = vpop.permute.xlu0 %444
    %446 = vrot.lane.b32.xlu0 %v439, 63
    %v447 = vpop.permute.xlu0 %446
    %vm448 = vcmask 515072
    %v449 = vsel %vm448, %v441, %v443
    %v450 = vsel %vm448, %v443, %v445
    %v451 = vsel %vm448, %v445, %v447
    %v457 = vmul.f32 %v69, %v441
    %v458 = vmul.f32 %v70, %v449
    %v459 = vmul.f32 %v71, %v450
    %v460 = vmul.f32 %v72, %v451
    %v461 = vmul.f32 %v73, %v447
    %462 = vset.pattern.permute.xlu0 3
    %463 = vperm.xlu0 %462, %v68
    %v464 = vpop.permute.xlu0 %463
    %v466 = vmul.f32 %v464, %v457
    %v467 = vmul.f32 %v464, %v458
    %v468 = vmul.f32 %v464, %v459
    %v469 = vmul.f32 %v464, %v460
    %v470 = vmul.f32 %v464, %v461
    %476 = vrot.lane.b32.xlu0 %v466, 120
    %v477 = vpop.permute.xlu0 %476
    %478 = vrot.lane.b32.xlu0 %v467, 120
    %v479 = vpop.permute.xlu0 %478
    %480 = vrot.lane.b32.xlu0 %v468, 120
    %v481 = vpop.permute.xlu0 %480
    %482 = vrot.lane.b32.xlu0 %v469, 120
    %v483 = vpop.permute.xlu0 %482
    %484 = vrot.lane.b32.xlu0 %v470, 120
    %v485 = vpop.permute.xlu0 %484
    %vm486 = vcmask 982016
    %v487 = vsel %vm486, %v477, %v479
    %v488 = vsel %vm486, %v479, %v481
    %v489 = vsel %vm486, %v481, %v483
    %v490 = vsel %vm486, %v483, %v485
    %v496 = vadd.f32 %v352, %v487
    %v497 = vadd.f32 %v353, %v488
    %v498 = vadd.f32 %v354, %v489
    %v499 = vadd.f32 %v355, %v490
    %v500 = vadd.f32 %v356, %v485
    %501 = vset.pattern.permute.xlu0 30
    %502 = vperm.xlu0 %501, %v68
    %v503 = vpop.permute.xlu0 %502
    %v505 = vmul.f32 %v503, %v457
    %v506 = vmul.f32 %v503, %v458
    %v507 = vmul.f32 %v503, %v459
    %v508 = vmul.f32 %v503, %v460
    %v509 = vmul.f32 %v503, %v461
    %515 = vrot.lane.b32.xlu0 %v505, 120
    %v516 = vpop.permute.xlu0 %515
    %517 = vrot.lane.b32.xlu0 %v506, 120
    %v518 = vpop.permute.xlu0 %517
    %519 = vrot.lane.b32.xlu0 %v507, 120
    %v520 = vpop.permute.xlu0 %519
    %521 = vrot.lane.b32.xlu0 %v508, 120
    %v522 = vpop.permute.xlu0 %521
    %523 = vrot.lane.b32.xlu0 %v509, 120
    %v524 = vpop.permute.xlu0 %523
    %v525 = vsel %vm486, %v516, %v518
    %v526 = vsel %vm486, %v518, %v520
    %v527 = vsel %vm486, %v520, %v522
    %v528 = vsel %vm486, %v522, %v524
    %v534 = vadd.f32 %v390, %v525
    %v535 = vadd.f32 %v391, %v526
    %v536 = vadd.f32 %v392, %v527
    %v537 = vadd.f32 %v393, %v528
    %v538 = vadd.f32 %v394, %v524
    %539 = vset.pattern.permute.xlu0 57
    %540 = vperm.xlu0 %539, %v68
    %v541 = vpop.permute.xlu0 %540
    %v543 = vmul.f32 %v541, %v457
    %v544 = vmul.f32 %v541, %v458
    %v545 = vmul.f32 %v541, %v459
    %v546 = vmul.f32 %v541, %v460
    %v547 = vmul.f32 %v541, %v461
    %553 = vrot.lane.b32.xlu0 %v543, 120
    %v554 = vpop.permute.xlu0 %553
    %555 = vrot.lane.b32.xlu0 %v544, 120
    %v556 = vpop.permute.xlu0 %555
    %557 = vrot.lane.b32.xlu0 %v545, 120
    %v558 = vpop.permute.xlu0 %557
    %559 = vrot.lane.b32.xlu0 %v546, 120
    %v560 = vpop.permute.xlu0 %559
    %561 = vrot.lane.b32.xlu0 %v547, 120
    %v562 = vpop.permute.xlu0 %561
    %v563 = vsel %vm486, %v554, %v556
    %v564 = vsel %vm486, %v556, %v558
    %v565 = vsel %vm486, %v558, %v560
    %v566 = vsel %vm486, %v560, %v562
    %v572 = vadd.f32 %v428, %v563
    %v573 = vadd.f32 %v429, %v564
    %v574 = vadd.f32 %v430, %v565
    %v575 = vadd.f32 %v431, %v566
    %v576 = vadd.f32 %v432, %v562
    %s577 = scalar_lea.vmem [#allocation8], 4
    %v578 = vld [vmem:[%s577] ss:$8 sm:$0xf]
    %v580 = vperm.slane %v578, 0
    %v581 = vperm.slane %v578, 1
    %v582 = vperm.slane %v578, 2
    %v583 = vperm.slane %v578, 3
    %584 = vrot.lane.b32.xlu0 %v580, 64
    %v585 = vpop.permute.xlu0 %584
    %586 = vrot.lane.b32.xlu0 %v581, 64
    %v587 = vpop.permute.xlu0 %586
    %588 = vrot.lane.b32.xlu0 %v582, 64
    %v589 = vpop.permute.xlu0 %588
    %590 = vrot.lane.b32.xlu0 %v583, 64
    %v591 = vpop.permute.xlu0 %590
    %vm592 = vcmask 523264
    %v593 = vsel %vm592, %v585, %v587
    %v594 = vsel %vm592, %v587, %v589
    %v595 = vsel %vm592, %v589, %v591
    %v601 = vmul.f32 %v69, %v585
    %v602 = vmul.f32 %v70, %v593
    %v603 = vmul.f32 %v71, %v594
    %v604 = vmul.f32 %v72, %v595
    %v605 = vmul.f32 %v73, %v591
    %606 = vset.pattern.permute.xlu0 4
    %607 = vperm.xlu0 %606, %v68
    %v608 = vpop.permute.xlu0 %607
    %v610 = vmul.f32 %v608, %v601
    %v611 = vmul.f32 %v608, %v602
    %v612 = vmul.f32 %v608, %v603
    %v613 = vmul.f32 %v608, %v604
    %v614 = vmul.f32 %v608, %v605
    %620 = vrot.lane.b32.xlu0 %v610, 119
    %v621 = vpop.permute.xlu0 %620
    %622 = vrot.lane.b32.xlu0 %v611, 119
    %v623 = vpop.permute.xlu0 %622
    %624 = vrot.lane.b32.xlu0 %v612, 119
    %v625 = vpop.permute.xlu0 %624
    %626 = vrot.lane.b32.xlu0 %v613, 119
    %v627 = vpop.permute.xlu0 %626
    %628 = vrot.lane.b32.xlu0 %v614, 119
    %v629 = vpop.permute.xlu0 %628
    %vm630 = vcmask 973824
    %v631 = vsel %vm630, %v621, %v623
    %v632 = vsel %vm630, %v623, %v625
    %v633 = vsel %vm630, %v625, %v627
    %v634 = vsel %vm630, %v627, %v629
    %v640 = vadd.f32 %v496, %v631
    %v641 = vadd.f32 %v497, %v632
    %v642 = vadd.f32 %v498, %v633
    %v643 = vadd.f32 %v499, %v634
    %v644 = vadd.f32 %v500, %v629
    %645 = vset.pattern.permute.xlu0 31
    %646 = vperm.xlu0 %645, %v68
    %v647 = vpop.permute.xlu0 %646
    %v649 = vmul.f32 %v647, %v601
    %v650 = vmul.f32 %v647, %v602
    %v651 = vmul.f32 %v647, %v603
    %v652 = vmul.f32 %v647, %v604
    %v653 = vmul.f32 %v647, %v605
    %659 = vrot.lane.b32.xlu0 %v649, 119
    %v660 = vpop.permute.xlu0 %659
    %661 = vrot.lane.b32.xlu0 %v650, 119
    %v662 = vpop.permute.xlu0 %661
    %663 = vrot.lane.b32.xlu0 %v651, 119
    %v664 = vpop.permute.xlu0 %663
    %665 = vrot.lane.b32.xlu0 %v652, 119
    %v666 = vpop.permute.xlu0 %665
    %667 = vrot.lane.b32.xlu0 %v653, 119
    %v668 = vpop.permute.xlu0 %667
    %v669 = vsel %vm630, %v660, %v662
    %v670 = vsel %vm630, %v662, %v664
    %v671 = vsel %vm630, %v664, %v666
    %v672 = vsel %vm630, %v666, %v668
    %v678 = vadd.f32 %v534, %v669
    %v679 = vadd.f32 %v535, %v670
    %v680 = vadd.f32 %v536, %v671
    %v681 = vadd.f32 %v537, %v672
    %v682 = vadd.f32 %v538, %v668
    %683 = vset.pattern.permute.xlu0 58
    %684 = vperm.xlu0 %683, %v68
    %v685 = vpop.permute.xlu0 %684
    %v687 = vmul.f32 %v685, %v601
    %v688 = vmul.f32 %v685, %v602
    %v689 = vmul.f32 %v685, %v603
    %v690 = vmul.f32 %v685, %v604
    %v691 = vmul.f32 %v685, %v605
    %697 = vrot.lane.b32.xlu0 %v687, 119
    %v698 = vpop.permute.xlu0 %697
    %699 = vrot.lane.b32.xlu0 %v688, 119
    %v700 = vpop.permute.xlu0 %699
    %701 = vrot.lane.b32.xlu0 %v689, 119
    %v702 = vpop.permute.xlu0 %701
    %703 = vrot.lane.b32.xlu0 %v690, 119
    %v704 = vpop.permute.xlu0 %703
    %705 = vrot.lane.b32.xlu0 %v691, 119
    %v706 = vpop.permute.xlu0 %705
    %v707 = vsel %vm630, %v698, %v700
    %v708 = vsel %vm630, %v700, %v702
    %v709 = vsel %vm630, %v702, %v704
    %v710 = vsel %vm630, %v704, %v706
    %v716 = vadd.f32 %v572, %v707
    %v717 = vadd.f32 %v573, %v708
    %v718 = vadd.f32 %v574, %v709
    %v719 = vadd.f32 %v575, %v710
    %v720 = vadd.f32 %v576, %v706
    %s721 = scalar_lea.vmem [#allocation8], 5
    %v722 = vld [vmem:[%s721] ss:$8 sm:$0xf]
    %v724 = vperm.slane %v722, 0
    %v725 = vperm.slane %v722, 1
    %v726 = vperm.slane %v722, 2
    %v727 = vperm.slane %v722, 3
    %728 = vrot.lane.b32.xlu0 %v724, 65
    %v729 = vpop.permute.xlu0 %728
    %730 = vrot.lane.b32.xlu0 %v725, 65
    %v731 = vpop.permute.xlu0 %730
    %732 = vrot.lane.b32.xlu0 %v726, 65
    %v733 = vpop.permute.xlu0 %732
    %734 = vrot.lane.b32.xlu0 %v727, 65
    %v735 = vpop.permute.xlu0 %734
    %vm736 = vcmask 531456
    %v737 = vsel %vm736, %v729, %v731
    %v738 = vsel %vm736, %v731, %v733
    %v739 = vsel %vm736, %v733, %v735
    %v745 = vmul.f32 %v69, %v729
    %v746 = vmul.f32 %v70, %v737
    %v747 = vmul.f32 %v71, %v738
    %v748 = vmul.f32 %v72, %v739
    %v749 = vmul.f32 %v73, %v735
    %750 = vset.pattern.permute.xlu0 5
    %751 = vperm.xlu0 %750, %v68
    %v752 = vpop.permute.xlu0 %751
    %v754 = vmul.f32 %v752, %v745
    %v755 = vmul.f32 %v752, %v746
    %v756 = vmul.f32 %v752, %v747
    %v757 = vmul.f32 %v752, %v748
    %v758 = vmul.f32 %v752, %v749
    %764 = vrot.lane.b32.xlu0 %v754, 118
    %v765 = vpop.permute.xlu0 %764
    %766 = vrot.lane.b32.xlu0 %v755, 118
    %v767 = vpop.permute.xlu0 %766
    %768 = vrot.lane.b32.xlu0 %v756, 118
    %v769 = vpop.permute.xlu0 %768
    %770 = vrot.lane.b32.xlu0 %v757, 118
    %v771 = vpop.permute.xlu0 %770
    %772 = vrot.lane.b32.xlu0 %v758, 118
    %v773 = vpop.permute.xlu0 %772
    %vm774 = vcmask 965632
    %v775 = vsel %vm774, %v765, %v767
    %v776 = vsel %vm774, %v767, %v769
    %v777 = vsel %vm774, %v769, %v771
    %v778 = vsel %vm774, %v771, %v773
    %v784 = vadd.f32 %v640, %v775
    %v785 = vadd.f32 %v641, %v776
    %v786 = vadd.f32 %v642, %v777
    %v787 = vadd.f32 %v643, %v778
    %v788 = vadd.f32 %v644, %v773
    %789 = vset.pattern.permute.xlu0 32
    %790 = vperm.xlu0 %789, %v68
    %v791 = vpop.permute.xlu0 %790
    %v793 = vmul.f32 %v791, %v745
    %v794 = vmul.f32 %v791, %v746
    %v795 = vmul.f32 %v791, %v747
    %v796 = vmul.f32 %v791, %v748
    %v797 = vmul.f32 %v791, %v749
    %803 = vrot.lane.b32.xlu0 %v793, 118
    %v804 = vpop.permute.xlu0 %803
    %805 = vrot.lane.b32.xlu0 %v794, 118
    %v806 = vpop.permute.xlu0 %805
    %807 = vrot.lane.b32.xlu0 %v795, 118
    %v808 = vpop.permute.xlu0 %807
    %809 = vrot.lane.b32.xlu0 %v796, 118
    %v810 = vpop.permute.xlu0 %809
    %811 = vrot.lane.b32.xlu0 %v797, 118
    %v812 = vpop.permute.xlu0 %811
    %v813 = vsel %vm774, %v804, %v806
    %v814 = vsel %vm774, %v806, %v808
    %v815 = vsel %vm774, %v808, %v810
    %v816 = vsel %vm774, %v810, %v812
    %v822 = vadd.f32 %v678, %v813
    %v823 = vadd.f32 %v679, %v814
    %v824 = vadd.f32 %v680, %v815
    %v825 = vadd.f32 %v681, %v816
    %v826 = vadd.f32 %v682, %v812
    %827 = vset.pattern.permute.xlu0 59
    %828 = vperm.xlu0 %827, %v68
    %v829 = vpop.permute.xlu0 %828
    %v831 = vmul.f32 %v829, %v745
    %v832 = vmul.f32 %v829, %v746
    %v833 = vmul.f32 %v829, %v747
    %v834 = vmul.f32 %v829, %v748
    %v835 = vmul.f32 %v829, %v749
    %841 = vrot.lane.b32.xlu0 %v831, 118
    %v842 = vpop.permute.xlu0 %841
    %843 = vrot.lane.b32.xlu0 %v832, 118
    %v844 = vpop.permute.xlu0 %843
    %845 = vrot.lane.b32.xlu0 %v833, 118
    %v846 = vpop.permute.xlu0 %845
    %847 = vrot.lane.b32.xlu0 %v834, 118
    %v848 = vpop.permute.xlu0 %847
    %849 = vrot.lane.b32.xlu0 %v835, 118
    %v850 = vpop.permute.xlu0 %849
    %v851 = vsel %vm774, %v842, %v844
    %v852 = vsel %vm774, %v844, %v846
    %v853 = vsel %vm774, %v846, %v848
    %v854 = vsel %vm774, %v848, %v850
    %v860 = vadd.f32 %v716, %v851
    %v861 = vadd.f32 %v717, %v852
    %v862 = vadd.f32 %v718, %v853
    %v863 = vadd.f32 %v719, %v854
    %v864 = vadd.f32 %v720, %v850
    %s865 = scalar_lea.vmem [#allocation8], 6
    %v866 = vld [vmem:[%s865] ss:$8 sm:$0xf]
    %v868 = vperm.slane %v866, 0
    %v869 = vperm.slane %v866, 1
    %v870 = vperm.slane %v866, 2
    %v871 = vperm.slane %v866, 3
    %872 = vrot.lane.b32.xlu0 %v868, 71
    %v873 = vpop.permute.xlu0 %872
    %874 = vrot.lane.b32.xlu0 %v869, 71
    %v875 = vpop.permute.xlu0 %874
    %876 = vrot.lane.b32.xlu0 %v870, 71
    %v877 = vpop.permute.xlu0 %876
    %878 = vrot.lane.b32.xlu0 %v871, 71
    %v879 = vpop.permute.xlu0 %878
    %vm880 = vcmask 580608
    %v881 = vsel %vm880, %v873, %v875
    %v882 = vsel %vm880, %v875, %v877
    %v883 = vsel %vm880, %v877, %v879
    %v889 = vmul.f32 %v69, %v873
    %v890 = vmul.f32 %v70, %v881
    %v891 = vmul.f32 %v71, %v882
    %v892 = vmul.f32 %v72, %v883
    %v893 = vmul.f32 %v73, %v879
    %894 = vset.pattern.permute.xlu0 6
    %895 = vperm.xlu0 %894, %v68
    %v896 = vpop.permute.xlu0 %895
    %v898 = vmul.f32 %v896, %v889
    %v899 = vmul.f32 %v896, %v890
    %v900 = vmul.f32 %v896, %v891
    %v901 = vmul.f32 %v896, %v892
    %v902 = vmul.f32 %v896, %v893
    %908 = vrot.lane.b32.xlu0 %v898, 112
    %v909 = vpop.permute.xlu0 %908
    %910 = vrot.lane.b32.xlu0 %v899, 112
    %v911 = vpop.permute.xlu0 %910
    %912 = vrot.lane.b32.xlu0 %v900, 112
    %v913 = vpop.permute.xlu0 %912
    %914 = vrot.lane.b32.xlu0 %v901, 112
    %v915 = vpop.permute.xlu0 %914
    %916 = vrot.lane.b32.xlu0 %v902, 112
    %v917 = vpop.permute.xlu0 %916
    %vm918 = vcmask 916480
    %v919 = vsel %vm918, %v909, %v911
    %v920 = vsel %vm918, %v911, %v913
    %v921 = vsel %vm918, %v913, %v915
    %v922 = vsel %vm918, %v915, %v917
    %v928 = vadd.f32 %v784, %v919
    %v929 = vadd.f32 %v785, %v920
    %v930 = vadd.f32 %v786, %v921
    %v931 = vadd.f32 %v787, %v922
    %v932 = vadd.f32 %v788, %v917
    %933 = vset.pattern.permute.xlu0 33
    %934 = vperm.xlu0 %933, %v68
    %v935 = vpop.permute.xlu0 %934
    %v937 = vmul.f32 %v935, %v889
    %v938 = vmul.f32 %v935, %v890
    %v939 = vmul.f32 %v935, %v891
    %v940 = vmul.f32 %v935, %v892
    %v941 = vmul.f32 %v935, %v893
    %947 = vrot.lane.b32.xlu0 %v937, 112
    %v948 = vpop.permute.xlu0 %947
    %949 = vrot.lane.b32.xlu0 %v938, 112
    %v950 = vpop.permute.xlu0 %949
    %951 = vrot.lane.b32.xlu0 %v939, 112
    %v952 = vpop.permute.xlu0 %951
    %953 = vrot.lane.b32.xlu0 %v940, 112
    %v954 = vpop.permute.xlu0 %953
    %955 = vrot.lane.b32.xlu0 %v941, 112
    %v956 = vpop.permute.xlu0 %955
    %v957 = vsel %vm918, %v948, %v950
    %v958 = vsel %vm918, %v950, %v952
    %v959 = vsel %vm918, %v952, %v954
    %v960 = vsel %vm918, %v954, %v956
    %v966 = vadd.f32 %v822, %v957
    %v967 = vadd.f32 %v823, %v958
    %v968 = vadd.f32 %v824, %v959
    %v969 = vadd.f32 %v825, %v960
    %v970 = vadd.f32 %v826, %v956
    %971 = vset.pattern.permute.xlu0 60
    %972 = vperm.xlu0 %971, %v68
    %v973 = vpop.permute.xlu0 %972
    %v975 = vmul.f32 %v973, %v889
    %v976 = vmul.f32 %v973, %v890
    %v977 = vmul.f32 %v973, %v891
    %v978 = vmul.f32 %v973, %v892
    %v979 = vmul.f32 %v973, %v893
    %985 = vrot.lane.b32.xlu0 %v975, 112
    %v986 = vpop.permute.xlu0 %985
    %987 = vrot.lane.b32.xlu0 %v976, 112
    %v988 = vpop.permute.xlu0 %987
    %989 = vrot.lane.b32.xlu0 %v977, 112
    %v990 = vpop.permute.xlu0 %989
    %991 = vrot.lane.b32.xlu0 %v978, 112
    %v992 = vpop.permute.xlu0 %991
    %993 = vrot.lane.b32.xlu0 %v979, 112
    %v994 = vpop.permute.xlu0 %993
    %v995 = vsel %vm918, %v986, %v988
    %v996 = vsel %vm918, %v988, %v990
    %v997 = vsel %vm918, %v990, %v992
    %v998 = vsel %vm918, %v992, %v994
    %v1004 = vadd.f32 %v860, %v995
    %v1005 = vadd.f32 %v861, %v996
    %v1006 = vadd.f32 %v862, %v997
    %v1007 = vadd.f32 %v863, %v998
    %v1008 = vadd.f32 %v864, %v994
    %s1009 = scalar_lea.vmem [#allocation8], 7
    %v1010 = vld [vmem:[%s1009] ss:$8 sm:$0xf]
    %v1012 = vperm.slane %v1010, 0
    %v1013 = vperm.slane %v1010, 1
    %v1014 = vperm.slane %v1010, 2
    %v1015 = vperm.slane %v1010, 3
    %1016 = vrot.lane.b32.xlu0 %v1012, 72
    %v1017 = vpop.permute.xlu0 %1016
    %1018 = vrot.lane.b32.xlu0 %v1013, 72
    %v1019 = vpop.permute.xlu0 %1018
    %1020 = vrot.lane.b32.xlu0 %v1014, 72
    %v1021 = vpop.permute.xlu0 %1020
    %1022 = vrot.lane.b32.xlu0 %v1015, 72
    %v1023 = vpop.permute.xlu0 %1022
    %vm1024 = vcmask 588800
    %v1025 = vsel %vm1024, %v1017, %v1019
    %v1026 = vsel %vm1024, %v1019, %v1021
    %v1027 = vsel %vm1024, %v1021, %v1023
    %v1033 = vmul.f32 %v69, %v1017
    %v1034 = vmul.f32 %v70, %v1025
    %v1035 = vmul.f32 %v71, %v1026
    %v1036 = vmul.f32 %v72, %v1027
    %v1037 = vmul.f32 %v73, %v1023
    %1038 = vset.pattern.permute.xlu0 7
    %1039 = vperm.xlu0 %1038, %v68
    %v1040 = vpop.permute.xlu0 %1039
    %v1042 = vmul.f32 %v1040, %v1033
    %v1043 = vmul.f32 %v1040, %v1034
    %v1044 = vmul.f32 %v1040, %v1035
    %v1045 = vmul.f32 %v1040, %v1036
    %v1046 = vmul.f32 %v1040, %v1037
    %1052 = vrot.lane.b32.xlu0 %v1042, 111
    %v1053 = vpop.permute.xlu0 %1052
    %1054 = vrot.lane.b32.xlu0 %v1043, 111
    %v1055 = vpop.permute.xlu0 %1054
    %1056 = vrot.lane.b32.xlu0 %v1044, 111
    %v1057 = vpop.permute.xlu0 %1056
    %1058 = vrot.lane.b32.xlu0 %v1045, 111
    %v1059 = vpop.permute.xlu0 %1058
    %1060 = vrot.lane.b32.xlu0 %v1046, 111
    %v1061 = vpop.permute.xlu0 %1060
    %vm1062 = vcmask 908288
    %v1063 = vsel %vm1062, %v1053, %v1055
    %v1064 = vsel %vm1062, %v1055, %v1057
    %v1065 = vsel %vm1062, %v1057, %v1059
    %v1066 = vsel %vm1062, %v1059, %v1061
    %v1072 = vadd.f32 %v928, %v1063
    %v1073 = vadd.f32 %v929, %v1064
    %v1074 = vadd.f32 %v930, %v1065
    %v1075 = vadd.f32 %v931, %v1066
    %v1076 = vadd.f32 %v932, %v1061
    %1077 = vset.pattern.permute.xlu0 34
    %1078 = vperm.xlu0 %1077, %v68
    %v1079 = vpop.permute.xlu0 %1078
    %v1081 = vmul.f32 %v1079, %v1033
    %v1082 = vmul.f32 %v1079, %v1034
    %v1083 = vmul.f32 %v1079, %v1035
    %v1084 = vmul.f32 %v1079, %v1036
    %v1085 = vmul.f32 %v1079, %v1037
    %1091 = vrot.lane.b32.xlu0 %v1081, 111
    %v1092 = vpop.permute.xlu0 %1091
    %1093 = vrot.lane.b32.xlu0 %v1082, 111
    %v1094 = vpop.permute.xlu0 %1093
    %1095 = vrot.lane.b32.xlu0 %v1083, 111
    %v1096 = vpop.permute.xlu0 %1095
    %1097 = vrot.lane.b32.xlu0 %v1084, 111
    %v1098 = vpop.permute.xlu0 %1097
    %1099 = vrot.lane.b32.xlu0 %v1085, 111
    %v1100 = vpop.permute.xlu0 %1099
    %v1101 = vsel %vm1062, %v1092, %v1094
    %v1102 = vsel %vm1062, %v1094, %v1096
    %v1103 = vsel %vm1062, %v1096, %v1098
    %v1104 = vsel %vm1062, %v1098, %v1100
    %v1110 = vadd.f32 %v966, %v1101
    %v1111 = vadd.f32 %v967, %v1102
    %v1112 = vadd.f32 %v968, %v1103
    %v1113 = vadd.f32 %v969, %v1104
    %v1114 = vadd.f32 %v970, %v1100
    %1115 = vset.pattern.permute.xlu0 61
    %1116 = vperm.xlu0 %1115, %v68
    %v1117 = vpop.permute.xlu0 %1116
    %v1119 = vmul.f32 %v1117, %v1033
    %v1120 = vmul.f32 %v1117, %v1034
    %v1121 = vmul.f32 %v1117, %v1035
    %v1122 = vmul.f32 %v1117, %v1036
    %v1123 = vmul.f32 %v1117, %v1037
    %1129 = vrot.lane.b32.xlu0 %v1119, 111
    %v1130 = vpop.permute.xlu0 %1129
    %1131 = vrot.lane.b32.xlu0 %v1120, 111
    %v1132 = vpop.permute.xlu0 %1131
    %1133 = vrot.lane.b32.xlu0 %v1121, 111
    %v1134 = vpop.permute.xlu0 %1133
    %1135 = vrot.lane.b32.xlu0 %v1122, 111
    %v1136 = vpop.permute.xlu0 %1135
    %1137 = vrot.lane.b32.xlu0 %v1123, 111
    %v1138 = vpop.permute.xlu0 %1137
    %v1139 = vsel %vm1062, %v1130, %v1132
    %v1140 = vsel %vm1062, %v1132, %v1134
    %v1141 = vsel %vm1062, %v1134, %v1136
    %v1142 = vsel %vm1062, %v1136, %v1138
    %v1148 = vadd.f32 %v1004, %v1139
    %v1149 = vadd.f32 %v1005, %v1140
    %v1150 = vadd.f32 %v1006, %v1141
    %v1151 = vadd.f32 %v1007, %v1142
    %v1152 = vadd.f32 %v1008, %v1138
    %s1153 = scalar_lea.vmem [#allocation8], 32
    %v1154 = vld [vmem:[%s1153] ss:$8 sm:$0xf]
    %v1156 = vperm.slane %v1154, 0
    %v1157 = vperm.slane %v1154, 1
    %v1158 = vperm.slane %v1154, 2
    %v1159 = vperm.slane %v1154, 3
    %1160 = vrot.lane.b32.xlu0 %v1156, 73
    %v1161 = vpop.permute.xlu0 %1160
    %1162 = vrot.lane.b32.xlu0 %v1157, 73
    %v1163 = vpop.permute.xlu0 %1162
    %1164 = vrot.lane.b32.xlu0 %v1158, 73
    %v1165 = vpop.permute.xlu0 %1164
    %1166 = vrot.lane.b32.xlu0 %v1159, 73
    %v1167 = vpop.permute.xlu0 %1166
    %vm1168 = vcmask 596992
    %v1169 = vsel %vm1168, %v1161, %v1163
    %v1170 = vsel %vm1168, %v1163, %v1165
    %v1171 = vsel %vm1168, %v1165, %v1167
    %v1177 = vmul.f32 %v69, %v1161
    %v1178 = vmul.f32 %v70, %v1169
    %v1179 = vmul.f32 %v71, %v1170
    %v1180 = vmul.f32 %v72, %v1171
    %v1181 = vmul.f32 %v73, %v1167
    %1182 = vset.pattern.permute.xlu0 8
    %1183 = vperm.xlu0 %1182, %v68
    %v1184 = vpop.permute.xlu0 %1183
    %v1186 = vmul.f32 %v1184, %v1177
    %v1187 = vmul.f32 %v1184, %v1178
    %v1188 = vmul.f32 %v1184, %v1179
    %v1189 = vmul.f32 %v1184, %v1180
    %v1190 = vmul.f32 %v1184, %v1181
    %1196 = vrot.lane.b32.xlu0 %v1186, 110
    %v1197 = vpop.permute.xlu0 %1196
    %1198 = vrot.lane.b32.xlu0 %v1187, 110
    %v1199 = vpop.permute.xlu0 %1198
    %1200 = vrot.lane.b32.xlu0 %v1188, 110
    %v1201 = vpop.permute.xlu0 %1200
    %1202 = vrot.lane.b32.xlu0 %v1189, 110
    %v1203 = vpop.permute.xlu0 %1202
    %1204 = vrot.lane.b32.xlu0 %v1190, 110
    %v1205 = vpop.permute.xlu0 %1204
    %vm1206 = vcmask 900096
    %v1207 = vsel %vm1206, %v1197, %v1199
    %v1208 = vsel %vm1206, %v1199, %v1201
    %v1209 = vsel %vm1206, %v1201, %v1203
    %v1210 = vsel %vm1206, %v1203, %v1205
    %v1216 = vadd.f32 %v1072, %v1207
    %v1217 = vadd.f32 %v1073, %v1208
    %v1218 = vadd.f32 %v1074, %v1209
    %v1219 = vadd.f32 %v1075, %v1210
    %v1220 = vadd.f32 %v1076, %v1205
    %1221 = vset.pattern.permute.xlu0 35
    %1222 = vperm.xlu0 %1221, %v68
    %v1223 = vpop.permute.xlu0 %1222
    %v1225 = vmul.f32 %v1223, %v1177
    %v1226 = vmul.f32 %v1223, %v1178
    %v1227 = vmul.f32 %v1223, %v1179
    %v1228 = vmul.f32 %v1223, %v1180
    %v1229 = vmul.f32 %v1223, %v1181
    %1235 = vrot.lane.b32.xlu0 %v1225, 110
    %v1236 = vpop.permute.xlu0 %1235
    %1237 = vrot.lane.b32.xlu0 %v1226, 110
    %v1238 = vpop.permute.xlu0 %1237
    %1239 = vrot.lane.b32.xlu0 %v1227, 110
    %v1240 = vpop.permute.xlu0 %1239
    %1241 = vrot.lane.b32.xlu0 %v1228, 110
    %v1242 = vpop.permute.xlu0 %1241
    %1243 = vrot.lane.b32.xlu0 %v1229, 110
    %v1244 = vpop.permute.xlu0 %1243
    %v1245 = vsel %vm1206, %v1236, %v1238
    %v1246 = vsel %vm1206, %v1238, %v1240
    %v1247 = vsel %vm1206, %v1240, %v1242
    %v1248 = vsel %vm1206, %v1242, %v1244
    %v1254 = vadd.f32 %v1110, %v1245
    %v1255 = vadd.f32 %v1111, %v1246
    %v1256 = vadd.f32 %v1112, %v1247
    %v1257 = vadd.f32 %v1113, %v1248
    %v1258 = vadd.f32 %v1114, %v1244
    %1259 = vset.pattern.permute.xlu0 62
    %1260 = vperm.xlu0 %1259, %v68
    %v1261 = vpop.permute.xlu0 %1260
    %v1263 = vmul.f32 %v1261, %v1177
    %v1264 = vmul.f32 %v1261, %v1178
    %v1265 = vmul.f32 %v1261, %v1179
    %v1266 = vmul.f32 %v1261, %v1180
    %v1267 = vmul.f32 %v1261, %v1181
    %1273 = vrot.lane.b32.xlu0 %v1263, 110
    %v1274 = vpop.permute.xlu0 %1273
    %1275 = vrot.lane.b32.xlu0 %v1264, 110
    %v1276 = vpop.permute.xlu0 %1275
    %1277 = vrot.lane.b32.xlu0 %v1265, 110
    %v1278 = vpop.permute.xlu0 %1277
    %1279 = vrot.lane.b32.xlu0 %v1266, 110
    %v1280 = vpop.permute.xlu0 %1279
    %1281 = vrot.lane.b32.xlu0 %v1267, 110
    %v1282 = vpop.permute.xlu0 %1281
    %v1283 = vsel %vm1206, %v1274, %v1276
    %v1284 = vsel %vm1206, %v1276, %v1278
    %v1285 = vsel %vm1206, %v1278, %v1280
    %v1286 = vsel %vm1206, %v1280, %v1282
    %v1292 = vadd.f32 %v1148, %v1283
    %v1293 = vadd.f32 %v1149, %v1284
    %v1294 = vadd.f32 %v1150, %v1285
    %v1295 = vadd.f32 %v1151, %v1286
    %v1296 = vadd.f32 %v1152, %v1282
    %s1297 = scalar_lea.vmem [#allocation8], 33
    %v1298 = vld [vmem:[%s1297] ss:$8 sm:$0xf]
    %v1300 = vperm.slane %v1298, 0
    %v1301 = vperm.slane %v1298, 1
    %v1302 = vperm.slane %v1298, 2
    %v1303 = vperm.slane %v1298, 3
    %1304 = vrot.lane.b32.xlu0 %v1300, 119
    %v1305 = vpop.permute.xlu0 %1304
    %1306 = vrot.lane.b32.xlu0 %v1301, 119
    %v1307 = vpop.permute.xlu0 %1306
    %1308 = vrot.lane.b32.xlu0 %v1302, 119
    %v1309 = vpop.permute.xlu0 %1308
    %1310 = vrot.lane.b32.xlu0 %v1303, 119
    %v1311 = vpop.permute.xlu0 %1310
    %v1312 = vsel %vm630, %v1305, %v1307
    %v1313 = vsel %vm630, %v1307, %v1309
    %v1314 = vsel %vm630, %v1309, %v1311
    %v1320 = vmul.f32 %v69, %v1305
    %v1321 = vmul.f32 %v70, %v1312
    %v1322 = vmul.f32 %v71, %v1313
    %v1323 = vmul.f32 %v72, %v1314
    %v1324 = vmul.f32 %v73, %v1311
    %1325 = vset.pattern.permute.xlu0 9
    %1326 = vperm.xlu0 %1325, %v68
    %v1327 = vpop.permute.xlu0 %1326
    %v1329 = vmul.f32 %v1327, %v1320
    %v1330 = vmul.f32 %v1327, %v1321
    %v1331 = vmul.f32 %v1327, %v1322
    %v1332 = vmul.f32 %v1327, %v1323
    %v1333 = vmul.f32 %v1327, %v1324
    %1339 = vrot.lane.b32.xlu0 %v1329, 64
    %v1340 = vpop.permute.xlu0 %1339
    %1341 = vrot.lane.b32.xlu0 %v1330, 64
    %v1342 = vpop.permute.xlu0 %1341
    %1343 = vrot.lane.b32.xlu0 %v1331, 64
    %v1344 = vpop.permute.xlu0 %1343
    %1345 = vrot.lane.b32.xlu0 %v1332, 64
    %v1346 = vpop.permute.xlu0 %1345
    %1347 = vrot.lane.b32.xlu0 %v1333, 64
    %v1348 = vpop.permute.xlu0 %1347
    %v1349 = vsel %vm592, %v1340, %v1342
    %v1350 = vsel %vm592, %v1342, %v1344
    %v1351 = vsel %vm592, %v1344, %v1346
    %v1352 = vsel %vm592, %v1346, %v1348
    %v1358 = vadd.f32 %v1216, %v1349
    %v1359 = vadd.f32 %v1217, %v1350
    %v1360 = vadd.f32 %v1218, %v1351
    %v1361 = vadd.f32 %v1219, %v1352
    %v1362 = vadd.f32 %v1220, %v1348
    %1363 = vset.pattern.permute.xlu0 36
    %1364 = vperm.xlu0 %1363, %v68
    %v1365 = vpop.permute.xlu0 %1364
    %v1367 = vmul.f32 %v1365, %v1320
    %v1368 = vmul.f32 %v1365, %v1321
    %v1369 = vmul.f32 %v1365, %v1322
    %v1370 = vmul.f32 %v1365, %v1323
    %v1371 = vmul.f32 %v1365, %v1324
    %1377 = vrot.lane.b32.xlu0 %v1367, 64
    %v1378 = vpop.permute.xlu0 %1377
    %1379 = vrot.lane.b32.xlu0 %v1368, 64
    %v1380 = vpop.permute.xlu0 %1379
    %1381 = vrot.lane.b32.xlu0 %v1369, 64
    %v1382 = vpop.permute.xlu0 %1381
    %1383 = vrot.lane.b32.xlu0 %v1370, 64
    %v1384 = vpop.permute.xlu0 %1383
    %1385 = vrot.lane.b32.xlu0 %v1371, 64
    %v1386 = vpop.permute.xlu0 %1385
    %v1387 = vsel %vm592, %v1378, %v1380
    %v1388 = vsel %vm592, %v1380, %v1382
    %v1389 = vsel %vm592, %v1382, %v1384
    %v1390 = vsel %vm592, %v1384, %v1386
    %v1396 = vadd.f32 %v1254, %v1387
    %v1397 = vadd.f32 %v1255, %v1388
    %v1398 = vadd.f32 %v1256, %v1389
    %v1399 = vadd.f32 %v1257, %v1390
    %v1400 = vadd.f32 %v1258, %v1386
    %1401 = vset.pattern.permute.xlu0 63
    %1402 = vperm.xlu0 %1401, %v68
    %v1403 = vpop.permute.xlu0 %1402
    %v1405 = vmul.f32 %v1403, %v1320
    %v1406 = vmul.f32 %v1403, %v1321
    %v1407 = vmul.f32 %v1403, %v1322
    %v1408 = vmul.f32 %v1403, %v1323
    %v1409 = vmul.f32 %v1403, %v1324
    %1415 = vrot.lane.b32.xlu0 %v1405, 64
    %v1416 = vpop.permute.xlu0 %1415
    %1417 = vrot.lane.b32.xlu0 %v1406, 64
    %v1418 = vpop.permute.xlu0 %1417
    %1419 = vrot.lane.b32.xlu0 %v1407, 64
    %v1420 = vpop.permute.xlu0 %1419
    %1421 = vrot.lane.b32.xlu0 %v1408, 64
    %v1422 = vpop.permute.xlu0 %1421
    %1423 = vrot.lane.b32.xlu0 %v1409, 64
    %v1424 = vpop.permute.xlu0 %1423
    %v1425 = vsel %vm592, %v1416, %v1418
    %v1426 = vsel %vm592, %v1418, %v1420
    %v1427 = vsel %vm592, %v1420, %v1422
    %v1428 = vsel %vm592, %v1422, %v1424
    %v1434 = vadd.f32 %v1292, %v1425
    %v1435 = vadd.f32 %v1293, %v1426
    %v1436 = vadd.f32 %v1294, %v1427
    %v1437 = vadd.f32 %v1295, %v1428
    %v1438 = vadd.f32 %v1296, %v1424
    %s1439 = scalar_lea.vmem [#allocation8], 34
    %v1440 = vld [vmem:[%s1439] ss:$8 sm:$0xf]
    %v1442 = vperm.slane %v1440, 0
    %v1443 = vperm.slane %v1440, 1
    %v1444 = vperm.slane %v1440, 2
    %v1445 = vperm.slane %v1440, 3
    %1446 = vrot.lane.b32.xlu0 %v1442, 120
    %v1447 = vpop.permute.xlu0 %1446
    %1448 = vrot.lane.b32.xlu0 %v1443, 120
    %v1449 = vpop.permute.xlu0 %1448
    %1450 = vrot.lane.b32.xlu0 %v1444, 120
    %v1451 = vpop.permute.xlu0 %1450
    %1452 = vrot.lane.b32.xlu0 %v1445, 120
    %v1453 = vpop.permute.xlu0 %1452
    %v1454 = vsel %vm486, %v1447, %v1449
    %v1455 = vsel %vm486, %v1449, %v1451
    %v1456 = vsel %vm486, %v1451, %v1453
    %v1462 = vmul.f32 %v69, %v1447
    %v1463 = vmul.f32 %v70, %v1454
    %v1464 = vmul.f32 %v71, %v1455
    %v1465 = vmul.f32 %v72, %v1456
    %v1466 = vmul.f32 %v73, %v1453
    %1467 = vset.pattern.permute.xlu0 10
    %1468 = vperm.xlu0 %1467, %v68
    %v1469 = vpop.permute.xlu0 %1468
    %v1471 = vmul.f32 %v1469, %v1462
    %v1472 = vmul.f32 %v1469, %v1463
    %v1473 = vmul.f32 %v1469, %v1464
    %v1474 = vmul.f32 %v1469, %v1465
    %v1475 = vmul.f32 %v1469, %v1466
    %1481 = vrot.lane.b32.xlu0 %v1471, 63
    %v1482 = vpop.permute.xlu0 %1481
    %1483 = vrot.lane.b32.xlu0 %v1472, 63
    %v1484 = vpop.permute.xlu0 %1483
    %1485 = vrot.lane.b32.xlu0 %v1473, 63
    %v1486 = vpop.permute.xlu0 %1485
    %1487 = vrot.lane.b32.xlu0 %v1474, 63
    %v1488 = vpop.permute.xlu0 %1487
    %1489 = vrot.lane.b32.xlu0 %v1475, 63
    %v1490 = vpop.permute.xlu0 %1489
    %v1491 = vsel %vm448, %v1482, %v1484
    %v1492 = vsel %vm448, %v1484, %v1486
    %v1493 = vsel %vm448, %v1486, %v1488
    %v1494 = vsel %vm448, %v1488, %v1490
    %v1500 = vadd.f32 %v1358, %v1491
    %v1501 = vadd.f32 %v1359, %v1492
    %v1502 = vadd.f32 %v1360, %v1493
    %v1503 = vadd.f32 %v1361, %v1494
    %v1504 = vadd.f32 %v1362, %v1490
    %1505 = vset.pattern.permute.xlu0 37
    %1506 = vperm.xlu0 %1505, %v68
    %v1507 = vpop.permute.xlu0 %1506
    %v1509 = vmul.f32 %v1507, %v1462
    %v1510 = vmul.f32 %v1507, %v1463
    %v1511 = vmul.f32 %v1507, %v1464
    %v1512 = vmul.f32 %v1507, %v1465
    %v1513 = vmul.f32 %v1507, %v1466
    %1519 = vrot.lane.b32.xlu0 %v1509, 63
    %v1520 = vpop.permute.xlu0 %1519
    %1521 = vrot.lane.b32.xlu0 %v1510, 63
    %v1522 = vpop.permute.xlu0 %1521
    %1523 = vrot.lane.b32.xlu0 %v1511, 63
    %v1524 = vpop.permute.xlu0 %1523
    %1525 = vrot.lane.b32.xlu0 %v1512, 63
    %v1526 = vpop.permute.xlu0 %1525
    %1527 = vrot.lane.b32.xlu0 %v1513, 63
    %v1528 = vpop.permute.xlu0 %1527
    %v1529 = vsel %vm448, %v1520, %v1522
    %v1530 = vsel %vm448, %v1522, %v1524
    %v1531 = vsel %vm448, %v1524, %v1526
    %v1532 = vsel %vm448, %v1526, %v1528
    %v1538 = vadd.f32 %v1396, %v1529
    %v1539 = vadd.f32 %v1397, %v1530
    %v1540 = vadd.f32 %v1398, %v1531
    %v1541 = vadd.f32 %v1399, %v1532
    %v1542 = vadd.f32 %v1400, %v1528
    %1543 = vset.pattern.permute.xlu0 64
    %1544 = vperm.xlu0 %1543, %v68
    %v1545 = vpop.permute.xlu0 %1544
    %v1547 = vmul.f32 %v1545, %v1462
    %v1548 = vmul.f32 %v1545, %v1463
    %v1549 = vmul.f32 %v1545, %v1464
    %v1550 = vmul.f32 %v1545, %v1465
    %v1551 = vmul.f32 %v1545, %v1466
    %1557 = vrot.lane.b32.xlu0 %v1547, 63
    %v1558 = vpop.permute.xlu0 %1557
    %1559 = vrot.lane.b32.xlu0 %v1548, 63
    %v1560 = vpop.permute.xlu0 %1559
    %1561 = vrot.lane.b32.xlu0 %v1549, 63
    %v1562 = vpop.permute.xlu0 %1561
    %1563 = vrot.lane.b32.xlu0 %v1550, 63
    %v1564 = vpop.permute.xlu0 %1563
    %1565 = vrot.lane.b32.xlu0 %v1551, 63
    %v1566 = vpop.permute.xlu0 %1565
    %v1567 = vsel %vm448, %v1558, %v1560
    %v1568 = vsel %vm448, %v1560, %v1562
    %v1569 = vsel %vm448, %v1562, %v1564
    %v1570 = vsel %vm448, %v1564, %v1566
    %v1576 = vadd.f32 %v1434, %v1567
    %v1577 = vadd.f32 %v1435, %v1568
    %v1578 = vadd.f32 %v1436, %v1569
    %v1579 = vadd.f32 %v1437, %v1570
    %v1580 = vadd.f32 %v1438, %v1566
    %s1581 = scalar_lea.vmem [#allocation8], 35
    %v1582 = vld [vmem:[%s1581] ss:$8 sm:$0xf]
    %v1584 = vperm.slane %v1582, 0
    %v1585 = vperm.slane %v1582, 1
    %v1586 = vperm.slane %v1582, 2
    %v1587 = vperm.slane %v1582, 3
    %1588 = vrot.lane.b32.xlu0 %v1584, 121
    %v1589 = vpop.permute.xlu0 %1588
    %1590 = vrot.lane.b32.xlu0 %v1585, 121
    %v1591 = vpop.permute.xlu0 %1590
    %1592 = vrot.lane.b32.xlu0 %v1586, 121
    %v1593 = vpop.permute.xlu0 %1592
    %1594 = vrot.lane.b32.xlu0 %v1587, 121
    %v1595 = vpop.permute.xlu0 %1594
    %vm1596 = vcmask 990208
    %v1597 = vsel %vm1596, %v1589, %v1591
    %v1598 = vsel %vm1596, %v1591, %v1593
    %v1599 = vsel %vm1596, %v1593, %v1595
    %v1605 = vmul.f32 %v69, %v1589
    %v1606 = vmul.f32 %v70, %v1597
    %v1607 = vmul.f32 %v71, %v1598
    %v1608 = vmul.f32 %v72, %v1599
    %v1609 = vmul.f32 %v73, %v1595
    %1610 = vset.pattern.permute.xlu0 11
    %1611 = vperm.xlu0 %1610, %v68
    %v1612 = vpop.permute.xlu0 %1611
    %v1614 = vmul.f32 %v1612, %v1605
    %v1615 = vmul.f32 %v1612, %v1606
    %v1616 = vmul.f32 %v1612, %v1607
    %v1617 = vmul.f32 %v1612, %v1608
    %v1618 = vmul.f32 %v1612, %v1609
    %1624 = vrot.lane.b32.xlu0 %v1614, 62
    %v1625 = vpop.permute.xlu0 %1624
    %1626 = vrot.lane.b32.xlu0 %v1615, 62
    %v1627 = vpop.permute.xlu0 %1626
    %1628 = vrot.lane.b32.xlu0 %v1616, 62
    %v1629 = vpop.permute.xlu0 %1628
    %1630 = vrot.lane.b32.xlu0 %v1617, 62
    %v1631 = vpop.permute.xlu0 %1630
    %1632 = vrot.lane.b32.xlu0 %v1618, 62
    %v1633 = vpop.permute.xlu0 %1632
    %vm1634 = vcmask 506880
    %v1635 = vsel %vm1634, %v1625, %v1627
    %v1636 = vsel %vm1634, %v1627, %v1629
    %v1637 = vsel %vm1634, %v1629, %v1631
    %v1638 = vsel %vm1634, %v1631, %v1633
    %v1644 = vadd.f32 %v1500, %v1635
    %v1645 = vadd.f32 %v1501, %v1636
    %v1646 = vadd.f32 %v1502, %v1637
    %v1647 = vadd.f32 %v1503, %v1638
    %v1648 = vadd.f32 %v1504, %v1633
    %1649 = vset.pattern.permute.xlu0 38
    %1650 = vperm.xlu0 %1649, %v68
    %v1651 = vpop.permute.xlu0 %1650
    %v1653 = vmul.f32 %v1651, %v1605
    %v1654 = vmul.f32 %v1651, %v1606
    %v1655 = vmul.f32 %v1651, %v1607
    %v1656 = vmul.f32 %v1651, %v1608
    %v1657 = vmul.f32 %v1651, %v1609
    %1663 = vrot.lane.b32.xlu0 %v1653, 62
    %v1664 = vpop.permute.xlu0 %1663
    %1665 = vrot.lane.b32.xlu0 %v1654, 62
    %v1666 = vpop.permute.xlu0 %1665
    %1667 = vrot.lane.b32.xlu0 %v1655, 62
    %v1668 = vpop.permute.xlu0 %1667
    %1669 = vrot.lane.b32.xlu0 %v1656, 62
    %v1670 = vpop.permute.xlu0 %1669
    %1671 = vrot.lane.b32.xlu0 %v1657, 62
    %v1672 = vpop.permute.xlu0 %1671
    %v1673 = vsel %vm1634, %v1664, %v1666
    %v1674 = vsel %vm1634, %v1666, %v1668
    %v1675 = vsel %vm1634, %v1668, %v1670
    %v1676 = vsel %vm1634, %v1670, %v1672
    %v1682 = vadd.f32 %v1538, %v1673
    %v1683 = vadd.f32 %v1539, %v1674
    %v1684 = vadd.f32 %v1540, %v1675
    %v1685 = vadd.f32 %v1541, %v1676
    %v1686 = vadd.f32 %v1542, %v1672
    %1687 = vset.pattern.permute.xlu0 65
    %1688 = vperm.xlu0 %1687, %v68
    %v1689 = vpop.permute.xlu0 %1688
    %v1691 = vmul.f32 %v1689, %v1605
    %v1692 = vmul.f32 %v1689, %v1606
    %v1693 = vmul.f32 %v1689, %v1607
    %v1694 = vmul.f32 %v1689, %v1608
    %v1695 = vmul.f32 %v1689, %v1609
    %1701 = vrot.lane.b32.xlu0 %v1691, 62
    %v1702 = vpop.permute.xlu0 %1701
    %1703 = vrot.lane.b32.xlu0 %v1692, 62
    %v1704 = vpop.permute.xlu0 %1703
    %1705 = vrot.lane.b32.xlu0 %v1693, 62
    %v1706 = vpop.permute.xlu0 %1705
    %1707 = vrot.lane.b32.xlu0 %v1694, 62
    %v1708 = vpop.permute.xlu0 %1707
    %1709 = vrot.lane.b32.xlu0 %v1695, 62
    %v1710 = vpop.permute.xlu0 %1709
    %v1711 = vsel %vm1634, %v1702, %v1704
    %v1712 = vsel %vm1634, %v1704, %v1706
    %v1713 = vsel %vm1634, %v1706, %v1708
    %v1714 = vsel %vm1634, %v1708, %v1710
    %v1720 = vadd.f32 %v1576, %v1711
    %v1721 = vadd.f32 %v1577, %v1712
    %v1722 = vadd.f32 %v1578, %v1713
    %v1723 = vadd.f32 %v1579, %v1714
    %v1724 = vadd.f32 %v1580, %v1710
    %s1725 = scalar_lea.vmem [#allocation8], 36
    %v1726 = vld [vmem:[%s1725] ss:$8 sm:$0xf]
    %v1728 = vperm.slane %v1726, 0
    %v1729 = vperm.slane %v1726, 1
    %v1730 = vperm.slane %v1726, 2
    %v1731 = vperm.slane %v1726, 3
    %1732 = vrot.lane.b32.xlu0 %v1728, 127
    %v1733 = vpop.permute.xlu0 %1732
    %1734 = vrot.lane.b32.xlu0 %v1729, 127
    %v1735 = vpop.permute.xlu0 %1734
    %1736 = vrot.lane.b32.xlu0 %v1730, 127
    %v1737 = vpop.permute.xlu0 %1736
    %1738 = vrot.lane.b32.xlu0 %v1731, 127
    %v1739 = vpop.permute.xlu0 %1738
    %v1740 = vsel %vm198, %v1733, %v1735
    %v1741 = vsel %vm198, %v1735, %v1737
    %v1742 = vsel %vm198, %v1737, %v1739
    %v1748 = vmul.f32 %v69, %v1733
    %v1749 = vmul.f32 %v70, %v1740
    %v1750 = vmul.f32 %v71, %v1741
    %v1751 = vmul.f32 %v72, %v1742
    %v1752 = vmul.f32 %v73, %v1739
    %1753 = vset.pattern.permute.xlu0 12
    %1754 = vperm.xlu0 %1753, %v68
    %v1755 = vpop.permute.xlu0 %1754
    %v1757 = vmul.f32 %v1755, %v1748
    %v1758 = vmul.f32 %v1755, %v1749
    %v1759 = vmul.f32 %v1755, %v1750
    %v1760 = vmul.f32 %v1755, %v1751
    %v1761 = vmul.f32 %v1755, %v1752
    %1767 = vrot.lane.b32.xlu0 %v1757, 56
    %v1768 = vpop.permute.xlu0 %1767
    %1769 = vrot.lane.b32.xlu0 %v1758, 56
    %v1770 = vpop.permute.xlu0 %1769
    %1771 = vrot.lane.b32.xlu0 %v1759, 56
    %v1772 = vpop.permute.xlu0 %1771
    %1773 = vrot.lane.b32.xlu0 %v1760, 56
    %v1774 = vpop.permute.xlu0 %1773
    %1775 = vrot.lane.b32.xlu0 %v1761, 56
    %v1776 = vpop.permute.xlu0 %1775
    %v1777 = vsel %vm160, %v1768, %v1770
    %v1778 = vsel %vm160, %v1770, %v1772
    %v1779 = vsel %vm160, %v1772, %v1774
    %v1780 = vsel %vm160, %v1774, %v1776
    %v1786 = vadd.f32 %v1644, %v1777
    %v1787 = vadd.f32 %v1645, %v1778
    %v1788 = vadd.f32 %v1646, %v1779
    %v1789 = vadd.f32 %v1647, %v1780
    %v1790 = vadd.f32 %v1648, %v1776
    %1791 = vset.pattern.permute.xlu0 39
    %1792 = vperm.xlu0 %1791, %v68
    %v1793 = vpop.permute.xlu0 %1792
    %v1795 = vmul.f32 %v1793, %v1748
    %v1796 = vmul.f32 %v1793, %v1749
    %v1797 = vmul.f32 %v1793, %v1750
    %v1798 = vmul.f32 %v1793, %v1751
    %v1799 = vmul.f32 %v1793, %v1752
    %1805 = vrot.lane.b32.xlu0 %v1795, 56
    %v1806 = vpop.permute.xlu0 %1805
    %1807 = vrot.lane.b32.xlu0 %v1796, 56
    %v1808 = vpop.permute.xlu0 %1807
    %1809 = vrot.lane.b32.xlu0 %v1797, 56
    %v1810 = vpop.permute.xlu0 %1809
    %1811 = vrot.lane.b32.xlu0 %v1798, 56
    %v1812 = vpop.permute.xlu0 %1811
    %1813 = vrot.lane.b32.xlu0 %v1799, 56
    %v1814 = vpop.permute.xlu0 %1813
    %v1815 = vsel %vm160, %v1806, %v1808
    %v1816 = vsel %vm160, %v1808, %v1810
    %v1817 = vsel %vm160, %v1810, %v1812
    %v1818 = vsel %vm160, %v1812, %v1814
    %v1824 = vadd.f32 %v1682, %v1815
    %v1825 = vadd.f32 %v1683, %v1816
    %v1826 = vadd.f32 %v1684, %v1817
    %v1827 = vadd.f32 %v1685, %v1818
    %v1828 = vadd.f32 %v1686, %v1814
    %1829 = vset.pattern.permute.xlu0 66
    %1830 = vperm.xlu0 %1829, %v68
    %v1831 = vpop.permute.xlu0 %1830
    %v1833 = vmul.f32 %v1831, %v1748
    %v1834 = vmul.f32 %v1831, %v1749
    %v1835 = vmul.f32 %v1831, %v1750
    %v1836 = vmul.f32 %v1831, %v1751
    %v1837 = vmul.f32 %v1831, %v1752
    %1843 = vrot.lane.b32.xlu0 %v1833, 56
    %v1844 = vpop.permute.xlu0 %1843
    %1845 = vrot.lane.b32.xlu0 %v1834, 56
    %v1846 = vpop.permute.xlu0 %1845
    %1847 = vrot.lane.b32.xlu0 %v1835, 56
    %v1848 = vpop.permute.xlu0 %1847
    %1849 = vrot.lane.b32.xlu0 %v1836, 56
    %v1850 = vpop.permute.xlu0 %1849
    %1851 = vrot.lane.b32.xlu0 %v1837, 56
    %v1852 = vpop.permute.xlu0 %1851
    %v1853 = vsel %vm160, %v1844, %v1846
    %v1854 = vsel %vm160, %v1846, %v1848
    %v1855 = vsel %vm160, %v1848, %v1850
    %v1856 = vsel %vm160, %v1850, %v1852
    %v1862 = vadd.f32 %v1720, %v1853
    %v1863 = vadd.f32 %v1721, %v1854
    %v1864 = vadd.f32 %v1722, %v1855
    %v1865 = vadd.f32 %v1723, %v1856
    %v1866 = vadd.f32 %v1724, %v1852
    %1867 = vset.pattern.permute.xlu0 13
    %1868 = vperm.xlu0 %1867, %v68
    %v1869 = vpop.permute.xlu0 %1868
    %v1871 = vmul.f32 %v1869, %v70
    %v1872 = vmul.f32 %v1869, %v71
    %v1873 = vmul.f32 %v1869, %v72
    %v1874 = vmul.f32 %v1869, %v73
    %1879 = vrot.lane.b32.xlu0 %v1871, 55
    %v1880 = vpop.permute.xlu0 %1879
    %1881 = vrot.lane.b32.xlu0 %v1872, 55
    %v1882 = vpop.permute.xlu0 %1881
    %1883 = vrot.lane.b32.xlu0 %v1873, 55
    %v1884 = vpop.permute.xlu0 %1883
    %1885 = vrot.lane.b32.xlu0 %v1874, 55
    %v1886 = vpop.permute.xlu0 %1885
    %v1887 = vsel %vm88, %v1880, %v1882
    %v1888 = vsel %vm88, %v1882, %v1884
    %v1889 = vsel %vm88, %v1884, %v1886
    %v1895 = vadd.f32 %v1786, %v1880
    %v1896 = vadd.f32 %v1787, %v1887
    %v1897 = vadd.f32 %v1788, %v1888
    %v1898 = vadd.f32 %v1789, %v1889
    %v1899 = vadd.f32 %v1790, %v1886
    %1900 = vset.pattern.permute.xlu0 40
    %1901 = vperm.xlu0 %1900, %v68
    %v1902 = vpop.permute.xlu0 %1901
    %v1904 = vmul.f32 %v1902, %v70
    %v1905 = vmul.f32 %v1902, %v71
    %v1906 = vmul.f32 %v1902, %v72
    %v1907 = vmul.f32 %v1902, %v73
    %1912 = vrot.lane.b32.xlu0 %v1904, 55
    %v1913 = vpop.permute.xlu0 %1912
    %1914 = vrot.lane.b32.xlu0 %v1905, 55
    %v1915 = vpop.permute.xlu0 %1914
    %1916 = vrot.lane.b32.xlu0 %v1906, 55
    %v1917 = vpop.permute.xlu0 %1916
    %1918 = vrot.lane.b32.xlu0 %v1907, 55
    %v1919 = vpop.permute.xlu0 %1918
    %v1920 = vsel %vm88, %v1913, %v1915
    %v1921 = vsel %vm88, %v1915, %v1917
    %v1922 = vsel %vm88, %v1917, %v1919
    %v1928 = vadd.f32 %v1824, %v1913
    %v1929 = vadd.f32 %v1825, %v1920
    %v1930 = vadd.f32 %v1826, %v1921
    %v1931 = vadd.f32 %v1827, %v1922
    %v1932 = vadd.f32 %v1828, %v1919
    %1933 = vset.pattern.permute.xlu0 67
    %1934 = vperm.xlu0 %1933, %v68
    %v1935 = vpop.permute.xlu0 %1934
    %v1937 = vmul.f32 %v1935, %v70
    %v1938 = vmul.f32 %v1935, %v71
    %v1939 = vmul.f32 %v1935, %v72
    %v1940 = vmul.f32 %v1935, %v73
    %1945 = vrot.lane.b32.xlu0 %v1937, 55
    %v1946 = vpop.permute.xlu0 %1945
    %1947 = vrot.lane.b32.xlu0 %v1938, 55
    %v1948 = vpop.permute.xlu0 %1947
    %1949 = vrot.lane.b32.xlu0 %v1939, 55
    %v1950 = vpop.permute.xlu0 %1949
    %1951 = vrot.lane.b32.xlu0 %v1940, 55
    %v1952 = vpop.permute.xlu0 %1951
    %v1953 = vsel %vm88, %v1946, %v1948
    %v1954 = vsel %vm88, %v1948, %v1950
    %v1955 = vsel %vm88, %v1950, %v1952
    %v1961 = vadd.f32 %v1862, %v1946
    %v1962 = vadd.f32 %v1863, %v1953
    %v1963 = vadd.f32 %v1864, %v1954
    %v1964 = vadd.f32 %v1865, %v1955
    %v1965 = vadd.f32 %v1866, %v1952
    %v1966 = vld [vmem:[#allocation2 + $0x8] sm:$0xff]
    %v1967 = vld [vmem:[#allocation2 + $0x10] sm:$0xff]
    %v1968 = vld [vmem:[#allocation2 + $0x18] sm:$0xff]
    %v1969 = vld [vmem:[#allocation2 + $0x20] sm:$0xff]
    %v1970 = vld [vmem:[#allocation2 + $0x28] sm:$0xff]
    %s1971 = scalar_lea.vmem [#allocation8], 38
    %v1972 = vld [vmem:[%s1971] ss:$8 sm:$0xf]
    %v1974 = vperm.slane %v1972, 0
    %v1975 = vperm.slane %v1972, 1
    %v1976 = vperm.slane %v1972, 2
    %v1977 = vperm.slane %v1972, 3
    %1978 = vrot.lane.b32.xlu0 %v1974, 1
    %v1979 = vpop.permute.xlu0 %1978
    %1980 = vrot.lane.b32.xlu0 %v1975, 1
    %v1981 = vpop.permute.xlu0 %1980
    %1982 = vrot.lane.b32.xlu0 %v1976, 1
    %v1983 = vpop.permute.xlu0 %1982
    %1984 = vrot.lane.b32.xlu0 %v1977, 1
    %v1985 = vpop.permute.xlu0 %1984
    %vm1986 = vcmask 7168
    %v1987 = vsel %vm1986, %v1979, %v1981
    %v1988 = vsel %vm1986, %v1981, %v1983
    %v1989 = vsel %vm1986, %v1983, %v1985
    %v1995 = vmul.f32 %v1966, %v1979
    %v1996 = vmul.f32 %v1967, %v1987
    %v1997 = vmul.f32 %v1968, %v1988
    %v1998 = vmul.f32 %v1969, %v1989
    %v1999 = vmul.f32 %v1970, %v1985
    %2000 = vset.pattern.permute.xlu0 14
    %2001 = vperm.xlu0 %2000, %v68
    %v2002 = vpop.permute.xlu0 %2001
    %v2004 = vmul.f32 %v2002, %v1995
    %v2005 = vmul.f32 %v2002, %v1996
    %v2006 = vmul.f32 %v2002, %v1997
    %v2007 = vmul.f32 %v2002, %v1998
    %v2008 = vmul.f32 %v2002, %v1999
    %2014 = vrot.lane.b32.xlu0 %v2004, 54
    %v2015 = vpop.permute.xlu0 %2014
    %2016 = vrot.lane.b32.xlu0 %v2005, 54
    %v2017 = vpop.permute.xlu0 %2016
    %2018 = vrot.lane.b32.xlu0 %v2006, 54
    %v2019 = vpop.permute.xlu0 %2018
    %2020 = vrot.lane.b32.xlu0 %v2007, 54
    %v2021 = vpop.permute.xlu0 %2020
    %2022 = vrot.lane.b32.xlu0 %v2008, 54
    %v2023 = vpop.permute.xlu0 %2022
    %vm2024 = vcmask 441344
    %v2025 = vsel %vm2024, %v2015, %v2017
    %v2026 = vsel %vm2024, %v2017, %v2019
    %v2027 = vsel %vm2024, %v2019, %v2021
    %v2028 = vsel %vm2024, %v2021, %v2023
    %v2034 = vadd.f32 %v1895, %v2015
    %v2035 = vadd.f32 %v1896, %v2025
    %v2036 = vadd.f32 %v1897, %v2026
    %v2037 = vadd.f32 %v1898, %v2027
    %v2038 = vadd.f32 %v1899, %v2028
    %2039 = vset.pattern.permute.xlu0 41
    %2040 = vperm.xlu0 %2039, %v68
    %v2041 = vpop.permute.xlu0 %2040
    %v2043 = vmul.f32 %v2041, %v1995
    %v2044 = vmul.f32 %v2041, %v1996
    %v2045 = vmul.f32 %v2041, %v1997
    %v2046 = vmul.f32 %v2041, %v1998
    %v2047 = vmul.f32 %v2041, %v1999
    %2053 = vrot.lane.b32.xlu0 %v2043, 54
    %v2054 = vpop.permute.xlu0 %2053
    %2055 = vrot.lane.b32.xlu0 %v2044, 54
    %v2056 = vpop.permute.xlu0 %2055
    %2057 = vrot.lane.b32.xlu0 %v2045, 54
    %v2058 = vpop.permute.xlu0 %2057
    %2059 = vrot.lane.b32.xlu0 %v2046, 54
    %v2060 = vpop.permute.xlu0 %2059
    %2061 = vrot.lane.b32.xlu0 %v2047, 54
    %v2062 = vpop.permute.xlu0 %2061
    %v2063 = vsel %vm2024, %v2054, %v2056
    %v2064 = vsel %vm2024, %v2056, %v2058
    %v2065 = vsel %vm2024, %v2058, %v2060
    %v2066 = vsel %vm2024, %v2060, %v2062
    %v2072 = vadd.f32 %v1928, %v2054
    %v2073 = vadd.f32 %v1929, %v2063
    %v2074 = vadd.f32 %v1930, %v2064
    %v2075 = vadd.f32 %v1931, %v2065
    %v2076 = vadd.f32 %v1932, %v2066
    %2077 = vset.pattern.permute.xlu0 68
    %2078 = vperm.xlu0 %2077, %v68
    %v2079 = vpop.permute.xlu0 %2078
    %v2081 = vmul.f32 %v2079, %v1995
    %v2082 = vmul.f32 %v2079, %v1996
    %v2083 = vmul.f32 %v2079, %v1997
    %v2084 = vmul.f32 %v2079, %v1998
    %v2085 = vmul.f32 %v2079, %v1999
    %2091 = vrot.lane.b32.xlu0 %v2081, 54
    %v2092 = vpop.permute.xlu0 %2091
    %2093 = vrot.lane.b32.xlu0 %v2082, 54
    %v2094 = vpop.permute.xlu0 %2093
    %2095 = vrot.lane.b32.xlu0 %v2083, 54
    %v2096 = vpop.permute.xlu0 %2095
    %2097 = vrot.lane.b32.xlu0 %v2084, 54
    %v2098 = vpop.permute.xlu0 %2097
    %2099 = vrot.lane.b32.xlu0 %v2085, 54
    %v2100 = vpop.permute.xlu0 %2099
    %v2101 = vsel %vm2024, %v2092, %v2094
    %v2102 = vsel %vm2024, %v2094, %v2096
    %v2103 = vsel %vm2024, %v2096, %v2098
    %v2104 = vsel %vm2024, %v2098, %v2100
    %v2110 = vadd.f32 %v1961, %v2092
    %v2111 = vadd.f32 %v1962, %v2101
    %v2112 = vadd.f32 %v1963, %v2102
    %v2113 = vadd.f32 %v1964, %v2103
    %v2114 = vadd.f32 %v1965, %v2104
    %s2115 = scalar_lea.vmem [#allocation8], 39
    %v2116 = vld [vmem:[%s2115] ss:$8 sm:$0xf]
    %v2118 = vperm.slane %v2116, 0
    %v2119 = vperm.slane %v2116, 1
    %v2120 = vperm.slane %v2116, 2
    %v2121 = vperm.slane %v2116, 3
    %2122 = vrot.lane.b32.xlu0 %v2118, 7
    %v2123 = vpop.permute.xlu0 %2122
    %2124 = vrot.lane.b32.xlu0 %v2119, 7
    %v2125 = vpop.permute.xlu0 %2124
    %2126 = vrot.lane.b32.xlu0 %v2120, 7
    %v2127 = vpop.permute.xlu0 %2126
    %2128 = vrot.lane.b32.xlu0 %v2121, 7
    %v2129 = vpop.permute.xlu0 %2128
    %vm2130 = vcmask 56320
    %v2131 = vsel %vm2130, %v2123, %v2125
    %v2132 = vsel %vm2130, %v2125, %v2127
    %v2133 = vsel %vm2130, %v2127, %v2129
    %v2139 = vmul.f32 %v1966, %v2123
    %v2140 = vmul.f32 %v1967, %v2131
    %v2141 = vmul.f32 %v1968, %v2132
    %v2142 = vmul.f32 %v1969, %v2133
    %v2143 = vmul.f32 %v1970, %v2129
    %2144 = vset.pattern.permute.xlu0 15
    %2145 = vperm.xlu0 %2144, %v68
    %v2146 = vpop.permute.xlu0 %2145
    %v2148 = vmul.f32 %v2146, %v2139
    %v2149 = vmul.f32 %v2146, %v2140
    %v2150 = vmul.f32 %v2146, %v2141
    %v2151 = vmul.f32 %v2146, %v2142
    %v2152 = vmul.f32 %v2146, %v2143
    %2158 = vrot.lane.b32.xlu0 %v2148, 48
    %v2159 = vpop.permute.xlu0 %2158
    %2160 = vrot.lane.b32.xlu0 %v2149, 48
    %v2161 = vpop.permute.xlu0 %2160
    %2162 = vrot.lane.b32.xlu0 %v2150, 48
    %v2163 = vpop.permute.xlu0 %2162
    %2164 = vrot.lane.b32.xlu0 %v2151, 48
    %v2165 = vpop.permute.xlu0 %2164
    %2166 = vrot.lane.b32.xlu0 %v2152, 48
    %v2167 = vpop.permute.xlu0 %2166
    %vm2168 = vcmask 392192
    %v2169 = vsel %vm2168, %v2159, %v2161
    %v2170 = vsel %vm2168, %v2161, %v2163
    %v2171 = vsel %vm2168, %v2163, %v2165
    %v2172 = vsel %vm2168, %v2165, %v2167
    %v2178 = vadd.f32 %v2034, %v2159
    %v2179 = vadd.f32 %v2035, %v2169
    %v2180 = vadd.f32 %v2036, %v2170
    %v2181 = vadd.f32 %v2037, %v2171
    %v2182 = vadd.f32 %v2038, %v2172
    %2183 = vset.pattern.permute.xlu0 42
    %2184 = vperm.xlu0 %2183, %v68
    %v2185 = vpop.permute.xlu0 %2184
    %v2187 = vmul.f32 %v2185, %v2139
    %v2188 = vmul.f32 %v2185, %v2140
    %v2189 = vmul.f32 %v2185, %v2141
    %v2190 = vmul.f32 %v2185, %v2142
    %v2191 = vmul.f32 %v2185, %v2143
    %2197 = vrot.lane.b32.xlu0 %v2187, 48
    %v2198 = vpop.permute.xlu0 %2197
    %2199 = vrot.lane.b32.xlu0 %v2188, 48
    %v2200 = vpop.permute.xlu0 %2199
    %2201 = vrot.lane.b32.xlu0 %v2189, 48
    %v2202 = vpop.permute.xlu0 %2201
    %2203 = vrot.lane.b32.xlu0 %v2190, 48
    %v2204 = vpop.permute.xlu0 %2203
    %2205 = vrot.lane.b32.xlu0 %v2191, 48
    %v2206 = vpop.permute.xlu0 %2205
    %v2207 = vsel %vm2168, %v2198, %v2200
    %v2208 = vsel %vm2168, %v2200, %v2202
    %v2209 = vsel %vm2168, %v2202, %v2204
    %v2210 = vsel %vm2168, %v2204, %v2206
    %v2216 = vadd.f32 %v2072, %v2198
    %v2217 = vadd.f32 %v2073, %v2207
    %v2218 = vadd.f32 %v2074, %v2208
    %v2219 = vadd.f32 %v2075, %v2209
    %v2220 = vadd.f32 %v2076, %v2210
    %2221 = vset.pattern.permute.xlu0 69
    %2222 = vperm.xlu0 %2221, %v68
    %v2223 = vpop.permute.xlu0 %2222
    %v2225 = vmul.f32 %v2223, %v2139
    %v2226 = vmul.f32 %v2223, %v2140
    %v2227 = vmul.f32 %v2223, %v2141
    %v2228 = vmul.f32 %v2223, %v2142
    %v2229 = vmul.f32 %v2223, %v2143
    %2235 = vrot.lane.b32.xlu0 %v2225, 48
    %v2236 = vpop.permute.xlu0 %2235
    %2237 = vrot.lane.b32.xlu0 %v2226, 48
    %v2238 = vpop.permute.xlu0 %2237
    %2239 = vrot.lane.b32.xlu0 %v2227, 48
    %v2240 = vpop.permute.xlu0 %2239
    %2241 = vrot.lane.b32.xlu0 %v2228, 48
    %v2242 = vpop.permute.xlu0 %2241
    %2243 = vrot.lane.b32.xlu0 %v2229, 48
    %v2244 = vpop.permute.xlu0 %2243
    %v2245 = vsel %vm2168, %v2236, %v2238
    %v2246 = vsel %vm2168, %v2238, %v2240
    %v2247 = vsel %vm2168, %v2240, %v2242
    %v2248 = vsel %vm2168, %v2242, %v2244
    %v2254 = vadd.f32 %v2110, %v2236
    %v2255 = vadd.f32 %v2111, %v2245
    %v2256 = vadd.f32 %v2112, %v2246
    %v2257 = vadd.f32 %v2113, %v2247
    %v2258 = vadd.f32 %v2114, %v2248
    %s2259 = scalar_lea.vmem [#allocation8], 64
    %v2260 = vld [vmem:[%s2259] ss:$8 sm:$0xf]
    %v2262 = vperm.slane %v2260, 0
    %v2263 = vperm.slane %v2260, 1
    %v2264 = vperm.slane %v2260, 2
    %v2265 = vperm.slane %v2260, 3
    %2266 = vrot.lane.b32.xlu0 %v2262, 8
    %v2267 = vpop.permute.xlu0 %2266
    %2268 = vrot.lane.b32.xlu0 %v2263, 8
    %v2269 = vpop.permute.xlu0 %2268
    %2270 = vrot.lane.b32.xlu0 %v2264, 8
    %v2271 = vpop.permute.xlu0 %2270
    %2272 = vrot.lane.b32.xlu0 %v2265, 8
    %v2273 = vpop.permute.xlu0 %2272
    %vm2274 = vcmask 64512
    %v2275 = vsel %vm2274, %v2267, %v2269
    %v2276 = vsel %vm2274, %v2269, %v2271
    %v2277 = vsel %vm2274, %v2271, %v2273
    %v2283 = vmul.f32 %v1966, %v2267
    %v2284 = vmul.f32 %v1967, %v2275
    %v2285 = vmul.f32 %v1968, %v2276
    %v2286 = vmul.f32 %v1969, %v2277
    %v2287 = vmul.f32 %v1970, %v2273
    %2288 = vset.pattern.permute.xlu0 16
    %2289 = vperm.xlu0 %2288, %v68
    %v2290 = vpop.permute.xlu0 %2289
    %v2292 = vmul.f32 %v2290, %v2283
    %v2293 = vmul.f32 %v2290, %v2284
    %v2294 = vmul.f32 %v2290, %v2285
    %v2295 = vmul.f32 %v2290, %v2286
    %v2296 = vmul.f32 %v2290, %v2287
    %2302 = vrot.lane.b32.xlu0 %v2292, 47
    %v2303 = vpop.permute.xlu0 %2302
    %2304 = vrot.lane.b32.xlu0 %v2293, 47
    %v2305 = vpop.permute.xlu0 %2304
    %2306 = vrot.lane.b32.xlu0 %v2294, 47
    %v2307 = vpop.permute.xlu0 %2306
    %2308 = vrot.lane.b32.xlu0 %v2295, 47
    %v2309 = vpop.permute.xlu0 %2308
    %2310 = vrot.lane.b32.xlu0 %v2296, 47
    %v2311 = vpop.permute.xlu0 %2310
    %vm2312 = vcmask 384000
    %v2313 = vsel %vm2312, %v2303, %v2305
    %v2314 = vsel %vm2312, %v2305, %v2307
    %v2315 = vsel %vm2312, %v2307, %v2309
    %v2316 = vsel %vm2312, %v2309, %v2311
    %v2322 = vadd.f32 %v2178, %v2303
    %v2323 = vadd.f32 %v2179, %v2313
    %v2324 = vadd.f32 %v2180, %v2314
    %v2325 = vadd.f32 %v2181, %v2315
    %v2326 = vadd.f32 %v2182, %v2316
    %2327 = vset.pattern.permute.xlu0 43
    %2328 = vperm.xlu0 %2327, %v68
    %v2329 = vpop.permute.xlu0 %2328
    %v2331 = vmul.f32 %v2329, %v2283
    %v2332 = vmul.f32 %v2329, %v2284
    %v2333 = vmul.f32 %v2329, %v2285
    %v2334 = vmul.f32 %v2329, %v2286
    %v2335 = vmul.f32 %v2329, %v2287
    %2341 = vrot.lane.b32.xlu0 %v2331, 47
    %v2342 = vpop.permute.xlu0 %2341
    %2343 = vrot.lane.b32.xlu0 %v2332, 47
    %v2344 = vpop.permute.xlu0 %2343
    %2345 = vrot.lane.b32.xlu0 %v2333, 47
    %v2346 = vpop.permute.xlu0 %2345
    %2347 = vrot.lane.b32.xlu0 %v2334, 47
    %v2348 = vpop.permute.xlu0 %2347
    %2349 = vrot.lane.b32.xlu0 %v2335, 47
    %v2350 = vpop.permute.xlu0 %2349
    %v2351 = vsel %vm2312, %v2342, %v2344
    %v2352 = vsel %vm2312, %v2344, %v2346
    %v2353 = vsel %vm2312, %v2346, %v2348
    %v2354 = vsel %vm2312, %v2348, %v2350
    %v2360 = vadd.f32 %v2216, %v2342
    %v2361 = vadd.f32 %v2217, %v2351
    %v2362 = vadd.f32 %v2218, %v2352
    %v2363 = vadd.f32 %v2219, %v2353
    %v2364 = vadd.f32 %v2220, %v2354
    %2365 = vset.pattern.permute.xlu0 70
    %2366 = vperm.xlu0 %2365, %v68
    %v2367 = vpop.permute.xlu0 %2366
    %v2369 = vmul.f32 %v2367, %v2283
    %v2370 = vmul.f32 %v2367, %v2284
    %v2371 = vmul.f32 %v2367, %v2285
    %v2372 = vmul.f32 %v2367, %v2286
    %v2373 = vmul.f32 %v2367, %v2287
    %2379 = vrot.lane.b32.xlu0 %v2369, 47
    %v2380 = vpop.permute.xlu0 %2379
    %2381 = vrot.lane.b32.xlu0 %v2370, 47
    %v2382 = vpop.permute.xlu0 %2381
    %2383 = vrot.lane.b32.xlu0 %v2371, 47
    %v2384 = vpop.permute.xlu0 %2383
    %2385 = vrot.lane.b32.xlu0 %v2372, 47
    %v2386 = vpop.permute.xlu0 %2385
    %2387 = vrot.lane.b32.xlu0 %v2373, 47
    %v2388 = vpop.permute.xlu0 %2387
    %v2389 = vsel %vm2312, %v2380, %v2382
    %v2390 = vsel %vm2312, %v2382, %v2384
    %v2391 = vsel %vm2312, %v2384, %v2386
    %v2392 = vsel %vm2312, %v2386, %v2388
    %v2398 = vadd.f32 %v2254, %v2380
    %v2399 = vadd.f32 %v2255, %v2389
    %v2400 = vadd.f32 %v2256, %v2390
    %v2401 = vadd.f32 %v2257, %v2391
    %v2402 = vadd.f32 %v2258, %v2392
    %s2403 = scalar_lea.vmem [#allocation8], 65
    %v2404 = vld [vmem:[%s2403] ss:$8 sm:$0xf]
    %v2406 = vperm.slane %v2404, 0
    %v2407 = vperm.slane %v2404, 1
    %v2408 = vperm.slane %v2404, 2
    %v2409 = vperm.slane %v2404, 3
    %2410 = vrot.lane.b32.xlu0 %v2406, 9
    %v2411 = vpop.permute.xlu0 %2410
    %2412 = vrot.lane.b32.xlu0 %v2407, 9
    %v2413 = vpop.permute.xlu0 %2412
    %2414 = vrot.lane.b32.xlu0 %v2408, 9
    %v2415 = vpop.permute.xlu0 %2414
    %2416 = vrot.lane.b32.xlu0 %v2409, 9
    %v2417 = vpop.permute.xlu0 %2416
    %vm2418 = vcmask 72704
    %v2419 = vsel %vm2418, %v2411, %v2413
    %v2420 = vsel %vm2418, %v2413, %v2415
    %v2421 = vsel %vm2418, %v2415, %v2417
    %v2427 = vmul.f32 %v1966, %v2411
    %v2428 = vmul.f32 %v1967, %v2419
    %v2429 = vmul.f32 %v1968, %v2420
    %v2430 = vmul.f32 %v1969, %v2421
    %v2431 = vmul.f32 %v1970, %v2417
    %2432 = vset.pattern.permute.xlu0 17
    %2433 = vperm.xlu0 %2432, %v68
    %v2434 = vpop.permute.xlu0 %2433
    %v2436 = vmul.f32 %v2434, %v2427
    %v2437 = vmul.f32 %v2434, %v2428
    %v2438 = vmul.f32 %v2434, %v2429
    %v2439 = vmul.f32 %v2434, %v2430
    %v2440 = vmul.f32 %v2434, %v2431
    %2446 = vrot.lane.b32.xlu0 %v2436, 46
    %v2447 = vpop.permute.xlu0 %2446
    %2448 = vrot.lane.b32.xlu0 %v2437, 46
    %v2449 = vpop.permute.xlu0 %2448
    %2450 = vrot.lane.b32.xlu0 %v2438, 46
    %v2451 = vpop.permute.xlu0 %2450
    %2452 = vrot.lane.b32.xlu0 %v2439, 46
    %v2453 = vpop.permute.xlu0 %2452
    %2454 = vrot.lane.b32.xlu0 %v2440, 46
    %v2455 = vpop.permute.xlu0 %2454
    %vm2456 = vcmask 375808
    %v2457 = vsel %vm2456, %v2447, %v2449
    %v2458 = vsel %vm2456, %v2449, %v2451
    %v2459 = vsel %vm2456, %v2451, %v2453
    %v2460 = vsel %vm2456, %v2453, %v2455
    %v2466 = vadd.f32 %v2322, %v2447
    %v2467 = vadd.f32 %v2323, %v2457
    %v2468 = vadd.f32 %v2324, %v2458
    %v2469 = vadd.f32 %v2325, %v2459
    %v2470 = vadd.f32 %v2326, %v2460
    %2471 = vset.pattern.permute.xlu0 44
    %2472 = vperm.xlu0 %2471, %v68
    %v2473 = vpop.permute.xlu0 %2472
    %v2475 = vmul.f32 %v2473, %v2427
    %v2476 = vmul.f32 %v2473, %v2428
    %v2477 = vmul.f32 %v2473, %v2429
    %v2478 = vmul.f32 %v2473, %v2430
    %v2479 = vmul.f32 %v2473, %v2431
    %2485 = vrot.lane.b32.xlu0 %v2475, 46
    %v2486 = vpop.permute.xlu0 %2485
    %2487 = vrot.lane.b32.xlu0 %v2476, 46
    %v2488 = vpop.permute.xlu0 %2487
    %2489 = vrot.lane.b32.xlu0 %v2477, 46
    %v2490 = vpop.permute.xlu0 %2489
    %2491 = vrot.lane.b32.xlu0 %v2478, 46
    %v2492 = vpop.permute.xlu0 %2491
    %2493 = vrot.lane.b32.xlu0 %v2479, 46
    %v2494 = vpop.permute.xlu0 %2493
    %v2495 = vsel %vm2456, %v2486, %v2488
    %v2496 = vsel %vm2456, %v2488, %v2490
    %v2497 = vsel %vm2456, %v2490, %v2492
    %v2498 = vsel %vm2456, %v2492, %v2494
    %v2504 = vadd.f32 %v2360, %v2486
    %v2505 = vadd.f32 %v2361, %v2495
    %v2506 = vadd.f32 %v2362, %v2496
    %v2507 = vadd.f32 %v2363, %v2497
    %v2508 = vadd.f32 %v2364, %v2498
    %2509 = vset.pattern.permute.xlu0 71
    %2510 = vperm.xlu0 %2509, %v68
    %v2511 = vpop.permute.xlu0 %2510
    %v2513 = vmul.f32 %v2511, %v2427
    %v2514 = vmul.f32 %v2511, %v2428
    %v2515 = vmul.f32 %v2511, %v2429
    %v2516 = vmul.f32 %v2511, %v2430
    %v2517 = vmul.f32 %v2511, %v2431
    %2523 = vrot.lane.b32.xlu0 %v2513, 46
    %v2524 = vpop.permute.xlu0 %2523
    %2525 = vrot.lane.b32.xlu0 %v2514, 46
    %v2526 = vpop.permute.xlu0 %2525
    %2527 = vrot.lane.b32.xlu0 %v2515, 46
    %v2528 = vpop.permute.xlu0 %2527
    %2529 = vrot.lane.b32.xlu0 %v2516, 46
    %v2530 = vpop.permute.xlu0 %2529
    %2531 = vrot.lane.b32.xlu0 %v2517, 46
    %v2532 = vpop.permute.xlu0 %2531
    %v2533 = vsel %vm2456, %v2524, %v2526
    %v2534 = vsel %vm2456, %v2526, %v2528
    %v2535 = vsel %vm2456, %v2528, %v2530
    %v2536 = vsel %vm2456, %v2530, %v2532
    %v2542 = vadd.f32 %v2398, %v2524
    %v2543 = vadd.f32 %v2399, %v2533
    %v2544 = vadd.f32 %v2400, %v2534
    %v2545 = vadd.f32 %v2401, %v2535
    %v2546 = vadd.f32 %v2402, %v2536
    %s2547 = scalar_lea.vmem [#allocation8], 66
    %v2548 = vld [vmem:[%s2547] ss:$8 sm:$0xf]
    %v2550 = vperm.slane %v2548, 0
    %v2551 = vperm.slane %v2548, 1
    %v2552 = vperm.slane %v2548, 2
    %v2553 = vperm.slane %v2548, 3
    %2554 = vrot.lane.b32.xlu0 %v2550, 55
    %v2555 = vpop.permute.xlu0 %2554
    %2556 = vrot.lane.b32.xlu0 %v2551, 55
    %v2557 = vpop.permute.xlu0 %2556
    %2558 = vrot.lane.b32.xlu0 %v2552, 55
    %v2559 = vpop.permute.xlu0 %2558
    %2560 = vrot.lane.b32.xlu0 %v2553, 55
    %v2561 = vpop.permute.xlu0 %2560
    %v2562 = vsel %vm88, %v2555, %v2557
    %v2563 = vsel %vm88, %v2557, %v2559
    %v2564 = vsel %vm88, %v2559, %v2561
    %v2570 = vmul.f32 %v1966, %v2555
    %v2571 = vmul.f32 %v1967, %v2562
    %v2572 = vmul.f32 %v1968, %v2563
    %v2573 = vmul.f32 %v1969, %v2564
    %v2574 = vmul.f32 %v1970, %v2561
    %2575 = vset.pattern.permute.xlu0 18
    %2576 = vperm.xlu0 %2575, %v68
    %v2577 = vpop.permute.xlu0 %2576
    %v2579 = vmul.f32 %v2577, %v2570
    %v2580 = vmul.f32 %v2577, %v2571
    %v2581 = vmul.f32 %v2577, %v2572
    %v2582 = vmul.f32 %v2577, %v2573
    %v2583 = vmul.f32 %v2577, %v2574
    %v2584 = vadd.f32 %v2466, %v2579
    %v2585 = vadd.f32 %v2467, %v2580
    %v2586 = vadd.f32 %v2468, %v2581
    %v2587 = vadd.f32 %v2469, %v2582
    %v2588 = vadd.f32 %v2470, %v2583
    %2589 = vset.pattern.permute.xlu0 45
    %2590 = vperm.xlu0 %2589, %v68
    %v2591 = vpop.permute.xlu0 %2590
    %v2593 = vmul.f32 %v2591, %v2570
    %v2594 = vmul.f32 %v2591, %v2571
    %v2595 = vmul.f32 %v2591, %v2572
    %v2596 = vmul.f32 %v2591, %v2573
    %v2597 = vmul.f32 %v2591, %v2574
    %v2598 = vadd.f32 %v2504, %v2593
    %v2599 = vadd.f32 %v2505, %v2594
    %v2600 = vadd.f32 %v2506, %v2595
    %v2601 = vadd.f32 %v2507, %v2596
    %v2602 = vadd.f32 %v2508, %v2597
    %2603 = vset.pattern.permute.xlu0 72
    %2604 = vperm.xlu0 %2603, %v68
    %v2605 = vpop.permute.xlu0 %2604
    %v2607 = vmul.f32 %v2605, %v2570
    %v2608 = vmul.f32 %v2605, %v2571
    %v2609 = vmul.f32 %v2605, %v2572
    %v2610 = vmul.f32 %v2605, %v2573
    %v2611 = vmul.f32 %v2605, %v2574
    %v2612 = vadd.f32 %v2542, %v2607
    %v2613 = vadd.f32 %v2543, %v2608
    %v2614 = vadd.f32 %v2544, %v2609
    %v2615 = vadd.f32 %v2545, %v2610
    %v2616 = vadd.f32 %v2546, %v2611
    %s2617 = scalar_lea.vmem [#allocation8], 67
    %v2618 = vld [vmem:[%s2617] ss:$8 sm:$0xf]
    %v2620 = vperm.slane %v2618, 0
    %v2621 = vperm.slane %v2618, 1
    %v2622 = vperm.slane %v2618, 2
    %v2623 = vperm.slane %v2618, 3
    %2624 = vrot.lane.b32.xlu0 %v2620, 56
    %v2625 = vpop.permute.xlu0 %2624
    %2626 = vrot.lane.b32.xlu0 %v2621, 56
    %v2627 = vpop.permute.xlu0 %2626
    %2628 = vrot.lane.b32.xlu0 %v2622, 56
    %v2629 = vpop.permute.xlu0 %2628
    %2630 = vrot.lane.b32.xlu0 %v2623, 56
    %v2631 = vpop.permute.xlu0 %2630
    %v2632 = vsel %vm160, %v2625, %v2627
    %v2633 = vsel %vm160, %v2627, %v2629
    %v2634 = vsel %vm160, %v2629, %v2631
    %v2640 = vmul.f32 %v1966, %v2625
    %v2641 = vmul.f32 %v1967, %v2632
    %v2642 = vmul.f32 %v1968, %v2633
    %v2643 = vmul.f32 %v1969, %v2634
    %v2644 = vmul.f32 %v1970, %v2631
    %2645 = vset.pattern.permute.xlu0 19
    %2646 = vperm.xlu0 %2645, %v68
    %v2647 = vpop.permute.xlu0 %2646
    %v2649 = vmul.f32 %v2647, %v2640
    %v2650 = vmul.f32 %v2647, %v2641
    %v2651 = vmul.f32 %v2647, %v2642
    %v2652 = vmul.f32 %v2647, %v2643
    %v2653 = vmul.f32 %v2647, %v2644
    %2659 = vrot.lane.b32.xlu0 %v2649, 127
    %v2660 = vpop.permute.xlu0 %2659
    %2661 = vrot.lane.b32.xlu0 %v2650, 127
    %v2662 = vpop.permute.xlu0 %2661
    %2663 = vrot.lane.b32.xlu0 %v2651, 127
    %v2664 = vpop.permute.xlu0 %2663
    %2665 = vrot.lane.b32.xlu0 %v2652, 127
    %v2666 = vpop.permute.xlu0 %2665
    %2667 = vrot.lane.b32.xlu0 %v2653, 127
    %v2668 = vpop.permute.xlu0 %2667
    %v2669 = vsel %vm198, %v2660, %v2662
    %v2670 = vsel %vm198, %v2662, %v2664
    %v2671 = vsel %vm198, %v2664, %v2666
    %v2672 = vsel %vm198, %v2666, %v2668
    %v2678 = vadd.f32 %v2584, %v2669
    %v2679 = vadd.f32 %v2585, %v2670
    %v2680 = vadd.f32 %v2586, %v2671
    %v2681 = vadd.f32 %v2587, %v2672
    %v2682 = vadd.f32 %v2588, %v2668
    %2683 = vset.pattern.permute.xlu0 46
    %2684 = vperm.xlu0 %2683, %v68
    %v2685 = vpop.permute.xlu0 %2684
    %v2687 = vmul.f32 %v2685, %v2640
    %v2688 = vmul.f32 %v2685, %v2641
    %v2689 = vmul.f32 %v2685, %v2642
    %v2690 = vmul.f32 %v2685, %v2643
    %v2691 = vmul.f32 %v2685, %v2644
    %2697 = vrot.lane.b32.xlu0 %v2687, 127
    %v2698 = vpop.permute.xlu0 %2697
    %2699 = vrot.lane.b32.xlu0 %v2688, 127
    %v2700 = vpop.permute.xlu0 %2699
    %2701 = vrot.lane.b32.xlu0 %v2689, 127
    %v2702 = vpop.permute.xlu0 %2701
    %2703 = vrot.lane.b32.xlu0 %v2690, 127
    %v2704 = vpop.permute.xlu0 %2703
    %2705 = vrot.lane.b32.xlu0 %v2691, 127
    %v2706 = vpop.permute.xlu0 %2705
    %v2707 = vsel %vm198, %v2698, %v2700
    %v2708 = vsel %vm198, %v2700, %v2702
    %v2709 = vsel %vm198, %v2702, %v2704
    %v2710 = vsel %vm198, %v2704, %v2706
    %v2716 = vadd.f32 %v2598, %v2707
    %v2717 = vadd.f32 %v2599, %v2708
    %v2718 = vadd.f32 %v2600, %v2709
    %v2719 = vadd.f32 %v2601, %v2710
    %v2720 = vadd.f32 %v2602, %v2706
    %2721 = vset.pattern.permute.xlu0 73
    %2722 = vperm.xlu0 %2721, %v68
    %v2723 = vpop.permute.xlu0 %2722
    %v2725 = vmul.f32 %v2723, %v2640
    %v2726 = vmul.f32 %v2723, %v2641
    %v2727 = vmul.f32 %v2723, %v2642
    %v2728 = vmul.f32 %v2723, %v2643
    %v2729 = vmul.f32 %v2723, %v2644
    %2735 = vrot.lane.b32.xlu0 %v2725, 127
    %v2736 = vpop.permute.xlu0 %2735
    %2737 = vrot.lane.b32.xlu0 %v2726, 127
    %v2738 = vpop.permute.xlu0 %2737
    %2739 = vrot.lane.b32.xlu0 %v2727, 127
    %v2740 = vpop.permute.xlu0 %2739
    %2741 = vrot.lane.b32.xlu0 %v2728, 127
    %v2742 = vpop.permute.xlu0 %2741
    %2743 = vrot.lane.b32.xlu0 %v2729, 127
    %v2744 = vpop.permute.xlu0 %2743
    %v2745 = vsel %vm198, %v2736, %v2738
    %v2746 = vsel %vm198, %v2738, %v2740
    %v2747 = vsel %vm198, %v2740, %v2742
    %v2748 = vsel %vm198, %v2742, %v2744
    %v2754 = vadd.f32 %v2612, %v2745
    %v2755 = vadd.f32 %v2613, %v2746
    %v2756 = vadd.f32 %v2614, %v2747
    %v2757 = vadd.f32 %v2615, %v2748
    %v2758 = vadd.f32 %v2616, %v2744
    %s2759 = scalar_lea.vmem [#allocation8], 68
    %v2760 = vld [vmem:[%s2759] ss:$8 sm:$0xf]
    %v2762 = vperm.slane %v2760, 0
    %v2763 = vperm.slane %v2760, 1
    %v2764 = vperm.slane %v2760, 2
    %v2765 = vperm.slane %v2760, 3
    %2766 = vrot.lane.b32.xlu0 %v2762, 57
    %v2767 = vpop.permute.xlu0 %2766
    %2768 = vrot.lane.b32.xlu0 %v2763, 57
    %v2769 = vpop.permute.xlu0 %2768
    %2770 = vrot.lane.b32.xlu0 %v2764, 57
    %v2771 = vpop.permute.xlu0 %2770
    %2772 = vrot.lane.b32.xlu0 %v2765, 57
    %v2773 = vpop.permute.xlu0 %2772
    %v2774 = vsel %vm304, %v2767, %v2769
    %v2775 = vsel %vm304, %v2769, %v2771
    %v2776 = vsel %vm304, %v2771, %v2773
    %v2782 = vmul.f32 %v1966, %v2767
    %v2783 = vmul.f32 %v1967, %v2774
    %v2784 = vmul.f32 %v1968, %v2775
    %v2785 = vmul.f32 %v1969, %v2776
    %v2786 = vmul.f32 %v1970, %v2773
    %2787 = vset.pattern.permute.xlu0 20
    %2788 = vperm.xlu0 %2787, %v68
    %v2789 = vpop.permute.xlu0 %2788
    %v2791 = vmul.f32 %v2789, %v2782
    %v2792 = vmul.f32 %v2789, %v2783
    %v2793 = vmul.f32 %v2789, %v2784
    %v2794 = vmul.f32 %v2789, %v2785
    %v2795 = vmul.f32 %v2789, %v2786
    %2801 = vrot.lane.b32.xlu0 %v2791, 126
    %v2802 = vpop.permute.xlu0 %2801
    %2803 = vrot.lane.b32.xlu0 %v2792, 126
    %v2804 = vpop.permute.xlu0 %2803
    %2805 = vrot.lane.b32.xlu0 %v2793, 126
    %v2806 = vpop.permute.xlu0 %2805
    %2807 = vrot.lane.b32.xlu0 %v2794, 126
    %v2808 = vpop.permute.xlu0 %2807
    %2809 = vrot.lane.b32.xlu0 %v2795, 126
    %v2810 = vpop.permute.xlu0 %2809
    %v2811 = vsel %vm342, %v2802, %v2804
    %v2812 = vsel %vm342, %v2804, %v2806
    %v2813 = vsel %vm342, %v2806, %v2808
    %v2814 = vsel %vm342, %v2808, %v2810
    %v2820 = vadd.f32 %v2678, %v2811
    %v2821 = vadd.f32 %v2679, %v2812
    %v2822 = vadd.f32 %v2680, %v2813
    %v2823 = vadd.f32 %v2681, %v2814
    %v2824 = vadd.f32 %v2682, %v2810
    %2825 = vset.pattern.permute.xlu0 47
    %2826 = vperm.xlu0 %2825, %v68
    %v2827 = vpop.permute.xlu0 %2826
    %v2829 = vmul.f32 %v2827, %v2782
    %v2830 = vmul.f32 %v2827, %v2783
    %v2831 = vmul.f32 %v2827, %v2784
    %v2832 = vmul.f32 %v2827, %v2785
    %v2833 = vmul.f32 %v2827, %v2786
    %2839 = vrot.lane.b32.xlu0 %v2829, 126
    %v2840 = vpop.permute.xlu0 %2839
    %2841 = vrot.lane.b32.xlu0 %v2830, 126
    %v2842 = vpop.permute.xlu0 %2841
    %2843 = vrot.lane.b32.xlu0 %v2831, 126
    %v2844 = vpop.permute.xlu0 %2843
    %2845 = vrot.lane.b32.xlu0 %v2832, 126
    %v2846 = vpop.permute.xlu0 %2845
    %2847 = vrot.lane.b32.xlu0 %v2833, 126
    %v2848 = vpop.permute.xlu0 %2847
    %v2849 = vsel %vm342, %v2840, %v2842
    %v2850 = vsel %vm342, %v2842, %v2844
    %v2851 = vsel %vm342, %v2844, %v2846
    %v2852 = vsel %vm342, %v2846, %v2848
    %v2858 = vadd.f32 %v2716, %v2849
    %v2859 = vadd.f32 %v2717, %v2850
    %v2860 = vadd.f32 %v2718, %v2851
    %v2861 = vadd.f32 %v2719, %v2852
    %v2862 = vadd.f32 %v2720, %v2848
    %2863 = vset.pattern.permute.xlu0 74
    %2864 = vperm.xlu0 %2863, %v68
    %v2865 = vpop.permute.xlu0 %2864
    %v2867 = vmul.f32 %v2865, %v2782
    %v2868 = vmul.f32 %v2865, %v2783
    %v2869 = vmul.f32 %v2865, %v2784
    %v2870 = vmul.f32 %v2865, %v2785
    %v2871 = vmul.f32 %v2865, %v2786
    %2877 = vrot.lane.b32.xlu0 %v2867, 126
    %v2878 = vpop.permute.xlu0 %2877
    %2879 = vrot.lane.b32.xlu0 %v2868, 126
    %v2880 = vpop.permute.xlu0 %2879
    %2881 = vrot.lane.b32.xlu0 %v2869, 126
    %v2882 = vpop.permute.xlu0 %2881
    %2883 = vrot.lane.b32.xlu0 %v2870, 126
    %v2884 = vpop.permute.xlu0 %2883
    %2885 = vrot.lane.b32.xlu0 %v2871, 126
    %v2886 = vpop.permute.xlu0 %2885
    %v2887 = vsel %vm342, %v2878, %v2880
    %v2888 = vsel %vm342, %v2880, %v2882
    %v2889 = vsel %vm342, %v2882, %v2884
    %v2890 = vsel %vm342, %v2884, %v2886
    %v2896 = vadd.f32 %v2754, %v2887
    %v2897 = vadd.f32 %v2755, %v2888
    %v2898 = vadd.f32 %v2756, %v2889
    %v2899 = vadd.f32 %v2757, %v2890
    %v2900 = vadd.f32 %v2758, %v2886
    %s2901 = scalar_lea.vmem [#allocation8], 69
    %v2902 = vld [vmem:[%s2901] ss:$8 sm:$0xf]
    %v2904 = vperm.slane %v2902, 0
    %v2905 = vperm.slane %v2902, 1
    %v2906 = vperm.slane %v2902, 2
    %v2907 = vperm.slane %v2902, 3
    %2908 = vrot.lane.b32.xlu0 %v2904, 63
    %v2909 = vpop.permute.xlu0 %2908
    %2910 = vrot.lane.b32.xlu0 %v2905, 63
    %v2911 = vpop.permute.xlu0 %2910
    %2912 = vrot.lane.b32.xlu0 %v2906, 63
    %v2913 = vpop.permute.xlu0 %2912
    %2914 = vrot.lane.b32.xlu0 %v2907, 63
    %v2915 = vpop.permute.xlu0 %2914
    %v2916 = vsel %vm448, %v2909, %v2911
    %v2917 = vsel %vm448, %v2911, %v2913
    %v2918 = vsel %vm448, %v2913, %v2915
    %v2924 = vmul.f32 %v1966, %v2909
    %v2925 = vmul.f32 %v1967, %v2916
    %v2926 = vmul.f32 %v1968, %v2917
    %v2927 = vmul.f32 %v1969, %v2918
    %v2928 = vmul.f32 %v1970, %v2915
    %2929 = vset.pattern.permute.xlu0 21
    %2930 = vperm.xlu0 %2929, %v68
    %v2931 = vpop.permute.xlu0 %2930
    %v2933 = vmul.f32 %v2931, %v2924
    %v2934 = vmul.f32 %v2931, %v2925
    %v2935 = vmul.f32 %v2931, %v2926
    %v2936 = vmul.f32 %v2931, %v2927
    %v2937 = vmul.f32 %v2931, %v2928
    %2943 = vrot.lane.b32.xlu0 %v2933, 120
    %v2944 = vpop.permute.xlu0 %2943
    %2945 = vrot.lane.b32.xlu0 %v2934, 120
    %v2946 = vpop.permute.xlu0 %2945
    %2947 = vrot.lane.b32.xlu0 %v2935, 120
    %v2948 = vpop.permute.xlu0 %2947
    %2949 = vrot.lane.b32.xlu0 %v2936, 120
    %v2950 = vpop.permute.xlu0 %2949
    %2951 = vrot.lane.b32.xlu0 %v2937, 120
    %v2952 = vpop.permute.xlu0 %2951
    %v2953 = vsel %vm486, %v2944, %v2946
    %v2954 = vsel %vm486, %v2946, %v2948
    %v2955 = vsel %vm486, %v2948, %v2950
    %v2956 = vsel %vm486, %v2950, %v2952
    %v2962 = vadd.f32 %v2820, %v2953
    %v2963 = vadd.f32 %v2821, %v2954
    %v2964 = vadd.f32 %v2822, %v2955
    %v2965 = vadd.f32 %v2823, %v2956
    %v2966 = vadd.f32 %v2824, %v2952
    %2967 = vset.pattern.permute.xlu0 48
    %2968 = vperm.xlu0 %2967, %v68
    %v2969 = vpop.permute.xlu0 %2968
    %v2971 = vmul.f32 %v2969, %v2924
    %v2972 = vmul.f32 %v2969, %v2925
    %v2973 = vmul.f32 %v2969, %v2926
    %v2974 = vmul.f32 %v2969, %v2927
    %v2975 = vmul.f32 %v2969, %v2928
    %2981 = vrot.lane.b32.xlu0 %v2971, 120
    %v2982 = vpop.permute.xlu0 %2981
    %2983 = vrot.lane.b32.xlu0 %v2972, 120
    %v2984 = vpop.permute.xlu0 %2983
    %2985 = vrot.lane.b32.xlu0 %v2973, 120
    %v2986 = vpop.permute.xlu0 %2985
    %2987 = vrot.lane.b32.xlu0 %v2974, 120
    %v2988 = vpop.permute.xlu0 %2987
    %2989 = vrot.lane.b32.xlu0 %v2975, 120
    %v2990 = vpop.permute.xlu0 %2989
    %v2991 = vsel %vm486, %v2982, %v2984
    %v2992 = vsel %vm486, %v2984, %v2986
    %v2993 = vsel %vm486, %v2986, %v2988
    %v2994 = vsel %vm486, %v2988, %v2990
    %v3000 = vadd.f32 %v2858, %v2991
    %v3001 = vadd.f32 %v2859, %v2992
    %v3002 = vadd.f32 %v2860, %v2993
    %v3003 = vadd.f32 %v2861, %v2994
    %v3004 = vadd.f32 %v2862, %v2990
    %3005 = vset.pattern.permute.xlu0 75
    %3006 = vperm.xlu0 %3005, %v68
    %v3007 = vpop.permute.xlu0 %3006
    %v3009 = vmul.f32 %v3007, %v2924
    %v3010 = vmul.f32 %v3007, %v2925
    %v3011 = vmul.f32 %v3007, %v2926
    %v3012 = vmul.f32 %v3007, %v2927
    %v3013 = vmul.f32 %v3007, %v2928
    %3019 = vrot.lane.b32.xlu0 %v3009, 120
    %v3020 = vpop.permute.xlu0 %3019
    %3021 = vrot.lane.b32.xlu0 %v3010, 120
    %v3022 = vpop.permute.xlu0 %3021
    %3023 = vrot.lane.b32.xlu0 %v3011, 120
    %v3024 = vpop.permute.xlu0 %3023
    %3025 = vrot.lane.b32.xlu0 %v3012, 120
    %v3026 = vpop.permute.xlu0 %3025
    %3027 = vrot.lane.b32.xlu0 %v3013, 120
    %v3028 = vpop.permute.xlu0 %3027
    %v3029 = vsel %vm486, %v3020, %v3022
    %v3030 = vsel %vm486, %v3022, %v3024
    %v3031 = vsel %vm486, %v3024, %v3026
    %v3032 = vsel %vm486, %v3026, %v3028
    %v3038 = vadd.f32 %v2896, %v3029
    %v3039 = vadd.f32 %v2897, %v3030
    %v3040 = vadd.f32 %v2898, %v3031
    %v3041 = vadd.f32 %v2899, %v3032
    %v3042 = vadd.f32 %v2900, %v3028
    %s3043 = scalar_lea.vmem [#allocation8], 70
    %v3044 = vld [vmem:[%s3043] ss:$8 sm:$0xf]
    %v3046 = vperm.slane %v3044, 0
    %v3047 = vperm.slane %v3044, 1
    %v3048 = vperm.slane %v3044, 2
    %v3049 = vperm.slane %v3044, 3
    %3050 = vrot.lane.b32.xlu0 %v3046, 64
    %v3051 = vpop.permute.xlu0 %3050
    %3052 = vrot.lane.b32.xlu0 %v3047, 64
    %v3053 = vpop.permute.xlu0 %3052
    %3054 = vrot.lane.b32.xlu0 %v3048, 64
    %v3055 = vpop.permute.xlu0 %3054
    %3056 = vrot.lane.b32.xlu0 %v3049, 64
    %v3057 = vpop.permute.xlu0 %3056
    %v3058 = vsel %vm592, %v3051, %v3053
    %v3059 = vsel %vm592, %v3053, %v3055
    %v3060 = vsel %vm592, %v3055, %v3057
    %v3066 = vmul.f32 %v1966, %v3051
    %v3067 = vmul.f32 %v1967, %v3058
    %v3068 = vmul.f32 %v1968, %v3059
    %v3069 = vmul.f32 %v1969, %v3060
    %v3070 = vmul.f32 %v1970, %v3057
    %3071 = vset.pattern.permute.xlu0 22
    %3072 = vperm.xlu0 %3071, %v68
    %v3073 = vpop.permute.xlu0 %3072
    %v3075 = vmul.f32 %v3073, %v3066
    %v3076 = vmul.f32 %v3073, %v3067
    %v3077 = vmul.f32 %v3073, %v3068
    %v3078 = vmul.f32 %v3073, %v3069
    %v3079 = vmul.f32 %v3073, %v3070
    %3085 = vrot.lane.b32.xlu0 %v3075, 119
    %v3086 = vpop.permute.xlu0 %3085
    %3087 = vrot.lane.b32.xlu0 %v3076, 119
    %v3088 = vpop.permute.xlu0 %3087
    %3089 = vrot.lane.b32.xlu0 %v3077, 119
    %v3090 = vpop.permute.xlu0 %3089
    %3091 = vrot.lane.b32.xlu0 %v3078, 119
    %v3092 = vpop.permute.xlu0 %3091
    %3093 = vrot.lane.b32.xlu0 %v3079, 119
    %v3094 = vpop.permute.xlu0 %3093
    %v3095 = vsel %vm630, %v3086, %v3088
    %v3096 = vsel %vm630, %v3088, %v3090
    %v3097 = vsel %vm630, %v3090, %v3092
    %v3098 = vsel %vm630, %v3092, %v3094
    %v3104 = vadd.f32 %v2962, %v3095
    %v3105 = vadd.f32 %v2963, %v3096
    %v3106 = vadd.f32 %v2964, %v3097
    %v3107 = vadd.f32 %v2965, %v3098
    %v3108 = vadd.f32 %v2966, %v3094
    %3109 = vset.pattern.permute.xlu0 49
    %3110 = vperm.xlu0 %3109, %v68
    %v3111 = vpop.permute.xlu0 %3110
    %v3113 = vmul.f32 %v3111, %v3066
    %v3114 = vmul.f32 %v3111, %v3067
    %v3115 = vmul.f32 %v3111, %v3068
    %v3116 = vmul.f32 %v3111, %v3069
    %v3117 = vmul.f32 %v3111, %v3070
    %3123 = vrot.lane.b32.xlu0 %v3113, 119
    %v3124 = vpop.permute.xlu0 %3123
    %3125 = vrot.lane.b32.xlu0 %v3114, 119
    %v3126 = vpop.permute.xlu0 %3125
    %3127 = vrot.lane.b32.xlu0 %v3115, 119
    %v3128 = vpop.permute.xlu0 %3127
    %3129 = vrot.lane.b32.xlu0 %v3116, 119
    %v3130 = vpop.permute.xlu0 %3129
    %3131 = vrot.lane.b32.xlu0 %v3117, 119
    %v3132 = vpop.permute.xlu0 %3131
    %v3133 = vsel %vm630, %v3124, %v3126
    %v3134 = vsel %vm630, %v3126, %v3128
    %v3135 = vsel %vm630, %v3128, %v3130
    %v3136 = vsel %vm630, %v3130, %v3132
    %v3142 = vadd.f32 %v3000, %v3133
    %v3143 = vadd.f32 %v3001, %v3134
    %v3144 = vadd.f32 %v3002, %v3135
    %v3145 = vadd.f32 %v3003, %v3136
    %v3146 = vadd.f32 %v3004, %v3132
    %3147 = vset.pattern.permute.xlu0 76
    %3148 = vperm.xlu0 %3147, %v68
    %v3149 = vpop.permute.xlu0 %3148
    %v3151 = vmul.f32 %v3149, %v3066
    %v3152 = vmul.f32 %v3149, %v3067
    %v3153 = vmul.f32 %v3149, %v3068
    %v3154 = vmul.f32 %v3149, %v3069
    %v3155 = vmul.f32 %v3149, %v3070
    %3161 = vrot.lane.b32.xlu0 %v3151, 119
    %v3162 = vpop.permute.xlu0 %3161
    %3163 = vrot.lane.b32.xlu0 %v3152, 119
    %v3164 = vpop.permute.xlu0 %3163
    %3165 = vrot.lane.b32.xlu0 %v3153, 119
    %v3166 = vpop.permute.xlu0 %3165
    %3167 = vrot.lane.b32.xlu0 %v3154, 119
    %v3168 = vpop.permute.xlu0 %3167
    %3169 = vrot.lane.b32.xlu0 %v3155, 119
    %v3170 = vpop.permute.xlu0 %3169
    %v3171 = vsel %vm630, %v3162, %v3164
    %v3172 = vsel %vm630, %v3164, %v3166
    %v3173 = vsel %vm630, %v3166, %v3168
    %v3174 = vsel %vm630, %v3168, %v3170
    %v3180 = vadd.f32 %v3038, %v3171
    %v3181 = vadd.f32 %v3039, %v3172
    %v3182 = vadd.f32 %v3040, %v3173
    %v3183 = vadd.f32 %v3041, %v3174
    %v3184 = vadd.f32 %v3042, %v3170
    %s3185 = scalar_lea.vmem [#allocation8], 71
    %v3186 = vld [vmem:[%s3185] ss:$8 sm:$0xf]
    %v3188 = vperm.slane %v3186, 0
    %v3189 = vperm.slane %v3186, 1
    %v3190 = vperm.slane %v3186, 2
    %v3191 = vperm.slane %v3186, 3
    %3192 = vrot.lane.b32.xlu0 %v3188, 65
    %v3193 = vpop.permute.xlu0 %3192
    %3194 = vrot.lane.b32.xlu0 %v3189, 65
    %v3195 = vpop.permute.xlu0 %3194
    %3196 = vrot.lane.b32.xlu0 %v3190, 65
    %v3197 = vpop.permute.xlu0 %3196
    %3198 = vrot.lane.b32.xlu0 %v3191, 65
    %v3199 = vpop.permute.xlu0 %3198
    %v3200 = vsel %vm736, %v3193, %v3195
    %v3201 = vsel %vm736, %v3195, %v3197
    %v3202 = vsel %vm736, %v3197, %v3199
    %v3208 = vmul.f32 %v1966, %v3193
    %v3209 = vmul.f32 %v1967, %v3200
    %v3210 = vmul.f32 %v1968, %v3201
    %v3211 = vmul.f32 %v1969, %v3202
    %v3212 = vmul.f32 %v1970, %v3199
    %3213 = vset.pattern.permute.xlu0 23
    %3214 = vperm.xlu0 %3213, %v68
    %v3215 = vpop.permute.xlu0 %3214
    %v3217 = vmul.f32 %v3215, %v3208
    %v3218 = vmul.f32 %v3215, %v3209
    %v3219 = vmul.f32 %v3215, %v3210
    %v3220 = vmul.f32 %v3215, %v3211
    %v3221 = vmul.f32 %v3215, %v3212
    %3227 = vrot.lane.b32.xlu0 %v3217, 118
    %v3228 = vpop.permute.xlu0 %3227
    %3229 = vrot.lane.b32.xlu0 %v3218, 118
    %v3230 = vpop.permute.xlu0 %3229
    %3231 = vrot.lane.b32.xlu0 %v3219, 118
    %v3232 = vpop.permute.xlu0 %3231
    %3233 = vrot.lane.b32.xlu0 %v3220, 118
    %v3234 = vpop.permute.xlu0 %3233
    %3235 = vrot.lane.b32.xlu0 %v3221, 118
    %v3236 = vpop.permute.xlu0 %3235
    %v3237 = vsel %vm774, %v3228, %v3230
    %v3238 = vsel %vm774, %v3230, %v3232
    %v3239 = vsel %vm774, %v3232, %v3234
    %v3240 = vsel %vm774, %v3234, %v3236
    %v3246 = vadd.f32 %v3104, %v3237
    %v3247 = vadd.f32 %v3105, %v3238
    %v3248 = vadd.f32 %v3106, %v3239
    %v3249 = vadd.f32 %v3107, %v3240
    %v3250 = vadd.f32 %v3108, %v3236
    %3251 = vset.pattern.permute.xlu0 50
    %3252 = vperm.xlu0 %3251, %v68
    %v3253 = vpop.permute.xlu0 %3252
    %v3255 = vmul.f32 %v3253, %v3208
    %v3256 = vmul.f32 %v3253, %v3209
    %v3257 = vmul.f32 %v3253, %v3210
    %v3258 = vmul.f32 %v3253, %v3211
    %v3259 = vmul.f32 %v3253, %v3212
    %3265 = vrot.lane.b32.xlu0 %v3255, 118
    %v3266 = vpop.permute.xlu0 %3265
    %3267 = vrot.lane.b32.xlu0 %v3256, 118
    %v3268 = vpop.permute.xlu0 %3267
    %3269 = vrot.lane.b32.xlu0 %v3257, 118
    %v3270 = vpop.permute.xlu0 %3269
    %3271 = vrot.lane.b32.xlu0 %v3258, 118
    %v3272 = vpop.permute.xlu0 %3271
    %3273 = vrot.lane.b32.xlu0 %v3259, 118
    %v3274 = vpop.permute.xlu0 %3273
    %v3275 = vsel %vm774, %v3266, %v3268
    %v3276 = vsel %vm774, %v3268, %v3270
    %v3277 = vsel %vm774, %v3270, %v3272
    %v3278 = vsel %vm774, %v3272, %v3274
    %v3284 = vadd.f32 %v3142, %v3275
    %v3285 = vadd.f32 %v3143, %v3276
    %v3286 = vadd.f32 %v3144, %v3277
    %v3287 = vadd.f32 %v3145, %v3278
    %v3288 = vadd.f32 %v3146, %v3274
    %3289 = vset.pattern.permute.xlu0 77
    %3290 = vperm.xlu0 %3289, %v68
    %v3291 = vpop.permute.xlu0 %3290
    %v3293 = vmul.f32 %v3291, %v3208
    %v3294 = vmul.f32 %v3291, %v3209
    %v3295 = vmul.f32 %v3291, %v3210
    %v3296 = vmul.f32 %v3291, %v3211
    %v3297 = vmul.f32 %v3291, %v3212
    %3303 = vrot.lane.b32.xlu0 %v3293, 118
    %v3304 = vpop.permute.xlu0 %3303
    %3305 = vrot.lane.b32.xlu0 %v3294, 118
    %v3306 = vpop.permute.xlu0 %3305
    %3307 = vrot.lane.b32.xlu0 %v3295, 118
    %v3308 = vpop.permute.xlu0 %3307
    %3309 = vrot.lane.b32.xlu0 %v3296, 118
    %v3310 = vpop.permute.xlu0 %3309
    %3311 = vrot.lane.b32.xlu0 %v3297, 118
    %v3312 = vpop.permute.xlu0 %3311
    %v3313 = vsel %vm774, %v3304, %v3306
    %v3314 = vsel %vm774, %v3306, %v3308
    %v3315 = vsel %vm774, %v3308, %v3310
    %v3316 = vsel %vm774, %v3310, %v3312
    %v3322 = vadd.f32 %v3180, %v3313
    %v3323 = vadd.f32 %v3181, %v3314
    %v3324 = vadd.f32 %v3182, %v3315
    %v3325 = vadd.f32 %v3183, %v3316
    %v3326 = vadd.f32 %v3184, %v3312
    %s3327 = scalar_lea.vmem [#allocation8], 96
    %v3328 = vld [vmem:[%s3327] ss:$8 sm:$0xf]
    %v3330 = vperm.slane %v3328, 0
    %v3331 = vperm.slane %v3328, 1
    %v3332 = vperm.slane %v3328, 2
    %v3333 = vperm.slane %v3328, 3
    %3334 = vrot.lane.b32.xlu0 %v3330, 71
    %v3335 = vpop.permute.xlu0 %3334
    %3336 = vrot.lane.b32.xlu0 %v3331, 71
    %v3337 = vpop.permute.xlu0 %3336
    %3338 = vrot.lane.b32.xlu0 %v3332, 71
    %v3339 = vpop.permute.xlu0 %3338
    %3340 = vrot.lane.b32.xlu0 %v3333, 71
    %v3341 = vpop.permute.xlu0 %3340
    %v3342 = vsel %vm880, %v3335, %v3337
    %v3343 = vsel %vm880, %v3337, %v3339
    %v3344 = vsel %vm880, %v3339, %v3341
    %v3350 = vmul.f32 %v1966, %v3335
    %v3351 = vmul.f32 %v1967, %v3342
    %v3352 = vmul.f32 %v1968, %v3343
    %v3353 = vmul.f32 %v1969, %v3344
    %v3354 = vmul.f32 %v1970, %v3341
    %3355 = vset.pattern.permute.xlu0 24
    %3356 = vperm.xlu0 %3355, %v68
    %v3357 = vpop.permute.xlu0 %3356
    %v3359 = vmul.f32 %v3357, %v3350
    %v3360 = vmul.f32 %v3357, %v3351
    %v3361 = vmul.f32 %v3357, %v3352
    %v3362 = vmul.f32 %v3357, %v3353
    %v3363 = vmul.f32 %v3357, %v3354
    %3369 = vrot.lane.b32.xlu0 %v3359, 112
    %v3370 = vpop.permute.xlu0 %3369
    %3371 = vrot.lane.b32.xlu0 %v3360, 112
    %v3372 = vpop.permute.xlu0 %3371
    %3373 = vrot.lane.b32.xlu0 %v3361, 112
    %v3374 = vpop.permute.xlu0 %3373
    %3375 = vrot.lane.b32.xlu0 %v3362, 112
    %v3376 = vpop.permute.xlu0 %3375
    %3377 = vrot.lane.b32.xlu0 %v3363, 112
    %v3378 = vpop.permute.xlu0 %3377
    %v3379 = vsel %vm918, %v3370, %v3372
    %v3380 = vsel %vm918, %v3372, %v3374
    %v3381 = vsel %vm918, %v3374, %v3376
    %v3382 = vsel %vm918, %v3376, %v3378
    %v3388 = vadd.f32 %v3246, %v3379
    %v3389 = vadd.f32 %v3247, %v3380
    %v3390 = vadd.f32 %v3248, %v3381
    %v3391 = vadd.f32 %v3249, %v3382
    %v3392 = vadd.f32 %v3250, %v3378
    %3393 = vset.pattern.permute.xlu0 51
    %3394 = vperm.xlu0 %3393, %v68
    %v3395 = vpop.permute.xlu0 %3394
    %v3397 = vmul.f32 %v3395, %v3350
    %v3398 = vmul.f32 %v3395, %v3351
    %v3399 = vmul.f32 %v3395, %v3352
    %v3400 = vmul.f32 %v3395, %v3353
    %v3401 = vmul.f32 %v3395, %v3354
    %3407 = vrot.lane.b32.xlu0 %v3397, 112
    %v3408 = vpop.permute.xlu0 %3407
    %3409 = vrot.lane.b32.xlu0 %v3398, 112
    %v3410 = vpop.permute.xlu0 %3409
    %3411 = vrot.lane.b32.xlu0 %v3399, 112
    %v3412 = vpop.permute.xlu0 %3411
    %3413 = vrot.lane.b32.xlu0 %v3400, 112
    %v3414 = vpop.permute.xlu0 %3413
    %3415 = vrot.lane.b32.xlu0 %v3401, 112
    %v3416 = vpop.permute.xlu0 %3415
    %v3417 = vsel %vm918, %v3408, %v3410
    %v3418 = vsel %vm918, %v3410, %v3412
    %v3419 = vsel %vm918, %v3412, %v3414
    %v3420 = vsel %vm918, %v3414, %v3416
    %v3426 = vadd.f32 %v3284, %v3417
    %v3427 = vadd.f32 %v3285, %v3418
    %v3428 = vadd.f32 %v3286, %v3419
    %v3429 = vadd.f32 %v3287, %v3420
    %v3430 = vadd.f32 %v3288, %v3416
    %3431 = vset.pattern.permute.xlu0 78
    %3432 = vperm.xlu0 %3431, %v68
    %v3433 = vpop.permute.xlu0 %3432
    %v3435 = vmul.f32 %v3433, %v3350
    %v3436 = vmul.f32 %v3433, %v3351
    %v3437 = vmul.f32 %v3433, %v3352
    %v3438 = vmul.f32 %v3433, %v3353
    %v3439 = vmul.f32 %v3433, %v3354
    %3445 = vrot.lane.b32.xlu0 %v3435, 112
    %v3446 = vpop.permute.xlu0 %3445
    %3447 = vrot.lane.b32.xlu0 %v3436, 112
    %v3448 = vpop.permute.xlu0 %3447
    %3449 = vrot.lane.b32.xlu0 %v3437, 112
    %v3450 = vpop.permute.xlu0 %3449
    %3451 = vrot.lane.b32.xlu0 %v3438, 112
    %v3452 = vpop.permute.xlu0 %3451
    %3453 = vrot.lane.b32.xlu0 %v3439, 112
    %v3454 = vpop.permute.xlu0 %3453
    %v3455 = vsel %vm918, %v3446, %v3448
    %v3456 = vsel %vm918, %v3448, %v3450
    %v3457 = vsel %vm918, %v3450, %v3452
    %v3458 = vsel %vm918, %v3452, %v3454
    %v3464 = vadd.f32 %v3322, %v3455
    %v3465 = vadd.f32 %v3323, %v3456
    %v3466 = vadd.f32 %v3324, %v3457
    %v3467 = vadd.f32 %v3325, %v3458
    %v3468 = vadd.f32 %v3326, %v3454
    %s3469 = scalar_lea.vmem [#allocation8], 97
    %v3470 = vld [vmem:[%s3469] ss:$8 sm:$0xf]
    %v3472 = vperm.slane %v3470, 0
    %v3473 = vperm.slane %v3470, 1
    %v3474 = vperm.slane %v3470, 2
    %v3475 = vperm.slane %v3470, 3
    %3476 = vrot.lane.b32.xlu0 %v3472, 72
    %v3477 = vpop.permute.xlu0 %3476
    %3478 = vrot.lane.b32.xlu0 %v3473, 72
    %v3479 = vpop.permute.xlu0 %3478
    %3480 = vrot.lane.b32.xlu0 %v3474, 72
    %v3481 = vpop.permute.xlu0 %3480
    %3482 = vrot.lane.b32.xlu0 %v3475, 72
    %v3483 = vpop.permute.xlu0 %3482
    %v3484 = vsel %vm1024, %v3477, %v3479
    %v3485 = vsel %vm1024, %v3479, %v3481
    %v3486 = vsel %vm1024, %v3481, %v3483
    %v3492 = vmul.f32 %v1966, %v3477
    %v3493 = vmul.f32 %v1967, %v3484
    %v3494 = vmul.f32 %v1968, %v3485
    %v3495 = vmul.f32 %v1969, %v3486
    %v3496 = vmul.f32 %v1970, %v3483
    %3497 = vset.pattern.permute.xlu0 25
    %3498 = vperm.xlu0 %3497, %v68
    %v3499 = vpop.permute.xlu0 %3498
    %v3501 = vmul.f32 %v3499, %v3492
    %v3502 = vmul.f32 %v3499, %v3493
    %v3503 = vmul.f32 %v3499, %v3494
    %v3504 = vmul.f32 %v3499, %v3495
    %v3505 = vmul.f32 %v3499, %v3496
    %3511 = vrot.lane.b32.xlu0 %v3501, 111
    %v3512 = vpop.permute.xlu0 %3511
    %3513 = vrot.lane.b32.xlu0 %v3502, 111
    %v3514 = vpop.permute.xlu0 %3513
    %3515 = vrot.lane.b32.xlu0 %v3503, 111
    %v3516 = vpop.permute.xlu0 %3515
    %3517 = vrot.lane.b32.xlu0 %v3504, 111
    %v3518 = vpop.permute.xlu0 %3517
    %3519 = vrot.lane.b32.xlu0 %v3505, 111
    %v3520 = vpop.permute.xlu0 %3519
    %v3521 = vsel %vm1062, %v3512, %v3514
    %v3522 = vsel %vm1062, %v3514, %v3516
    %v3523 = vsel %vm1062, %v3516, %v3518
    %v3524 = vsel %vm1062, %v3518, %v3520
    %v3530 = vadd.f32 %v3388, %v3521
    %v3531 = vadd.f32 %v3389, %v3522
    %v3532 = vadd.f32 %v3390, %v3523
    %v3533 = vadd.f32 %v3391, %v3524
    %v3534 = vadd.f32 %v3392, %v3520
    %3535 = vset.pattern.permute.xlu0 52
    %3536 = vperm.xlu0 %3535, %v68
    %v3537 = vpop.permute.xlu0 %3536
    %v3539 = vmul.f32 %v3537, %v3492
    %v3540 = vmul.f32 %v3537, %v3493
    %v3541 = vmul.f32 %v3537, %v3494
    %v3542 = vmul.f32 %v3537, %v3495
    %v3543 = vmul.f32 %v3537, %v3496
    %3549 = vrot.lane.b32.xlu0 %v3539, 111
    %v3550 = vpop.permute.xlu0 %3549
    %3551 = vrot.lane.b32.xlu0 %v3540, 111
    %v3552 = vpop.permute.xlu0 %3551
    %3553 = vrot.lane.b32.xlu0 %v3541, 111
    %v3554 = vpop.permute.xlu0 %3553
    %3555 = vrot.lane.b32.xlu0 %v3542, 111
    %v3556 = vpop.permute.xlu0 %3555
    %3557 = vrot.lane.b32.xlu0 %v3543, 111
    %v3558 = vpop.permute.xlu0 %3557
    %v3559 = vsel %vm1062, %v3550, %v3552
    %v3560 = vsel %vm1062, %v3552, %v3554
    %v3561 = vsel %vm1062, %v3554, %v3556
    %v3562 = vsel %vm1062, %v3556, %v3558
    %v3568 = vadd.f32 %v3426, %v3559
    %v3569 = vadd.f32 %v3427, %v3560
    %v3570 = vadd.f32 %v3428, %v3561
    %v3571 = vadd.f32 %v3429, %v3562
    %v3572 = vadd.f32 %v3430, %v3558
    %3573 = vset.pattern.permute.xlu0 79
    %3574 = vperm.xlu0 %3573, %v68
    %v3575 = vpop.permute.xlu0 %3574
    %v3577 = vmul.f32 %v3575, %v3492
    %v3578 = vmul.f32 %v3575, %v3493
    %v3579 = vmul.f32 %v3575, %v3494
    %v3580 = vmul.f32 %v3575, %v3495
    %v3581 = vmul.f32 %v3575, %v3496
    %3587 = vrot.lane.b32.xlu0 %v3577, 111
    %v3588 = vpop.permute.xlu0 %3587
    %3589 = vrot.lane.b32.xlu0 %v3578, 111
    %v3590 = vpop.permute.xlu0 %3589
    %3591 = vrot.lane.b32.xlu0 %v3579, 111
    %v3592 = vpop.permute.xlu0 %3591
    %3593 = vrot.lane.b32.xlu0 %v3580, 111
    %v3594 = vpop.permute.xlu0 %3593
    %3595 = vrot.lane.b32.xlu0 %v3581, 111
    %v3596 = vpop.permute.xlu0 %3595
    %v3597 = vsel %vm1062, %v3588, %v3590
    %v3598 = vsel %vm1062, %v3590, %v3592
    %v3599 = vsel %vm1062, %v3592, %v3594
    %v3600 = vsel %vm1062, %v3594, %v3596
    %v3606 = vadd.f32 %v3464, %v3597
    %v3607 = vadd.f32 %v3465, %v3598
    %v3608 = vadd.f32 %v3466, %v3599
    %v3609 = vadd.f32 %v3467, %v3600
    %v3610 = vadd.f32 %v3468, %v3596
    %s3611 = scalar_lea.vmem [#allocation8], 98
    %v3612 = vld [vmem:[%s3611] ss:$8 sm:$0xf]
    %v3614 = vperm.slane %v3612, 0
    %v3615 = vperm.slane %v3612, 1
    %v3616 = vperm.slane %v3612, 2
    %v3617 = vperm.slane %v3612, 3
    %3618 = vrot.lane.b32.xlu0 %v3614, 73
    %v3619 = vpop.permute.xlu0 %3618
    %3620 = vrot.lane.b32.xlu0 %v3615, 73
    %v3621 = vpop.permute.xlu0 %3620
    %3622 = vrot.lane.b32.xlu0 %v3616, 73
    %v3623 = vpop.permute.xlu0 %3622
    %3624 = vrot.lane.b32.xlu0 %v3617, 73
    %v3625 = vpop.permute.xlu0 %3624
    %v3626 = vsel %vm1168, %v3619, %v3621
    %v3627 = vsel %vm1168, %v3621, %v3623
    %v3628 = vsel %vm1168, %v3623, %v3625
    %v3634 = vmul.f32 %v1966, %v3619
    %v3635 = vmul.f32 %v1967, %v3626
    %v3636 = vmul.f32 %v1968, %v3627
    %v3637 = vmul.f32 %v1969, %v3628
    %v3638 = vmul.f32 %v1970, %v3625
    %3639 = vset.pattern.permute.xlu0 26
    %3640 = vperm.xlu0 %3639, %v68
    %v3641 = vpop.permute.xlu0 %3640
    %v3643 = vmul.f32 %v3641, %v3634
    %v3644 = vmul.f32 %v3641, %v3635
    %v3645 = vmul.f32 %v3641, %v3636
    %v3646 = vmul.f32 %v3641, %v3637
    %v3647 = vmul.f32 %v3641, %v3638
    %3653 = vrot.lane.b32.xlu0 %v3643, 110
    %v3654 = vpop.permute.xlu0 %3653
    %3655 = vrot.lane.b32.xlu0 %v3644, 110
    %v3656 = vpop.permute.xlu0 %3655
    %3657 = vrot.lane.b32.xlu0 %v3645, 110
    %v3658 = vpop.permute.xlu0 %3657
    %3659 = vrot.lane.b32.xlu0 %v3646, 110
    %v3660 = vpop.permute.xlu0 %3659
    %3661 = vrot.lane.b32.xlu0 %v3647, 110
    %v3662 = vpop.permute.xlu0 %3661
    %v3663 = vsel %vm1206, %v3654, %v3656
    %v3664 = vsel %vm1206, %v3656, %v3658
    %v3665 = vsel %vm1206, %v3658, %v3660
    %v3666 = vsel %vm1206, %v3660, %v3662
    %v3672 = vadd.f32 %v3530, %v3663
    %v3673 = vadd.f32 %v3531, %v3664
    %v3674 = vadd.f32 %v3532, %v3665
    %v3675 = vadd.f32 %v3533, %v3666
    %v3676 = vadd.f32 %v3534, %v3662
    %3677 = vset.pattern.permute.xlu0 53
    %3678 = vperm.xlu0 %3677, %v68
    %v3679 = vpop.permute.xlu0 %3678
    %v3681 = vmul.f32 %v3679, %v3634
    %v3682 = vmul.f32 %v3679, %v3635
    %v3683 = vmul.f32 %v3679, %v3636
    %v3684 = vmul.f32 %v3679, %v3637
    %v3685 = vmul.f32 %v3679, %v3638
    %3691 = vrot.lane.b32.xlu0 %v3681, 110
    %v3692 = vpop.permute.xlu0 %3691
    %3693 = vrot.lane.b32.xlu0 %v3682, 110
    %v3694 = vpop.permute.xlu0 %3693
    %3695 = vrot.lane.b32.xlu0 %v3683, 110
    %v3696 = vpop.permute.xlu0 %3695
    %3697 = vrot.lane.b32.xlu0 %v3684, 110
    %v3698 = vpop.permute.xlu0 %3697
    %3699 = vrot.lane.b32.xlu0 %v3685, 110
    %v3700 = vpop.permute.xlu0 %3699
    %v3701 = vsel %vm1206, %v3692, %v3694
    %v3702 = vsel %vm1206, %v3694, %v3696
    %v3703 = vsel %vm1206, %v3696, %v3698
    %v3704 = vsel %vm1206, %v3698, %v3700
    %v3710 = vadd.f32 %v3568, %v3701
    %v3711 = vadd.f32 %v3569, %v3702
    %v3712 = vadd.f32 %v3570, %v3703
    %v3713 = vadd.f32 %v3571, %v3704
    %v3714 = vadd.f32 %v3572, %v3700
    %3715 = vset.pattern.permute.xlu0 80
    %3716 = vperm.xlu0 %3715, %v68
    %v3717 = vpop.permute.xlu0 %3716
    %v3719 = vmul.f32 %v3717, %v3634
    %v3720 = vmul.f32 %v3717, %v3635
    %v3721 = vmul.f32 %v3717, %v3636
    %v3722 = vmul.f32 %v3717, %v3637
    %v3723 = vmul.f32 %v3717, %v3638
    %3729 = vrot.lane.b32.xlu0 %v3719, 110
    %v3730 = vpop.permute.xlu0 %3729
    %3731 = vrot.lane.b32.xlu0 %v3720, 110
    %v3732 = vpop.permute.xlu0 %3731
    %3733 = vrot.lane.b32.xlu0 %v3721, 110
    %v3734 = vpop.permute.xlu0 %3733
    %3735 = vrot.lane.b32.xlu0 %v3722, 110
    %v3736 = vpop.permute.xlu0 %3735
    %3737 = vrot.lane.b32.xlu0 %v3723, 110
    %v3738 = vpop.permute.xlu0 %3737
    %v3739 = vsel %vm1206, %v3730, %v3732
    %v3740 = vsel %vm1206, %v3732, %v3734
    %v3741 = vsel %vm1206, %v3734, %v3736
    %v3742 = vsel %vm1206, %v3736, %v3738
    %v3748 = vadd.f32 %v3606, %v3739
    %v3749 = vadd.f32 %v3607, %v3740
    %v3750 = vadd.f32 %v3608, %v3741
    %v3751 = vadd.f32 %v3609, %v3742
    %v3752 = vadd.f32 %v3610, %v3738
    %3758 = vrot.lane.b32.xlu0 %v3672, 73
    %v3759 = vpop.permute.xlu0 %3758
    %3760 = vrot.lane.b32.xlu0 %v3673, 73
    %v3761 = vpop.permute.xlu0 %3760
    %3762 = vrot.lane.b32.xlu0 %v3674, 73
    %v3763 = vpop.permute.xlu0 %3762
    %3764 = vrot.lane.b32.xlu0 %v3675, 73
    %v3765 = vpop.permute.xlu0 %3764
    %3766 = vrot.lane.b32.xlu0 %v3676, 73
    %v3767 = vpop.permute.xlu0 %3766
    %v3768 = vsel %vm1168, %v3759, %v3761
    %v3769 = vsel %vm1168, %v3761, %v3763
    %v3770 = vsel %vm1168, %v3763, %v3765
    %v3771 = vsel %vm1168, %v3765, %v3767
    %3776 = vst [vmem:[#allocation9] sm:$0xff] %v3768
    %3777 = vst [vmem:[#allocation9 + $0x8] sm:$0xff] %v3769
    %3778 = vst [vmem:[#allocation9 + $0x10] sm:$0xff] %v3770
    %3779 = vst [vmem:[#allocation9 + $0x18] sm:$0xff] %v3771
    %3785 = vrot.lane.b32.xlu0 %v3710, 73
    %v3786 = vpop.permute.xlu0 %3785
    %3787 = vrot.lane.b32.xlu0 %v3711, 73
    %v3788 = vpop.permute.xlu0 %3787
    %3789 = vrot.lane.b32.xlu0 %v3712, 73
    %v3790 = vpop.permute.xlu0 %3789
    %3791 = vrot.lane.b32.xlu0 %v3713, 73
    %v3792 = vpop.permute.xlu0 %3791
    %3793 = vrot.lane.b32.xlu0 %v3714, 73
    %v3794 = vpop.permute.xlu0 %3793
    %v3795 = vsel %vm1168, %v3786, %v3788
    %v3796 = vsel %vm1168, %v3788, %v3790
    %v3797 = vsel %vm1168, %v3790, %v3792
    %v3798 = vsel %vm1168, %v3792, %v3794
    %3803 = vst [vmem:[#allocation9 + $0x20] sm:$0xff] %v3795
    %3804 = vst [vmem:[#allocation9 + $0x28] sm:$0xff] %v3796
    %3805 = vst [vmem:[#allocation9 + $0x30] sm:$0xff] %v3797
    %3806 = vst [vmem:[#allocation9 + $0x38] sm:$0xff] %v3798
    %3812 = vrot.lane.b32.xlu0 %v3748, 73
    %v3813 = vpop.permute.xlu0 %3812
    %3814 = vrot.lane.b32.xlu0 %v3749, 73
    %v3815 = vpop.permute.xlu0 %3814
    %3816 = vrot.lane.b32.xlu0 %v3750, 73
    %v3817 = vpop.permute.xlu0 %3816
    %3818 = vrot.lane.b32.xlu0 %v3751, 73
    %v3819 = vpop.permute.xlu0 %3818
    %3820 = vrot.lane.b32.xlu0 %v3752, 73
    %v3821 = vpop.permute.xlu0 %3820
    %v3822 = vsel %vm1168, %v3813, %v3815
    %v3823 = vsel %vm1168, %v3815, %v3817
    %v3824 = vsel %vm1168, %v3817, %v3819
    %v3825 = vsel %vm1168, %v3819, %v3821
    %3830 = vst [vmem:[#allocation9 + $0x40] sm:$0xff] %v3822
    %3831 = vst [vmem:[#allocation9 + $0x48] sm:$0xff] %v3823
    %3832 = vst [vmem:[#allocation9 + $0x50] sm:$0xff] %v3824
    %3833 = vst [vmem:[#allocation9 + $0x58] sm:$0xff] %v3825
    // Predicated region
    $region26: #{tpu_custom_call.1} parent=1 // pred_check
      _
    $region27: #{tpu_custom_call.1} parent=1 // pred_check_branch
      %3835 = sbr.rel (0) target = $region29
    $region28: #{tpu_custom_call.1} parent=1 // pred_region
      %3837 = vsyncadd [#allocation5], 0
      %s3839 = sshll.u32 [#allocation9], 4
      %s3840 = int_to_ptr.vmem [resolvable:$true] %s3839
      %s3841 = sshll.u32 %s3, 4
      %s3842 = int_to_ptr.hbm [resolvable:$true] %s3841
      %3844 = dma.vmem_to_hbm [thread:$0]  %s3840, 1536, %s3842, [#allocation5]
    $region29: #{tpu_custom_call.1} parent=1 // pred_fallthru
      _
    // Predicated region
    $region30: #{tpu_custom_call.1} parent=1 // pred_check
      _
    $region31: #{tpu_custom_call.1} parent=1 // pred_check_branch
      %3846 = sbr.rel (0) target = $region33
    $region32: #{tpu_custom_call.1} parent=1 // pred_region
      %3848 = dma.done [#allocation5], 1536
    $region33: #{tpu_custom_call.1} parent=1 // pred_fallthru
      _
    %3849 = vsyncpa [#allocation4], 1
    %3850 = vsyncpa [#allocation7], 1
    %3851 = vsyncpa [#allocation5], 1

</llo_original>
